<compile_context>
chip_gen: v7x
topology: tpu7x:2x2x1
jax: 0.10.0
libtpu: 0.0.40
codegen_flags: <defaults>
</compile_context>

<pallas_src>
import functools

import jax
import jax.numpy as jnp
from jax import lax
from jax.experimental import pallas as pl
from jax.experimental.pallas import tpu as pltpu


# ----------------------------- fused kernel --------------------------------


def dncnn_fused_kernel(x_ref, w_ref, shift_ref, wlast_ref, mask_ref, o_ref,
                       act_a, act_b, p_ref, *, depth, H, W, C, F):
    """Whole DnCNN block for one batch element.

    x_ref:     (F, Hp*Wp)       channel-padded, spatially padded, flat input
    w_ref:     (depth-1, F, 9F) hidden conv weights (BN scale folded in)
    shift_ref: (depth-1, F, 1)  folded BN shifts
    wlast_ref: (C, 9F)          final conv weights
    mask_ref:  (1, Hp*Wp)       1.0 on interior pixels of the padded image
    o_ref:     (C, Hp*Wp)       x - dncnn(x) in padded-flat layout
    act_a/b:   (F, L)           VMEM ping-pong activation buffers (L has margins)
    p_ref:     (9F, Hp*Wp)      VMEM im2col patch buffer
    """
    Hp, Wp = H + 2, W + 2
    HpWp = Hp * Wp
    PADM = Wp + 1  # margin so every tap offset is a plain in-bounds lane slice

    # Re-zero the activation buffers every grid step: margins and borders must
    # be zero, and VMEM scratch is not re-initialized between grid iterations.
    act_a[...] = jnp.zeros_like(act_a)
    act_b[...] = jnp.zeros_like(act_b)
    act_a[:, pl.ds(PADM, HpWp)] = x_ref[...]

    # Tap k = ky*3+kx reads flat offset d = (ky-1)*Wp + (kx-1).
    taps = [(ky - 1) * Wp + (kx - 1) for ky in range(3) for kx in range(3)]
    mask = mask_ref[...]

    def build_patches(src_ref):
        cur = src_ref[...]                                        # (F, L)
        for k, d in enumerate(taps):
            p_ref[pl.ds(k * F, F), :] = cur[:, PADM + d:PADM + d + HpWp]
        return p_ref[...]                                         # (9F, HpWp)

    bufs = (act_a, act_b)
    src = act_a
    for layer in range(depth - 1):
        patches = build_patches(src)
        y = jnp.dot(w_ref[layer], patches,
                    preferred_element_type=jnp.float32)           # (F, HpWp)
        # Folded BN shift + ReLU; re-zero padded-image border pixels so the
        # next conv sees proper zero padding.
        y = jnp.maximum(y + shift_ref[layer], 0.0) * mask
        dst = bufs[(layer + 1) % 2]
        dst[:, pl.ds(PADM, HpWp)] = y
        src = dst

    # Final conv (no BN / ReLU) fused with the residual out = x - conv(h).
    patches = build_patches(src)
    y_last = jnp.dot(wlast_ref[...], patches,
                     preferred_element_type=jnp.float32)          # (C, HpWp)
    o_ref[...] = (x_ref[pl.ds(0, C), :] - y_last).astype(o_ref.dtype)


# --------------------------- pallas_call wrapper ----------------------------


def dncnn_block_forward(x, params, *, depth, filters):
    """x: (N, C, H, W) NCHW (PyTorch layout).  Returns x - dncnn(x)."""
    N, C, H, W = x.shape
    F = filters
    Hp, Wp = H + 2, W + 2
    HpWp = Hp * Wp
    PADM = Wp + 1
    L = HpWp + 2 * PADM

    # Channel-pad to F, 1-pixel spatial zero pad, flatten spatial (lane-dense).
    xf = jnp.pad(x, ((0, 0), (0, F - C), (1, 1), (1, 1))).reshape(N, F, HpWp)

    # Interior mask of the padded image (compile-time constant under jit).
    hh = jnp.arange(Hp)[:, None]
    ww = jnp.arange(Wp)[None, :]
    interior = (hh >= 1) & (hh <= Hp - 2) & (ww >= 1) & (ww <= Wp - 2)
    mask = interior.astype(x.dtype).reshape(1, HpWp)

    kernel = functools.partial(dncnn_fused_kernel, depth=depth,
                               H=H, W=W, C=C, F=F)
    out_pf = pl.pallas_call(
        kernel,
        out_shape=jax.ShapeDtypeStruct((N, C, HpWp), x.dtype),
        grid=(N,),
        in_specs=[
            pl.BlockSpec((None, F, HpWp), lambda n: (n, 0, 0)),          # x
            pl.BlockSpec((depth - 1, F, 9 * F), lambda n: (0, 0, 0)),    # w_hidden
            pl.BlockSpec((depth - 1, F, 1), lambda n: (0, 0, 0)),        # shifts
            pl.BlockSpec((C, 9 * F), lambda n: (0, 0)),                  # w_last
            pl.BlockSpec((1, HpWp), lambda n: (0, 0)),                   # mask
        ],
        out_specs=pl.BlockSpec((None, C, HpWp), lambda n: (n, 0, 0)),
        scratch_shapes=[
            pltpu.VMEM((F, L), jnp.float32),          # act_a
            pltpu.VMEM((F, L), jnp.float32),          # act_b
            pltpu.VMEM((9 * F, HpWp), jnp.float32),   # im2col patches
        ],
        compiler_params=pltpu.CompilerParams(
            dimension_semantics=("parallel",)),
    )(xf, params["w_hidden"], params["shift_hidden"], params["w_last"], mask)

    # Strip the 1-pixel border of the padded-flat output.
    return out_pf.reshape(N, C, Hp, Wp)[:, :, 1:-1, 1:-1]


# --------------------------- parameters & packing ---------------------------


def init_params(key, depth, in_channels, filters, eps=1e-4):
    """Deterministic synthetic parameters matching DnCNNBlock's layer shapes.

    BatchNorm is applied in eval mode (running stats folded into per-channel
    scale/shift, eps=1e-4).  momentum=0.0 only affects stat updates, which do
    not appear in the forward computation.
    """
    layers = []
    chans = [in_channels] + [filters] * (depth - 1) + [in_channels]
    for i in range(depth):
        cin, cout = chans[i], chans[i + 1]
        key, k1, k2, k3, k4, k5 = jax.random.split(key, 6)
        w = jax.random.normal(k1, (3, 3, cin, cout), jnp.float32)
        w = w * (1.0 / jnp.sqrt(9.0 * cin))
        if i < depth - 1:  # conv + BN + ReLU
            gamma = 1.0 + 0.1 * jax.random.normal(k2, (cout,), jnp.float32)
            beta = 0.1 * jax.random.normal(k3, (cout,), jnp.float32)
            mean = 0.1 * jax.random.normal(k4, (cout,), jnp.float32)
            var = jax.random.uniform(k5, (cout,), jnp.float32, 0.5, 1.5)
            scale = gamma / jnp.sqrt(var + eps)
            shift = beta - mean * scale
        else:              # last conv: no BN, no ReLU
            scale = None
            shift = None
        layers.append(dict(w=w, scale=scale, shift=shift))
    return layers


def pack_params(raw_layers, in_channels, filters):
    """Reshape weights to the kernel's (Cout, 9*F) im2col form, fold BN scale,
    and zero-pad layer 0's input channels to F."""
    depth = len(raw_layers)
    F = filters
    w_hidden, shift_hidden = [], []
    for i in range(depth - 1):
        layer = raw_layers[i]
        w = layer["w"]                                            # (3,3,cin,F)
        cin = w.shape[2]
        wpad = jnp.pad(w, ((0, 0), (0, 0), (0, F - cin), (0, 0)))  # (3,3,F,F)
        wmat = jnp.transpose(wpad, (3, 0, 1, 2)).reshape(F, 9 * F)
        wmat = wmat * layer["scale"][:, None]                      # fold BN scale
        w_hidden.append(wmat)
        shift_hidden.append(layer["shift"].reshape(F, 1))
    w_last = raw_layers[-1]["w"]                                   # (3,3,F,C)
    C = w_last.shape[3]
    w_last = jnp.transpose(w_last, (3, 0, 1, 2)).reshape(C, 9 * F)
    return dict(
        w_hidden=jnp.stack(w_hidden, axis=0),          # (depth-1, F, 9F)
        shift_hidden=jnp.stack(shift_hidden, axis=0),  # (depth-1, F, 1)
        w_last=w_last,                                 # (C, 9F)
    )


# ------------------------------ pure-JAX reference --------------------------


def reference_forward(x, raw_layers):
    """lax-conv reference in NCHW mirroring the PyTorch forward."""
    h = x
    n = len(raw_layers)
    for i, layer in enumerate(raw_layers):
        h = lax.conv_general_dilated(
            h, layer["w"], window_strides=(1, 1), padding="SAME",
            dimension_numbers=("NCHW", "HWIO", "NCHW"))
        if i < n - 1:
            scale = layer["scale"][None, :, None, None]
            shift = layer["shift"][None, :, None, None]
            h = jnp.maximum(h * scale + shift, 0.0)
    return x - h


# --------------------------------- main -------------------------------------


if __name__ == "__main__":
    key = jax.random.PRNGKey(0)
    kx, kp = jax.random.split(key)

    # Small shapes consistent with the module (PyTorch NCHW input).
    N, C, H, W = 2, 4, 16, 16
    depth, filters = 4, 32

    x = jax.random.normal(kx, (N, C, H, W), jnp.float32)

    raw = init_params(kp, depth, C, filters)
    packed = pack_params(raw, C, filters)

    fwd = jax.jit(functools.partial(dncnn_block_forward, depth=depth,
                                    filters=filters))
    out = fwd(x, packed)
    out = jax.block_until_ready(out)

    ref = reference_forward(x, raw)
    max_err = float(jnp.max(jnp.abs(out - ref)))
    assert out.shape == x.shape
    assert jnp.allclose(out, ref, rtol=5e-4, atol=5e-4), f"max_err={max_err}"

    print("KERNEL_OK")
</pallas_src>

<mosaic_0001>
module attributes {stable_mosaic.version = 11 : i64} {
  func.func @dncnn_fused_kernel(%arg0: i32, %arg1: memref<1x32x324xf32, #tpu.memory_space<vmem>>, %arg2: memref<3x32x288xf32, #tpu.memory_space<vmem>>, %arg3: memref<3x32x1xf32, #tpu.memory_space<vmem>>, %arg4: memref<4x288xf32, #tpu.memory_space<vmem>>, %arg5: memref<1x324xf32, #tpu.memory_space<vmem>>, %arg6: memref<1x4x324xf32, #tpu.memory_space<vmem>>, %arg7: memref<32x362xf32, #tpu.memory_space<vmem>>, %arg8: memref<32x362xf32, #tpu.memory_space<vmem>>, %arg9: memref<288x324xf32, #tpu.memory_space<vmem>>) attributes {dimension_semantics = [#tpu.dimension_semantics<parallel>], iteration_bounds = array<i64: 2>, scalar_prefetch = 0 : i64, scratch_operands = 3 : i64, tpu.core_type = #tpu.core_type<tc>, window_params = [{transform_indices = @transform_0, window_bounds = array<i64: 1, 32, 324>}, {pipeline_mode = #tpu.pipeline_mode<synchronous>, transform_indices = @transform_1, window_bounds = array<i64: 3, 32, 288>}, {pipeline_mode = #tpu.pipeline_mode<synchronous>, transform_indices = @transform_2, window_bounds = array<i64: 3, 32, 1>}, {pipeline_mode = #tpu.pipeline_mode<synchronous>, transform_indices = @transform_3, window_bounds = array<i64: 4, 288>}, {pipeline_mode = #tpu.pipeline_mode<synchronous>, transform_indices = @transform_4, window_bounds = array<i64: 1, 324>}, {transform_indices = @transform_5, window_bounds = array<i64: 1, 4, 324>}]} {
    %cst = arith.constant 0.000000e+00 : f32
    %0 = vector.broadcast %cst : f32 to vector<32x362xf32>
    %c0 = arith.constant 0 : index
    %c0_0 = arith.constant 0 : index
    %1 = vector.load %arg7[%c0, %c0_0] : memref<32x362xf32, #tpu.memory_space<vmem>>, vector<32x362xf32>
    tpu.vector_store %arg7[%c0, %c0_0], %0 {strides = array<i32>} : memref<32x362xf32, #tpu.memory_space<vmem>>, vector<32x362xf32>,
    %cst_1 = arith.constant 0.000000e+00 : f32
    %2 = vector.broadcast %cst_1 : f32 to vector<32x362xf32>
    %c0_2 = arith.constant 0 : index
    %c0_3 = arith.constant 0 : index
    %3 = vector.load %arg8[%c0_2, %c0_3] : memref<32x362xf32, #tpu.memory_space<vmem>>, vector<32x362xf32>
    tpu.vector_store %arg8[%c0_2, %c0_3], %2 {strides = array<i32>} : memref<32x362xf32, #tpu.memory_space<vmem>>, vector<32x362xf32>,
    %c0_4 = arith.constant 0 : index
    %c0_5 = arith.constant 0 : index
    %c0_6 = arith.constant 0 : index
    %4 = vector.load %arg1[%c0_4, %c0_5, %c0_6] : memref<1x32x324xf32, #tpu.memory_space<vmem>>, vector<1x32x324xf32>
    %5 = vector.shape_cast %4 : vector<1x32x324xf32> to vector<32x324xf32>
    %c0_7 = arith.constant 0 : index
    %c19 = arith.constant 19 : index
    %6 = vector.load %arg7[%c0_7, %c19] : memref<32x362xf32, #tpu.memory_space<vmem>>, vector<32x324xf32>
    tpu.vector_store %arg7[%c0_7, %c19], %5 {strides = array<i32>} : memref<32x362xf32, #tpu.memory_space<vmem>>, vector<32x324xf32>,
    %c0_8 = arith.constant 0 : index
    %c0_9 = arith.constant 0 : index
    %7 = vector.load %arg5[%c0_8, %c0_9] : memref<1x324xf32, #tpu.memory_space<vmem>>, vector<1x324xf32>
    %c0_10 = arith.constant 0 : index
    %c0_11 = arith.constant 0 : index
    %8 = vector.load %arg7[%c0_10, %c0_11] : memref<32x362xf32, #tpu.memory_space<vmem>>, vector<32x362xf32>
    %9 = vector.extract_strided_slice %8 {offsets = [0, 0], sizes = [32, 324], strides = [1, 1]} : vector<32x362xf32> to vector<32x324xf32>
    %c0_12 = arith.constant 0 : index
    %c0_13 = arith.constant 0 : index
    %10 = vector.load %arg9[%c0_12, %c0_13] : memref<288x324xf32, #tpu.memory_space<vmem>>, vector<32x324xf32>
    tpu.vector_store %arg9[%c0_12, %c0_13], %9 {strides = array<i32>} : memref<288x324xf32, #tpu.memory_space<vmem>>, vector<32x324xf32>,
    %11 = vector.extract_strided_slice %8 {offsets = [0, 1], sizes = [32, 324], strides = [1, 1]} : vector<32x362xf32> to vector<32x324xf32>
    %c32 = arith.constant 32 : index
    %c0_14 = arith.constant 0 : index
    %12 = vector.load %arg9[%c32, %c0_14] : memref<288x324xf32, #tpu.memory_space<vmem>>, vector<32x324xf32>
    tpu.vector_store %arg9[%c32, %c0_14], %11 {strides = array<i32>} : memref<288x324xf32, #tpu.memory_space<vmem>>, vector<32x324xf32>,
    %13 = vector.extract_strided_slice %8 {offsets = [0, 2], sizes = [32, 324], strides = [1, 1]} : vector<32x362xf32> to vector<32x324xf32>
    %c64 = arith.constant 64 : index
    %c0_15 = arith.constant 0 : index
    %14 = vector.load %arg9[%c64, %c0_15] : memref<288x324xf32, #tpu.memory_space<vmem>>, vector<32x324xf32>
    tpu.vector_store %arg9[%c64, %c0_15], %13 {strides = array<i32>} : memref<288x324xf32, #tpu.memory_space<vmem>>, vector<32x324xf32>,
    %15 = vector.extract_strided_slice %8 {offsets = [0, 18], sizes = [32, 324], strides = [1, 1]} : vector<32x362xf32> to vector<32x324xf32>
    %c96 = arith.constant 96 : index
    %c0_16 = arith.constant 0 : index
    %16 = vector.load %arg9[%c96, %c0_16] : memref<288x324xf32, #tpu.memory_space<vmem>>, vector<32x324xf32>
    tpu.vector_store %arg9[%c96, %c0_16], %15 {strides = array<i32>} : memref<288x324xf32, #tpu.memory_space<vmem>>, vector<32x324xf32>,
    %17 = vector.extract_strided_slice %8 {offsets = [0, 19], sizes = [32, 324], strides = [1, 1]} : vector<32x362xf32> to vector<32x324xf32>
    %c128 = arith.constant 128 : index
    %c0_17 = arith.constant 0 : index
    %18 = vector.load %arg9[%c128, %c0_17] : memref<288x324xf32, #tpu.memory_space<vmem>>, vector<32x324xf32>
    tpu.vector_store %arg9[%c128, %c0_17], %17 {strides = array<i32>} : memref<288x324xf32, #tpu.memory_space<vmem>>, vector<32x324xf32>,
    %19 = vector.extract_strided_slice %8 {offsets = [0, 20], sizes = [32, 324], strides = [1, 1]} : vector<32x362xf32> to vector<32x324xf32>
    %c160 = arith.constant 160 : index
    %c0_18 = arith.constant 0 : index
    %20 = vector.load %arg9[%c160, %c0_18] : memref<288x324xf32, #tpu.memory_space<vmem>>, vector<32x324xf32>
    tpu.vector_store %arg9[%c160, %c0_18], %19 {strides = array<i32>} : memref<288x324xf32, #tpu.memory_space<vmem>>, vector<32x324xf32>,
    %21 = vector.extract_strided_slice %8 {offsets = [0, 36], sizes = [32, 324], strides = [1, 1]} : vector<32x362xf32> to vector<32x324xf32>
    %c192 = arith.constant 192 : index
    %c0_19 = arith.constant 0 : index
    %22 = vector.load %arg9[%c192, %c0_19] : memref<288x324xf32, #tpu.memory_space<vmem>>, vector<32x324xf32>
    tpu.vector_store %arg9[%c192, %c0_19], %21 {strides = array<i32>} : memref<288x324xf32, #tpu.memory_space<vmem>>, vector<32x324xf32>,
    %23 = vector.extract_strided_slice %8 {offsets = [0, 37], sizes = [32, 324], strides = [1, 1]} : vector<32x362xf32> to vector<32x324xf32>
    %c224 = arith.constant 224 : index
    %c0_20 = arith.constant 0 : index
    %24 = vector.load %arg9[%c224, %c0_20] : memref<288x324xf32, #tpu.memory_space<vmem>>, vector<32x324xf32>
    tpu.vector_store %arg9[%c224, %c0_20], %23 {strides = array<i32>} : memref<288x324xf32, #tpu.memory_space<vmem>>, vector<32x324xf32>,
    %25 = vector.extract_strided_slice %8 {offsets = [0, 38], sizes = [32, 324], strides = [1, 1]} : vector<32x362xf32> to vector<32x324xf32>
    %c256 = arith.constant 256 : index
    %c0_21 = arith.constant 0 : index
    %26 = vector.load %arg9[%c256, %c0_21] : memref<288x324xf32, #tpu.memory_space<vmem>>, vector<32x324xf32>
    tpu.vector_store %arg9[%c256, %c0_21], %25 {strides = array<i32>} : memref<288x324xf32, #tpu.memory_space<vmem>>, vector<32x324xf32>,
    %c0_22 = arith.constant 0 : index
    %c0_23 = arith.constant 0 : index
    %27 = vector.load %arg9[%c0_22, %c0_23] : memref<288x324xf32, #tpu.memory_space<vmem>>, vector<288x324xf32>
    %c0_24 = arith.constant 0 : index
    %c0_25 = arith.constant 0 : index
    %c0_26 = arith.constant 0 : index
    %28 = vector.load %arg2[%c0_24, %c0_25, %c0_26] : memref<3x32x288xf32, #tpu.memory_space<vmem>>, vector<1x32x288xf32>
    %29 = vector.shape_cast %28 : vector<1x32x288xf32> to vector<32x288xf32>
    %cst_27 = arith.constant dense<0.000000e+00> : vector<32x324xf32>
    %30 = tpu.matmul %29, %27, %cst_27 {dimension_numbers = #tpu.dot_dimension_numbers<[1], [0], [0], [1], [0, 0, 1, 1], [], []>} : vector<32x288xf32>, vector<288x324xf32>, vector<32x324xf32> -> vector<32x324xf32>
    %c0_28 = arith.constant 0 : index
    %c0_29 = arith.constant 0 : index
    %c0_30 = arith.constant 0 : index
    %31 = vector.load %arg3[%c0_28, %c0_29, %c0_30] : memref<3x32x1xf32, #tpu.memory_space<vmem>>, vector<1x32x1xf32>
    %32 = vector.shape_cast %31 : vector<1x32x1xf32> to vector<32x1xf32>
    %33 = vector.broadcast %32 : vector<32x1xf32> to vector<32x324xf32>
    %34 = arith.addf %30, %33 : vector<32x324xf32>
    %cst_31 = arith.constant 0.000000e+00 : f32
    %35 = vector.broadcast %cst_31 : f32 to vector<32x324xf32>
    %36 = arith.maximumf %34, %35 : vector<32x324xf32>
    %37 = vector.broadcast %7 : vector<1x324xf32> to vector<32x324xf32>
    %38 = arith.mulf %36, %37 : vector<32x324xf32>
    %c0_32 = arith.constant 0 : index
    %c19_33 = arith.constant 19 : index
    %39 = vector.load %arg8[%c0_32, %c19_33] : memref<32x362xf32, #tpu.memory_space<vmem>>, vector<32x324xf32>
    tpu.vector_store %arg8[%c0_32, %c19_33], %38 {strides = array<i32>} : memref<32x362xf32, #tpu.memory_space<vmem>>, vector<32x324xf32>,
    %c0_34 = arith.constant 0 : index
    %c0_35 = arith.constant 0 : index
    %40 = vector.load %arg8[%c0_34, %c0_35] : memref<32x362xf32, #tpu.memory_space<vmem>>, vector<32x362xf32>
    %41 = vector.extract_strided_slice %40 {offsets = [0, 0], sizes = [32, 324], strides = [1, 1]} : vector<32x362xf32> to vector<32x324xf32>
    %c0_36 = arith.constant 0 : index
    %c0_37 = arith.constant 0 : index
    %42 = vector.load %arg9[%c0_36, %c0_37] : memref<288x324xf32, #tpu.memory_space<vmem>>, vector<32x324xf32>
    tpu.vector_store %arg9[%c0_36, %c0_37], %41 {strides = array<i32>} : memref<288x324xf32, #tpu.memory_space<vmem>>, vector<32x324xf32>,
    %43 = vector.extract_strided_slice %40 {offsets = [0, 1], sizes = [32, 324], strides = [1, 1]} : vector<32x362xf32> to vector<32x324xf32>
    %c32_38 = arith.constant 32 : index
    %c0_39 = arith.constant 0 : index
    %44 = vector.load %arg9[%c32_38, %c0_39] : memref<288x324xf32, #tpu.memory_space<vmem>>, vector<32x324xf32>
    tpu.vector_store %arg9[%c32_38, %c0_39], %43 {strides = array<i32>} : memref<288x324xf32, #tpu.memory_space<vmem>>, vector<32x324xf32>,
    %45 = vector.extract_strided_slice %40 {offsets = [0, 2], sizes = [32, 324], strides = [1, 1]} : vector<32x362xf32> to vector<32x324xf32>
    %c64_40 = arith.constant 64 : index
    %c0_41 = arith.constant 0 : index
    %46 = vector.load %arg9[%c64_40, %c0_41] : memref<288x324xf32, #tpu.memory_space<vmem>>, vector<32x324xf32>
    tpu.vector_store %arg9[%c64_40, %c0_41], %45 {strides = array<i32>} : memref<288x324xf32, #tpu.memory_space<vmem>>, vector<32x324xf32>,
    %47 = vector.extract_strided_slice %40 {offsets = [0, 18], sizes = [32, 324], strides = [1, 1]} : vector<32x362xf32> to vector<32x324xf32>
    %c96_42 = arith.constant 96 : index
    %c0_43 = arith.constant 0 : index
    %48 = vector.load %arg9[%c96_42, %c0_43] : memref<288x324xf32, #tpu.memory_space<vmem>>, vector<32x324xf32>
    tpu.vector_store %arg9[%c96_42, %c0_43], %47 {strides = array<i32>} : memref<288x324xf32, #tpu.memory_space<vmem>>, vector<32x324xf32>,
    %49 = vector.extract_strided_slice %40 {offsets = [0, 19], sizes = [32, 324], strides = [1, 1]} : vector<32x362xf32> to vector<32x324xf32>
    %c128_44 = arith.constant 128 : index
    %c0_45 = arith.constant 0 : index
    %50 = vector.load %arg9[%c128_44, %c0_45] : memref<288x324xf32, #tpu.memory_space<vmem>>, vector<32x324xf32>
    tpu.vector_store %arg9[%c128_44, %c0_45], %49 {strides = array<i32>} : memref<288x324xf32, #tpu.memory_space<vmem>>, vector<32x324xf32>,
    %51 = vector.extract_strided_slice %40 {offsets = [0, 20], sizes = [32, 324], strides = [1, 1]} : vector<32x362xf32> to vector<32x324xf32>
    %c160_46 = arith.constant 160 : index
    %c0_47 = arith.constant 0 : index
    %52 = vector.load %arg9[%c160_46, %c0_47] : memref<288x324xf32, #tpu.memory_space<vmem>>, vector<32x324xf32>
    tpu.vector_store %arg9[%c160_46, %c0_47], %51 {strides = array<i32>} : memref<288x324xf32, #tpu.memory_space<vmem>>, vector<32x324xf32>,
    %53 = vector.extract_strided_slice %40 {offsets = [0, 36], sizes = [32, 324], strides = [1, 1]} : vector<32x362xf32> to vector<32x324xf32>
    %c192_48 = arith.constant 192 : index
    %c0_49 = arith.constant 0 : index
    %54 = vector.load %arg9[%c192_48, %c0_49] : memref<288x324xf32, #tpu.memory_space<vmem>>, vector<32x324xf32>
    tpu.vector_store %arg9[%c192_48, %c0_49], %53 {strides = array<i32>} : memref<288x324xf32, #tpu.memory_space<vmem>>, vector<32x324xf32>,
    %55 = vector.extract_strided_slice %40 {offsets = [0, 37], sizes = [32, 324], strides = [1, 1]} : vector<32x362xf32> to vector<32x324xf32>
    %c224_50 = arith.constant 224 : index
    %c0_51 = arith.constant 0 : index
    %56 = vector.load %arg9[%c224_50, %c0_51] : memref<288x324xf32, #tpu.memory_space<vmem>>, vector<32x324xf32>
    tpu.vector_store %arg9[%c224_50, %c0_51], %55 {strides = array<i32>} : memref<288x324xf32, #tpu.memory_space<vmem>>, vector<32x324xf32>,
    %57 = vector.extract_strided_slice %40 {offsets = [0, 38], sizes = [32, 324], strides = [1, 1]} : vector<32x362xf32> to vector<32x324xf32>
    %c256_52 = arith.constant 256 : index
    %c0_53 = arith.constant 0 : index
    %58 = vector.load %arg9[%c256_52, %c0_53] : memref<288x324xf32, #tpu.memory_space<vmem>>, vector<32x324xf32>
    tpu.vector_store %arg9[%c256_52, %c0_53], %57 {strides = array<i32>} : memref<288x324xf32, #tpu.memory_space<vmem>>, vector<32x324xf32>,
    %c0_54 = arith.constant 0 : index
    %c0_55 = arith.constant 0 : index
    %59 = vector.load %arg9[%c0_54, %c0_55] : memref<288x324xf32, #tpu.memory_space<vmem>>, vector<288x324xf32>
    %c1 = arith.constant 1 : index
    %c0_56 = arith.constant 0 : index
    %c0_57 = arith.constant 0 : index
    %60 = vector.load %arg2[%c1, %c0_56, %c0_57] : memref<3x32x288xf32, #tpu.memory_space<vmem>>, vector<1x32x288xf32>
    %61 = vector.shape_cast %60 : vector<1x32x288xf32> to vector<32x288xf32>
    %cst_58 = arith.constant dense<0.000000e+00> : vector<32x324xf32>
    %62 = tpu.matmul %61, %59, %cst_58 {dimension_numbers = #tpu.dot_dimension_numbers<[1], [0], [0], [1], [0, 0, 1, 1], [], []>} : vector<32x288xf32>, vector<288x324xf32>, vector<32x324xf32> -> vector<32x324xf32>
    %c1_59 = arith.constant 1 : index
    %c0_60 = arith.constant 0 : index
    %c0_61 = arith.constant 0 : index
    %63 = vector.load %arg3[%c1_59, %c0_60, %c0_61] : memref<3x32x1xf32, #tpu.memory_space<vmem>>, vector<1x32x1xf32>
    %64 = vector.shape_cast %63 : vector<1x32x1xf32> to vector<32x1xf32>
    %65 = vector.broadcast %64 : vector<32x1xf32> to vector<32x324xf32>
    %66 = arith.addf %62, %65 : vector<32x324xf32>
    %cst_62 = arith.constant 0.000000e+00 : f32
    %67 = vector.broadcast %cst_62 : f32 to vector<32x324xf32>
    %68 = arith.maximumf %66, %67 : vector<32x324xf32>
    %69 = vector.broadcast %7 : vector<1x324xf32> to vector<32x324xf32>
    %70 = arith.mulf %68, %69 : vector<32x324xf32>
    %c0_63 = arith.constant 0 : index
    %c19_64 = arith.constant 19 : index
    %71 = vector.load %arg7[%c0_63, %c19_64] : memref<32x362xf32, #tpu.memory_space<vmem>>, vector<32x324xf32>
    tpu.vector_store %arg7[%c0_63, %c19_64], %70 {strides = array<i32>} : memref<32x362xf32, #tpu.memory_space<vmem>>, vector<32x324xf32>,
    %c0_65 = arith.constant 0 : index
    %c0_66 = arith.constant 0 : index
    %72 = vector.load %arg7[%c0_65, %c0_66] : memref<32x362xf32, #tpu.memory_space<vmem>>, vector<32x362xf32>
    %73 = vector.extract_strided_slice %72 {offsets = [0, 0], sizes = [32, 324], strides = [1, 1]} : vector<32x362xf32> to vector<32x324xf32>
    %c0_67 = arith.constant 0 : index
    %c0_68 = arith.constant 0 : index
    %74 = vector.load %arg9[%c0_67, %c0_68] : memref<288x324xf32, #tpu.memory_space<vmem>>, vector<32x324xf32>
    tpu.vector_store %arg9[%c0_67, %c0_68], %73 {strides = array<i32>} : memref<288x324xf32, #tpu.memory_space<vmem>>, vector<32x324xf32>,
    %75 = vector.extract_strided_slice %72 {offsets = [0, 1], sizes = [32, 324], strides = [1, 1]} : vector<32x362xf32> to vector<32x324xf32>
    %c32_69 = arith.constant 32 : index
    %c0_70 = arith.constant 0 : index
    %76 = vector.load %arg9[%c32_69, %c0_70] : memref<288x324xf32, #tpu.memory_space<vmem>>, vector<32x324xf32>
    tpu.vector_store %arg9[%c32_69, %c0_70], %75 {strides = array<i32>} : memref<288x324xf32, #tpu.memory_space<vmem>>, vector<32x324xf32>,
    %77 = vector.extract_strided_slice %72 {offsets = [0, 2], sizes = [32, 324], strides = [1, 1]} : vector<32x362xf32> to vector<32x324xf32>
    %c64_71 = arith.constant 64 : index
    %c0_72 = arith.constant 0 : index
    %78 = vector.load %arg9[%c64_71, %c0_72] : memref<288x324xf32, #tpu.memory_space<vmem>>, vector<32x324xf32>
    tpu.vector_store %arg9[%c64_71, %c0_72], %77 {strides = array<i32>} : memref<288x324xf32, #tpu.memory_space<vmem>>, vector<32x324xf32>,
    %79 = vector.extract_strided_slice %72 {offsets = [0, 18], sizes = [32, 324], strides = [1, 1]} : vector<32x362xf32> to vector<32x324xf32>
    %c96_73 = arith.constant 96 : index
    %c0_74 = arith.constant 0 : index
    %80 = vector.load %arg9[%c96_73, %c0_74] : memref<288x324xf32, #tpu.memory_space<vmem>>, vector<32x324xf32>
    tpu.vector_store %arg9[%c96_73, %c0_74], %79 {strides = array<i32>} : memref<288x324xf32, #tpu.memory_space<vmem>>, vector<32x324xf32>,
    %81 = vector.extract_strided_slice %72 {offsets = [0, 19], sizes = [32, 324], strides = [1, 1]} : vector<32x362xf32> to vector<32x324xf32>
    %c128_75 = arith.constant 128 : index
    %c0_76 = arith.constant 0 : index
    %82 = vector.load %arg9[%c128_75, %c0_76] : memref<288x324xf32, #tpu.memory_space<vmem>>, vector<32x324xf32>
    tpu.vector_store %arg9[%c128_75, %c0_76], %81 {strides = array<i32>} : memref<288x324xf32, #tpu.memory_space<vmem>>, vector<32x324xf32>,
    %83 = vector.extract_strided_slice %72 {offsets = [0, 20], sizes = [32, 324], strides = [1, 1]} : vector<32x362xf32> to vector<32x324xf32>
    %c160_77 = arith.constant 160 : index
    %c0_78 = arith.constant 0 : index
    %84 = vector.load %arg9[%c160_77, %c0_78] : memref<288x324xf32, #tpu.memory_space<vmem>>, vector<32x324xf32>
    tpu.vector_store %arg9[%c160_77, %c0_78], %83 {strides = array<i32>} : memref<288x324xf32, #tpu.memory_space<vmem>>, vector<32x324xf32>,
    %85 = vector.extract_strided_slice %72 {offsets = [0, 36], sizes = [32, 324], strides = [1, 1]} : vector<32x362xf32> to vector<32x324xf32>
    %c192_79 = arith.constant 192 : index
    %c0_80 = arith.constant 0 : index
    %86 = vector.load %arg9[%c192_79, %c0_80] : memref<288x324xf32, #tpu.memory_space<vmem>>, vector<32x324xf32>
    tpu.vector_store %arg9[%c192_79, %c0_80], %85 {strides = array<i32>} : memref<288x324xf32, #tpu.memory_space<vmem>>, vector<32x324xf32>,
    %87 = vector.extract_strided_slice %72 {offsets = [0, 37], sizes = [32, 324], strides = [1, 1]} : vector<32x362xf32> to vector<32x324xf32>
    %c224_81 = arith.constant 224 : index
    %c0_82 = arith.constant 0 : index
    %88 = vector.load %arg9[%c224_81, %c0_82] : memref<288x324xf32, #tpu.memory_space<vmem>>, vector<32x324xf32>
    tpu.vector_store %arg9[%c224_81, %c0_82], %87 {strides = array<i32>} : memref<288x324xf32, #tpu.memory_space<vmem>>, vector<32x324xf32>,
    %89 = vector.extract_strided_slice %72 {offsets = [0, 38], sizes = [32, 324], strides = [1, 1]} : vector<32x362xf32> to vector<32x324xf32>
    %c256_83 = arith.constant 256 : index
    %c0_84 = arith.constant 0 : index
    %90 = vector.load %arg9[%c256_83, %c0_84] : memref<288x324xf32, #tpu.memory_space<vmem>>, vector<32x324xf32>
    tpu.vector_store %arg9[%c256_83, %c0_84], %89 {strides = array<i32>} : memref<288x324xf32, #tpu.memory_space<vmem>>, vector<32x324xf32>,
    %c0_85 = arith.constant 0 : index
    %c0_86 = arith.constant 0 : index
    %91 = vector.load %arg9[%c0_85, %c0_86] : memref<288x324xf32, #tpu.memory_space<vmem>>, vector<288x324xf32>
    %c2 = arith.constant 2 : index
    %c0_87 = arith.constant 0 : index
    %c0_88 = arith.constant 0 : index
    %92 = vector.load %arg2[%c2, %c0_87, %c0_88] : memref<3x32x288xf32, #tpu.memory_space<vmem>>, vector<1x32x288xf32>
    %93 = vector.shape_cast %92 : vector<1x32x288xf32> to vector<32x288xf32>
    %cst_89 = arith.constant dense<0.000000e+00> : vector<32x324xf32>
    %94 = tpu.matmul %93, %91, %cst_89 {dimension_numbers = #tpu.dot_dimension_numbers<[1], [0], [0], [1], [0, 0, 1, 1], [], []>} : vector<32x288xf32>, vector<288x324xf32>, vector<32x324xf32> -> vector<32x324xf32>
    %c2_90 = arith.constant 2 : index
    %c0_91 = arith.constant 0 : index
    %c0_92 = arith.constant 0 : index
    %95 = vector.load %arg3[%c2_90, %c0_91, %c0_92] : memref<3x32x1xf32, #tpu.memory_space<vmem>>, vector<1x32x1xf32>
    %96 = vector.shape_cast %95 : vector<1x32x1xf32> to vector<32x1xf32>
    %97 = vector.broadcast %96 : vector<32x1xf32> to vector<32x324xf32>
    %98 = arith.addf %94, %97 : vector<32x324xf32>
    %cst_93 = arith.constant 0.000000e+00 : f32
    %99 = vector.broadcast %cst_93 : f32 to vector<32x324xf32>
    %100 = arith.maximumf %98, %99 : vector<32x324xf32>
    %101 = vector.broadcast %7 : vector<1x324xf32> to vector<32x324xf32>
    %102 = arith.mulf %100, %101 : vector<32x324xf32>
    %c0_94 = arith.constant 0 : index
    %c19_95 = arith.constant 19 : index
    %103 = vector.load %arg8[%c0_94, %c19_95] : memref<32x362xf32, #tpu.memory_space<vmem>>, vector<32x324xf32>
    tpu.vector_store %arg8[%c0_94, %c19_95], %102 {strides = array<i32>} : memref<32x362xf32, #tpu.memory_space<vmem>>, vector<32x324xf32>,
    %c0_96 = arith.constant 0 : index
    %c0_97 = arith.constant 0 : index
    %104 = vector.load %arg8[%c0_96, %c0_97] : memref<32x362xf32, #tpu.memory_space<vmem>>, vector<32x362xf32>
    %105 = vector.extract_strided_slice %104 {offsets = [0, 0], sizes = [32, 324], strides = [1, 1]} : vector<32x362xf32> to vector<32x324xf32>
    %c0_98 = arith.constant 0 : index
    %c0_99 = arith.constant 0 : index
    %106 = vector.load %arg9[%c0_98, %c0_99] : memref<288x324xf32, #tpu.memory_space<vmem>>, vector<32x324xf32>
    tpu.vector_store %arg9[%c0_98, %c0_99], %105 {strides = array<i32>} : memref<288x324xf32, #tpu.memory_space<vmem>>, vector<32x324xf32>,
    %107 = vector.extract_strided_slice %104 {offsets = [0, 1], sizes = [32, 324], strides = [1, 1]} : vector<32x362xf32> to vector<32x324xf32>
    %c32_100 = arith.constant 32 : index
    %c0_101 = arith.constant 0 : index
    %108 = vector.load %arg9[%c32_100, %c0_101] : memref<288x324xf32, #tpu.memory_space<vmem>>, vector<32x324xf32>
    tpu.vector_store %arg9[%c32_100, %c0_101], %107 {strides = array<i32>} : memref<288x324xf32, #tpu.memory_space<vmem>>, vector<32x324xf32>,
    %109 = vector.extract_strided_slice %104 {offsets = [0, 2], sizes = [32, 324], strides = [1, 1]} : vector<32x362xf32> to vector<32x324xf32>
    %c64_102 = arith.constant 64 : index
    %c0_103 = arith.constant 0 : index
    %110 = vector.load %arg9[%c64_102, %c0_103] : memref<288x324xf32, #tpu.memory_space<vmem>>, vector<32x324xf32>
    tpu.vector_store %arg9[%c64_102, %c0_103], %109 {strides = array<i32>} : memref<288x324xf32, #tpu.memory_space<vmem>>, vector<32x324xf32>,
    %111 = vector.extract_strided_slice %104 {offsets = [0, 18], sizes = [32, 324], strides = [1, 1]} : vector<32x362xf32> to vector<32x324xf32>
    %c96_104 = arith.constant 96 : index
    %c0_105 = arith.constant 0 : index
    %112 = vector.load %arg9[%c96_104, %c0_105] : memref<288x324xf32, #tpu.memory_space<vmem>>, vector<32x324xf32>
    tpu.vector_store %arg9[%c96_104, %c0_105], %111 {strides = array<i32>} : memref<288x324xf32, #tpu.memory_space<vmem>>, vector<32x324xf32>,
    %113 = vector.extract_strided_slice %104 {offsets = [0, 19], sizes = [32, 324], strides = [1, 1]} : vector<32x362xf32> to vector<32x324xf32>
    %c128_106 = arith.constant 128 : index
    %c0_107 = arith.constant 0 : index
    %114 = vector.load %arg9[%c128_106, %c0_107] : memref<288x324xf32, #tpu.memory_space<vmem>>, vector<32x324xf32>
    tpu.vector_store %arg9[%c128_106, %c0_107], %113 {strides = array<i32>} : memref<288x324xf32, #tpu.memory_space<vmem>>, vector<32x324xf32>,
    %115 = vector.extract_strided_slice %104 {offsets = [0, 20], sizes = [32, 324], strides = [1, 1]} : vector<32x362xf32> to vector<32x324xf32>
    %c160_108 = arith.constant 160 : index
    %c0_109 = arith.constant 0 : index
    %116 = vector.load %arg9[%c160_108, %c0_109] : memref<288x324xf32, #tpu.memory_space<vmem>>, vector<32x324xf32>
    tpu.vector_store %arg9[%c160_108, %c0_109], %115 {strides = array<i32>} : memref<288x324xf32, #tpu.memory_space<vmem>>, vector<32x324xf32>,
    %117 = vector.extract_strided_slice %104 {offsets = [0, 36], sizes = [32, 324], strides = [1, 1]} : vector<32x362xf32> to vector<32x324xf32>
    %c192_110 = arith.constant 192 : index
    %c0_111 = arith.constant 0 : index
    %118 = vector.load %arg9[%c192_110, %c0_111] : memref<288x324xf32, #tpu.memory_space<vmem>>, vector<32x324xf32>
    tpu.vector_store %arg9[%c192_110, %c0_111], %117 {strides = array<i32>} : memref<288x324xf32, #tpu.memory_space<vmem>>, vector<32x324xf32>,
    %119 = vector.extract_strided_slice %104 {offsets = [0, 37], sizes = [32, 324], strides = [1, 1]} : vector<32x362xf32> to vector<32x324xf32>
    %c224_112 = arith.constant 224 : index
    %c0_113 = arith.constant 0 : index
    %120 = vector.load %arg9[%c224_112, %c0_113] : memref<288x324xf32, #tpu.memory_space<vmem>>, vector<32x324xf32>
    tpu.vector_store %arg9[%c224_112, %c0_113], %119 {strides = array<i32>} : memref<288x324xf32, #tpu.memory_space<vmem>>, vector<32x324xf32>,
    %121 = vector.extract_strided_slice %104 {offsets = [0, 38], sizes = [32, 324], strides = [1, 1]} : vector<32x362xf32> to vector<32x324xf32>
    %c256_114 = arith.constant 256 : index
    %c0_115 = arith.constant 0 : index
    %122 = vector.load %arg9[%c256_114, %c0_115] : memref<288x324xf32, #tpu.memory_space<vmem>>, vector<32x324xf32>
    tpu.vector_store %arg9[%c256_114, %c0_115], %121 {strides = array<i32>} : memref<288x324xf32, #tpu.memory_space<vmem>>, vector<32x324xf32>,
    %c0_116 = arith.constant 0 : index
    %c0_117 = arith.constant 0 : index
    %123 = vector.load %arg9[%c0_116, %c0_117] : memref<288x324xf32, #tpu.memory_space<vmem>>, vector<288x324xf32>
    %c0_118 = arith.constant 0 : index
    %c0_119 = arith.constant 0 : index
    %124 = vector.load %arg4[%c0_118, %c0_119] : memref<4x288xf32, #tpu.memory_space<vmem>>, vector<4x288xf32>
    %cst_120 = arith.constant dense<0.000000e+00> : vector<4x324xf32>
    %125 = tpu.matmul %124, %123, %cst_120 {dimension_numbers = #tpu.dot_dimension_numbers<[1], [0], [0], [1], [0, 0, 1, 1], [], []>} : vector<4x288xf32>, vector<288x324xf32>, vector<4x324xf32> -> vector<4x324xf32>
    %c0_121 = arith.constant 0 : index
    %c0_122 = arith.constant 0 : index
    %c0_123 = arith.constant 0 : index
    %126 = vector.load %arg1[%c0_121, %c0_122, %c0_123] : memref<1x32x324xf32, #tpu.memory_space<vmem>>, vector<1x4x324xf32>
    %127 = vector.shape_cast %126 : vector<1x4x324xf32> to vector<4x324xf32>
    %128 = arith.subf %127, %125 : vector<4x324xf32>
    %c0_124 = arith.constant 0 : index
    %c0_125 = arith.constant 0 : index
    %c0_126 = arith.constant 0 : index
    %129 = vector.load %arg6[%c0_124, %c0_125, %c0_126] : memref<1x4x324xf32, #tpu.memory_space<vmem>>, vector<1x4x324xf32>
    %130 = vector.shape_cast %129 : vector<1x4x324xf32> to vector<4x324xf32>
    %131 = vector.shape_cast %128 : vector<4x324xf32> to vector<1x4x324xf32>
    tpu.vector_store %arg6[%c0_124, %c0_125, %c0_126], %131 {strides = array<i32>} : memref<1x4x324xf32, #tpu.memory_space<vmem>>, vector<1x4x324xf32>,
    return
  }
  func.func @transform_0(%arg0: i32) -> (i32, i32, i32) {
    %c0_i32 = arith.constant 0 : i32
    %c0_i32_0 = arith.constant 0 : i32
    %c0_i32_1 = arith.constant 0 : i32
    return %arg0, %c0_i32, %c0_i32_0 : i32, i32, i32
  }
  func.func @transform_1(%arg0: i32) -> (i32, i32, i32) {
    %c0_i32 = arith.constant 0 : i32
    %c0_i32_0 = arith.constant 0 : i32
    %c0_i32_1 = arith.constant 0 : i32
    %c0_i32_2 = arith.constant 0 : i32
    return %c0_i32, %c0_i32_0, %c0_i32_1 : i32, i32, i32
  }
  func.func @transform_2(%arg0: i32) -> (i32, i32, i32) {
    %c0_i32 = arith.constant 0 : i32
    %c0_i32_0 = arith.constant 0 : i32
    %c0_i32_1 = arith.constant 0 : i32
    %c0_i32_2 = arith.constant 0 : i32
    return %c0_i32, %c0_i32_0, %c0_i32_1 : i32, i32, i32
  }
  func.func @transform_3(%arg0: i32) -> (i32, i32) {
    %c0_i32 = arith.constant 0 : i32
    %c0_i32_0 = arith.constant 0 : i32
    %c0_i32_1 = arith.constant 0 : i32
    return %c0_i32, %c0_i32_0 : i32, i32
  }
  func.func @transform_4(%arg0: i32) -> (i32, i32) {
    %c0_i32 = arith.constant 0 : i32
    %c0_i32_0 = arith.constant 0 : i32
    %c0_i32_1 = arith.constant 0 : i32
    return %c0_i32, %c0_i32_0 : i32, i32
  }
  func.func @transform_5(%arg0: i32) -> (i32, i32, i32) {
    %c0_i32 = arith.constant 0 : i32
    %c0_i32_0 = arith.constant 0 : i32
    %c0_i32_1 = arith.constant 0 : i32
    return %arg0, %c0_i32, %c0_i32_0 : i32, i32, i32
  }
}

</mosaic_0001>

<llo_original>
// kernel: dncnn_block_forward.1
$region0: #{dncnn_block_forward.1}
  #allocation0 [shape = 'u32[]', space=smem, size = 0x4, offset = 0x4, fixed_abs, tag = 'smem constant byte address 0x4 - core index']
  #allocation1 [shape = 'u32[144,128]{1,0:T(1,128)}', space=vmem, size = 0x12000, scoped, tag = 'internal scratch']
  #allocation2 [shape = 'f32[32,362]{1,0:T(8,128)}', space=vmem, size = 0xc000, scoped, tag = 'scratch operand']
  #allocation3 [shape = 'f32[32,362]{1,0:T(8,128)}', space=vmem, size = 0xc000, scoped, tag = 'scratch operand']
  #allocation4 [shape = 'f32[288,324]{1,0:T(8,128)}', space=vmem, size = 0x6c000, scoped, tag = 'scratch operand']
  %s0 = inlined_call_operand.vmem [shape: f32[2,32,324], index: 0, kind: input, shape index: {}]
  %s1 = inlined_call_operand.vmem [shape: f32[3,32,288], index: 1, kind: input, shape index: {}]
  %s2 = inlined_call_operand.vmem [shape: f32[3,32,1], index: 2, kind: input, shape index: {}]
  %s3 = inlined_call_operand.vmem [shape: f32[4,288], index: 3, kind: input, shape index: {}]
  %s4 = inlined_call_operand.vmem [shape: f32[1,324], index: 4, kind: input, shape index: {}]
  %s5 = inlined_call_operand.vmem [shape: f32[2,4,324], index: 5, kind: output, shape index: {}]
  %s6 = sld [smem:[#allocation0]]
  $region53: #{dncnn_block_forward.1} parent=0
    _
  %s8 = ssub.s32 1, %s6
  %s9 = scalar_select 0, %s8, %s6
  loop: start=0, step=1, limit=4
  $region2: #{dncnn_block_forward.1} parent=0 // loop_pre_header
    _
  $region3: #{dncnn_block_forward.1} parent=0 // loop_header
    %s11 = sphi 0, %s15
    %p12 = scmp.ge.s32.totalorder %s11, 4
    %s21 = sphi 0, %s23
    %s24 = sphi 0, %s21
    %s25 = sphi 0, %s24
    %s41 = sphi 0, %s25
    %s45 = sphi 0, %s45
    %s47 = sphi 0, %s45
    %s48 = sphi 0, %s47
    %s62 = sphi 0, %s48
    %s66 = sphi 0, %s66
    %s68 = sphi 0, %s66
    %s69 = sphi 0, %s68
    %s83 = sphi 0, %s69
    %s87 = sphi 0, %s87
    %s89 = sphi 0, %s87
    %s90 = sphi 0, %s89
    %s104 = sphi 0, %s90
    %s108 = sphi 0, %s108
    %s110 = sphi 0, %s108
    %s111 = sphi 0, %s110
    %s125 = sphi 0, %s111
    %s131 = sphi 0, %s133
    %s134 = sphi 0, %s131
    %s135 = sphi 0, %s134
    %s151 = sphi 0, %s135
  $region4: #{dncnn_block_forward.1} parent=0 // loop_header_branch
    %14 = sbr.rel (%p12) target = $region8
  $region5: #{dncnn_block_forward.1} parent=0 // loop_body
    %s16 = ssub.s32 %s11, 1
    %s17 = ssub.s32 %s11, 2
    %s18 = sadd.s32 %s11, 1
    %s19 = ssub.s32 %s11, %s18
    %p20 = scmp.eq.s32.totalorder %s19, 0
    %s22 = sadd.s32 %s21, 1
    %s23 = scalar_select %p20, %s21, %s22
    %p26 = pneg %p20
    %p27 = scmp.eq.s32.totalorder %s11, 1
    %p28 = por %p26, %p27
    %p29 = scmp.ne.s32.totalorder %s21, %s24
    %p30 = scmp.eq.s32.totalorder %s11, 0
    %p31 = por %p29, %p30
    %p32 = scmp.ne.s32.totalorder %s21, %s24
    %p33 = scmp.eq.s32.totalorder %s16, 1
    %p34 = por %p32, %p33
    %p35 = scmp.ne.s32.totalorder %s24, %s25
    %p36 = scmp.eq.s32.totalorder %s16, 0
    %p37 = por %p35, %p36
    %p38 = scmp.ne.s32.totalorder %s24, %s25
    %p39 = scmp.eq.s32.totalorder %s17, 1
    %p40 = por %p38, %p39
    %p42 = scmp.ne.s32.totalorder %s25, %s41
    %p43 = scmp.eq.s32.totalorder %s17, 0
    %p44 = por %p42, %p43
    %s46 = sadd.s32 %s45, 1
    %p49 = scmp.eq.s32.totalorder %s11, 1
    %p50 = scmp.ne.s32.totalorder %s45, %s47
    %p51 = scmp.eq.s32.totalorder %s11, 0
    %p52 = por %p50, %p51
    %p53 = scmp.ne.s32.totalorder %s45, %s47
    %p54 = scmp.eq.s32.totalorder %s16, 1
    %p55 = por %p53, %p54
    %p56 = scmp.ne.s32.totalorder %s47, %s48
    %p57 = scmp.eq.s32.totalorder %s16, 0
    %p58 = por %p56, %p57
    %p59 = scmp.ne.s32.totalorder %s47, %s48
    %p60 = scmp.eq.s32.totalorder %s17, 1
    %p61 = por %p59, %p60
    %p63 = scmp.ne.s32.totalorder %s48, %s62
    %p64 = scmp.eq.s32.totalorder %s17, 0
    %p65 = por %p63, %p64
    %s67 = sadd.s32 %s66, 1
    %p70 = scmp.eq.s32.totalorder %s11, 1
    %p71 = scmp.ne.s32.totalorder %s66, %s68
    %p72 = scmp.eq.s32.totalorder %s11, 0
    %p73 = por %p71, %p72
    %p74 = scmp.ne.s32.totalorder %s66, %s68
    %p75 = scmp.eq.s32.totalorder %s16, 1
    %p76 = por %p74, %p75
    %p77 = scmp.ne.s32.totalorder %s68, %s69
    %p78 = scmp.eq.s32.totalorder %s16, 0
    %p79 = por %p77, %p78
    %p80 = scmp.ne.s32.totalorder %s68, %s69
    %p81 = scmp.eq.s32.totalorder %s17, 1
    %p82 = por %p80, %p81
    %p84 = scmp.ne.s32.totalorder %s69, %s83
    %p85 = scmp.eq.s32.totalorder %s17, 0
    %p86 = por %p84, %p85
    %s88 = sadd.s32 %s87, 1
    %p91 = scmp.eq.s32.totalorder %s11, 1
    %p92 = scmp.ne.s32.totalorder %s87, %s89
    %p93 = scmp.eq.s32.totalorder %s11, 0
    %p94 = por %p92, %p93
    %p95 = scmp.ne.s32.totalorder %s87, %s89
    %p96 = scmp.eq.s32.totalorder %s16, 1
    %p97 = por %p95, %p96
    %p98 = scmp.ne.s32.totalorder %s89, %s90
    %p99 = scmp.eq.s32.totalorder %s16, 0
    %p100 = por %p98, %p99
    %p101 = scmp.ne.s32.totalorder %s89, %s90
    %p102 = scmp.eq.s32.totalorder %s17, 1
    %p103 = por %p101, %p102
    %p105 = scmp.ne.s32.totalorder %s90, %s104
    %p106 = scmp.eq.s32.totalorder %s17, 0
    %p107 = por %p105, %p106
    %s109 = sadd.s32 %s108, 1
    %p112 = scmp.eq.s32.totalorder %s11, 1
    %p113 = scmp.ne.s32.totalorder %s108, %s110
    %p114 = scmp.eq.s32.totalorder %s11, 0
    %p115 = por %p113, %p114
    %p116 = scmp.ne.s32.totalorder %s108, %s110
    %p117 = scmp.eq.s32.totalorder %s16, 1
    %p118 = por %p116, %p117
    %p119 = scmp.ne.s32.totalorder %s110, %s111
    %p120 = scmp.eq.s32.totalorder %s16, 0
    %p121 = por %p119, %p120
    %p122 = scmp.ne.s32.totalorder %s110, %s111
    %p123 = scmp.eq.s32.totalorder %s17, 1
    %p124 = por %p122, %p123
    %p126 = scmp.ne.s32.totalorder %s111, %s125
    %p127 = scmp.eq.s32.totalorder %s17, 0
    %p128 = por %p126, %p127
    %s129 = ssub.s32 %s11, %s18
    %p130 = scmp.eq.s32.totalorder %s129, 0
    %s132 = sadd.s32 %s131, 1
    %s133 = scalar_select %p130, %s131, %s132
    %p136 = pneg %p130
    %p137 = scmp.eq.s32.totalorder %s11, 1
    %p138 = por %p136, %p137
    %p139 = scmp.ne.s32.totalorder %s131, %s134
    %p140 = scmp.eq.s32.totalorder %s11, 0
    %p141 = por %p139, %p140
    %p142 = scmp.ne.s32.totalorder %s131, %s134
    %p143 = scmp.eq.s32.totalorder %s16, 1
    %p144 = por %p142, %p143
    %p145 = scmp.ne.s32.totalorder %s134, %s135
    %p146 = scmp.eq.s32.totalorder %s16, 0
    %p147 = por %p145, %p146
    %p148 = scmp.ne.s32.totalorder %s134, %s135
    %p149 = scmp.eq.s32.totalorder %s17, 1
    %p150 = por %p148, %p149
    %p152 = scmp.ne.s32.totalorder %s135, %s151
    %p153 = scmp.eq.s32.totalorder %s17, 0
    %p154 = por %p152, %p153
    %p155 = scmp.le.s32.totalorder 1, %s11
    %p156 = scmp.lt.s32.totalorder %s11, 3
    %p157 = pnand %p155, %p156
    %p158 = pneg %p157
    // Predicated region
    $region9: #{dncnn_block_forward.1} parent=5 // pred_check
      _
    $region10: #{dncnn_block_forward.1} parent=5 // pred_check_branch
      %160 = sbr.rel (%p157) target = $region12
    $region11: #{dncnn_block_forward.1} parent=5 // pred_region
      %s161 = ssub.s32 %s11, 1
      // Predicated region
      $region13: #{dncnn_block_forward.1} parent=11 // pred_check
        %p162 = pneg %p58
      $region14: #{dncnn_block_forward.1} parent=11 // pred_check_branch
        %164 = sbr.rel (%p162) target = $region16
      $region15: #{dncnn_block_forward.1} parent=11 // pred_region
        _
      $region16: #{dncnn_block_forward.1} parent=11 // pred_fallthru
        _
      // Predicated region
      $region17: #{dncnn_block_forward.1} parent=11 // pred_check
        %p165 = pneg %p79
      $region18: #{dncnn_block_forward.1} parent=11 // pred_check_branch
        %167 = sbr.rel (%p165) target = $region20
      $region19: #{dncnn_block_forward.1} parent=11 // pred_region
        _
      $region20: #{dncnn_block_forward.1} parent=11 // pred_fallthru
        _
      // Predicated region
      $region21: #{dncnn_block_forward.1} parent=11 // pred_check
        %p168 = pneg %p100
      $region22: #{dncnn_block_forward.1} parent=11 // pred_check_branch
        %170 = sbr.rel (%p168) target = $region24
      $region23: #{dncnn_block_forward.1} parent=11 // pred_region
        _
      $region24: #{dncnn_block_forward.1} parent=11 // pred_fallthru
        _
      // Predicated region
      $region25: #{dncnn_block_forward.1} parent=11 // pred_check
        %p171 = pneg %p121
      $region26: #{dncnn_block_forward.1} parent=11 // pred_check_branch
        %173 = sbr.rel (%p171) target = $region28
      $region27: #{dncnn_block_forward.1} parent=11 // pred_region
        _
      $region28: #{dncnn_block_forward.1} parent=11 // pred_fallthru
        _
    $region12: #{dncnn_block_forward.1} parent=5 // pred_fallthru
      _
    %p174 = scmp.lt.s32.totalorder %s11, 2
    // Predicated region
    $region29: #{dncnn_block_forward.1} parent=5 // pred_check
      %p175 = pneg %p174
    $region30: #{dncnn_block_forward.1} parent=5 // pred_check_branch
      %177 = sbr.rel (%p175) target = $region32
    $region31: #{dncnn_block_forward.1} parent=5 // pred_region
      // Predicated region
      $region33: #{dncnn_block_forward.1} parent=31 // pred_check
        %p178 = pneg %p31
      $region34: #{dncnn_block_forward.1} parent=31 // pred_check_branch
        %180 = sbr.rel (%p178) target = $region36
      $region35: #{dncnn_block_forward.1} parent=31 // pred_region
        %p181 = scmp.lt.s32.totalorder %s11, 1
        %s182 = scalar_select %p181, %s11, 1
        %s183 = smul.addr %s182, 12
        %s184 = smul.addr %s183, 8
        %s185 = scalar_lea.vmem %s0, %s184
      $region36: #{dncnn_block_forward.1} parent=31 // pred_fallthru
        _
    $region32: #{dncnn_block_forward.1} parent=5 // pred_fallthru
      _
    %p186 = scmp.le.s32.totalorder 1, %s11
    %p187 = scmp.lt.s32.totalorder %s11, 3
    %p188 = pnand %p186, %p187
    %p189 = pneg %p188
    // Predicated region
    $region37: #{dncnn_block_forward.1} parent=5 // pred_check
      _
    $region38: #{dncnn_block_forward.1} parent=5 // pred_check_branch
      %191 = sbr.rel (%p188) target = $region40
    $region39: #{dncnn_block_forward.1} parent=5 // pred_region
      %s192 = ssub.s32 %s11, 1
      %p193 = scmp.lt.s32.totalorder %s16, 1
      %s194 = scalar_select %p193, %s16, 1
      %s195 = smul.addr %s194, 12
      %s196 = smul.addr %s195, 8
      %s197 = scalar_lea.vmem %s0, %s196
      %p198 = pneg %p37
      %p199 = pneg %p34
      %p200 = pneg %p58
      %p201 = pneg %p55
      %p202 = pneg %p79
      %p203 = pneg %p76
      %p204 = pneg %p100
      %p205 = pneg %p97
      %p206 = pneg %p121
      %p207 = pneg %p118
      %p208 = pneg %p147
      %p209 = pneg %p144
      %p210 = scmp.lt.s32.totalorder %s16, 1
      %s211 = scalar_select %p210, %s16, 1
      %s212 = smul.addr %s211, 3
      %s213 = smul.addr %s212, 4
      %s214 = scalar_lea.vmem %s5, %s213
      %p215 = scmp.lt.s32.totalorder %s16, 1
      %s216 = scalar_select %p215, %s16, 1
      %s217 = smul.addr %s216, 12
      %s218 = smul.addr %s217, 8
      %s219 = scalar_lea.vmem %s0, %s218
      %p220 = scmp.lt.s32.totalorder %s16, 1
      %s221 = scalar_select %p220, %s16, 1
      %s222 = smul.addr %s221, 3
      %s223 = smul.addr %s222, 4
      %s224 = scalar_lea.vmem %s5, %s223
      %225 = vst [vmem:[#allocation2] sm:$0xff] 0.0
      %226 = vst [vmem:[#allocation2 + $0x8] sm:$0xff] 0.0
      %vm227 = vcmask 867328
      %228 = vst.msk [vmem:[#allocation2 + $0x10] sm:$0xff] %vm227, 0.0
      %229 = vst [vmem:[#allocation2 + $0x18] sm:$0xff] 0.0
      %230 = vst [vmem:[#allocation2 + $0x20] sm:$0xff] 0.0
      %231 = vst.msk [vmem:[#allocation2 + $0x28] sm:$0xff] %vm227, 0.0
      %232 = vst [vmem:[#allocation2 + $0x30] sm:$0xff] 0.0
      %233 = vst [vmem:[#allocation2 + $0x38] sm:$0xff] 0.0
      %234 = vst.msk [vmem:[#allocation2 + $0x40] sm:$0xff] %vm227, 0.0
      %235 = vst [vmem:[#allocation2 + $0x48] sm:$0xff] 0.0
      %236 = vst [vmem:[#allocation2 + $0x50] sm:$0xff] 0.0
      %237 = vst.msk [vmem:[#allocation2 + $0x58] sm:$0xff] %vm227, 0.0
      %238 = vst [vmem:[#allocation3] sm:$0xff] 0.0
      %239 = vst [vmem:[#allocation3 + $0x8] sm:$0xff] 0.0
      %240 = vst.msk [vmem:[#allocation3 + $0x10] sm:$0xff] %vm227, 0.0
      %241 = vst [vmem:[#allocation3 + $0x18] sm:$0xff] 0.0
      %242 = vst [vmem:[#allocation3 + $0x20] sm:$0xff] 0.0
      %243 = vst.msk [vmem:[#allocation3 + $0x28] sm:$0xff] %vm227, 0.0
      %244 = vst [vmem:[#allocation3 + $0x30] sm:$0xff] 0.0
      %245 = vst [vmem:[#allocation3 + $0x38] sm:$0xff] 0.0
      %246 = vst.msk [vmem:[#allocation3 + $0x40] sm:$0xff] %vm227, 0.0
      %247 = vst [vmem:[#allocation3 + $0x48] sm:$0xff] 0.0
      %248 = vst [vmem:[#allocation3 + $0x50] sm:$0xff] 0.0
      %249 = vst.msk [vmem:[#allocation3 + $0x58] sm:$0xff] %vm227, 0.0
      %v250 = vld [vmem:[%s219] sm:$0xff]
      %v251 = vld [vmem:[%s219 + $0x8] sm:$0xff]
      %v252 = vld [vmem:[%s219 + $0x10] sm:$0xff]
      %v253 = vld [vmem:[%s219 + $0x18] sm:$0xff]
      %v254 = vld [vmem:[%s219 + $0x20] sm:$0xff]
      %v255 = vld [vmem:[%s219 + $0x28] sm:$0xff]
      %v256 = vld [vmem:[%s219 + $0x30] sm:$0xff]
      %v257 = vld [vmem:[%s219 + $0x38] sm:$0xff]
      %v258 = vld [vmem:[%s219 + $0x40] sm:$0xff]
      %v259 = vld [vmem:[%s219 + $0x48] sm:$0xff]
      %v260 = vld [vmem:[%s219 + $0x50] sm:$0xff]
      %v261 = vld [vmem:[%s219 + $0x58] sm:$0xff]
      %274 = vrot.lane.b32.xlu0 %v250, 19
      %v275 = vpop.permute.xlu0 %274
      %276 = vrot.lane.b32.xlu0 %v251, 19
      %v277 = vpop.permute.xlu0 %276
      %278 = vrot.lane.b32.xlu0 %v252, 19
      %v279 = vpop.permute.xlu0 %278
      %280 = vrot.lane.b32.xlu0 %v253, 19
      %v281 = vpop.permute.xlu0 %280
      %282 = vrot.lane.b32.xlu0 %v254, 19
      %v283 = vpop.permute.xlu0 %282
      %284 = vrot.lane.b32.xlu0 %v255, 19
      %v285 = vpop.permute.xlu0 %284
      %286 = vrot.lane.b32.xlu0 %v256, 19
      %v287 = vpop.permute.xlu0 %286
      %288 = vrot.lane.b32.xlu0 %v257, 19
      %v289 = vpop.permute.xlu0 %288
      %290 = vrot.lane.b32.xlu0 %v258, 19
      %v291 = vpop.permute.xlu0 %290
      %292 = vrot.lane.b32.xlu0 %v259, 19
      %v293 = vpop.permute.xlu0 %292
      %294 = vrot.lane.b32.xlu0 %v260, 19
      %v295 = vpop.permute.xlu0 %294
      %296 = vrot.lane.b32.xlu0 %v261, 19
      %v297 = vpop.permute.xlu0 %296
      %vm298 = vcmask 154624
      %v299 = vsel %vm298, %v275, %v277
      %v300 = vsel %vm298, %v277, %v279
      %v301 = vsel %vm298, %v281, %v283
      %v302 = vsel %vm298, %v283, %v285
      %v303 = vsel %vm298, %v287, %v289
      %v304 = vsel %vm298, %v289, %v291
      %v305 = vsel %vm298, %v293, %v295
      %v306 = vsel %vm298, %v295, %v297
      %vm319 = vcmask 1047704
      %320 = vst.msk [vmem:[#allocation2] sm:$0xff] %vm319, %v275
      %321 = vst [vmem:[#allocation2 + $0x8] sm:$0xff] %v299
      %vm322 = vcmask 711680
      %323 = vst.msk [vmem:[#allocation2 + $0x10] sm:$0xff] %vm322, %v300
      %324 = vst.msk [vmem:[#allocation2 + $0x18] sm:$0xff] %vm319, %v281
      %325 = vst [vmem:[#allocation2 + $0x20] sm:$0xff] %v301
      %326 = vst.msk [vmem:[#allocation2 + $0x28] sm:$0xff] %vm322, %v302
      %327 = vst.msk [vmem:[#allocation2 + $0x30] sm:$0xff] %vm319, %v287
      %328 = vst [vmem:[#allocation2 + $0x38] sm:$0xff] %v303
      %329 = vst.msk [vmem:[#allocation2 + $0x40] sm:$0xff] %vm322, %v304
      %330 = vst.msk [vmem:[#allocation2 + $0x48] sm:$0xff] %vm319, %v293
      %331 = vst [vmem:[#allocation2 + $0x50] sm:$0xff] %v305
      %332 = vst.msk [vmem:[#allocation2 + $0x58] sm:$0xff] %vm322, %v306
      %v333 = vld [vmem:[%s4] sm:$0x7]
      %v334 = vld [vmem:[#allocation2] sm:$0xff]
      %v335 = vld [vmem:[#allocation2 + $0x8] sm:$0xff]
      %v336 = vld [vmem:[#allocation2 + $0x10] sm:$0xff]
      %v337 = vld [vmem:[#allocation2 + $0x18] sm:$0xff]
      %v338 = vld [vmem:[#allocation2 + $0x20] sm:$0xff]
      %v339 = vld [vmem:[#allocation2 + $0x28] sm:$0xff]
      %v340 = vld [vmem:[#allocation2 + $0x30] sm:$0xff]
      %v341 = vld [vmem:[#allocation2 + $0x38] sm:$0xff]
      %v342 = vld [vmem:[#allocation2 + $0x40] sm:$0xff]
      %v343 = vld [vmem:[#allocation2 + $0x48] sm:$0xff]
      %v344 = vld [vmem:[#allocation2 + $0x50] sm:$0xff]
      %v345 = vld [vmem:[#allocation2 + $0x58] sm:$0xff]
      %346 = vst [vmem:[#allocation4] sm:$0xff] %v334
      %347 = vst [vmem:[#allocation4 + $0x8] sm:$0xff] %v335
      %vm348 = vcmask 556032
      %349 = vst.msk [vmem:[#allocation4 + $0x10] sm:$0xff] %vm348, %v336
      %350 = vst [vmem:[#allocation4 + $0x18] sm:$0xff] %v337
      %351 = vst [vmem:[#allocation4 + $0x20] sm:$0xff] %v338
      %352 = vst.msk [vmem:[#allocation4 + $0x28] sm:$0xff] %vm348, %v339
      %353 = vst [vmem:[#allocation4 + $0x30] sm:$0xff] %v340
      %354 = vst [vmem:[#allocation4 + $0x38] sm:$0xff] %v341
      %355 = vst.msk [vmem:[#allocation4 + $0x40] sm:$0xff] %vm348, %v342
      %356 = vst [vmem:[#allocation4 + $0x48] sm:$0xff] %v343
      %357 = vst [vmem:[#allocation4 + $0x50] sm:$0xff] %v344
      %358 = vst.msk [vmem:[#allocation4 + $0x58] sm:$0xff] %vm348, %v345
      %371 = vrot.lane.b32.xlu0 %v334, 127
      %v372 = vpop.permute.xlu0 %371
      %373 = vrot.lane.b32.xlu0 %v335, 127
      %v374 = vpop.permute.xlu0 %373
      %375 = vrot.lane.b32.xlu0 %v336, 127
      %v376 = vpop.permute.xlu0 %375
      %377 = vrot.lane.b32.xlu0 %v337, 127
      %v378 = vpop.permute.xlu0 %377
      %379 = vrot.lane.b32.xlu0 %v338, 127
      %v380 = vpop.permute.xlu0 %379
      %381 = vrot.lane.b32.xlu0 %v339, 127
      %v382 = vpop.permute.xlu0 %381
      %383 = vrot.lane.b32.xlu0 %v340, 127
      %v384 = vpop.permute.xlu0 %383
      %385 = vrot.lane.b32.xlu0 %v341, 127
      %v386 = vpop.permute.xlu0 %385
      %387 = vrot.lane.b32.xlu0 %v342, 127
      %v388 = vpop.permute.xlu0 %387
      %389 = vrot.lane.b32.xlu0 %v343, 127
      %v390 = vpop.permute.xlu0 %389
      %391 = vrot.lane.b32.xlu0 %v344, 127
      %v392 = vpop.permute.xlu0 %391
      %393 = vrot.lane.b32.xlu0 %v345, 127
      %v394 = vpop.permute.xlu0 %393
      %vm395 = vcmask 1039360
      %v396 = vsel %vm395, %v372, %v374
      %v397 = vsel %vm395, %v374, %v376
      %v398 = vsel %vm395, %v378, %v380
      %v399 = vsel %vm395, %v380, %v382
      %v400 = vsel %vm395, %v384, %v386
      %v401 = vsel %vm395, %v386, %v388
      %v402 = vsel %vm395, %v390, %v392
      %v403 = vsel %vm395, %v392, %v394
      %416 = vst [vmem:[#allocation4 + $0x60] sm:$0xff] %v396
      %417 = vst [vmem:[#allocation4 + $0x68] sm:$0xff] %v397
      %418 = vst.msk [vmem:[#allocation4 + $0x70] sm:$0xff] %vm348, %v376
      %419 = vst [vmem:[#allocation4 + $0x78] sm:$0xff] %v398
      %420 = vst [vmem:[#allocation4 + $0x80] sm:$0xff] %v399
      %421 = vst.msk [vmem:[#allocation4 + $0x88] sm:$0xff] %vm348, %v382
      %422 = vst [vmem:[#allocation4 + $0x90] sm:$0xff] %v400
      %423 = vst [vmem:[#allocation4 + $0x98] sm:$0xff] %v401
      %424 = vst.msk [vmem:[#allocation4 + $0xa0] sm:$0xff] %vm348, %v388
      %425 = vst [vmem:[#allocation4 + $0xa8] sm:$0xff] %v402
      %426 = vst [vmem:[#allocation4 + $0xb0] sm:$0xff] %v403
      %427 = vst.msk [vmem:[#allocation4 + $0xb8] sm:$0xff] %vm348, %v394
      %428 = vrot.lane.b32.xlu0 %v334, 126
      %v429 = vpop.permute.xlu0 %428
      %430 = vrot.lane.b32.xlu0 %v335, 126
      %v431 = vpop.permute.xlu0 %430
      %432 = vrot.lane.b32.xlu0 %v336, 126
      %v433 = vpop.permute.xlu0 %432
      %434 = vrot.lane.b32.xlu0 %v337, 126
      %v435 = vpop.permute.xlu0 %434
      %436 = vrot.lane.b32.xlu0 %v338, 126
      %v437 = vpop.permute.xlu0 %436
      %438 = vrot.lane.b32.xlu0 %v339, 126
      %v439 = vpop.permute.xlu0 %438
      %440 = vrot.lane.b32.xlu0 %v340, 126
      %v441 = vpop.permute.xlu0 %440
      %442 = vrot.lane.b32.xlu0 %v341, 126
      %v443 = vpop.permute.xlu0 %442
      %444 = vrot.lane.b32.xlu0 %v342, 126
      %v445 = vpop.permute.xlu0 %444
      %446 = vrot.lane.b32.xlu0 %v343, 126
      %v447 = vpop.permute.xlu0 %446
      %448 = vrot.lane.b32.xlu0 %v344, 126
      %v449 = vpop.permute.xlu0 %448
      %450 = vrot.lane.b32.xlu0 %v345, 126
      %v451 = vpop.permute.xlu0 %450
      %vm452 = vcmask 1031168
      %v453 = vsel %vm452, %v429, %v431
      %v454 = vsel %vm452, %v431, %v433
      %v455 = vsel %vm452, %v435, %v437
      %v456 = vsel %vm452, %v437, %v439
      %v457 = vsel %vm452, %v441, %v443
      %v458 = vsel %vm452, %v443, %v445
      %v459 = vsel %vm452, %v447, %v449
      %v460 = vsel %vm452, %v449, %v451
      %473 = vst [vmem:[#allocation4 + $0xc0] sm:$0xff] %v453
      %474 = vst [vmem:[#allocation4 + $0xc8] sm:$0xff] %v454
      %475 = vst.msk [vmem:[#allocation4 + $0xd0] sm:$0xff] %vm348, %v433
      %476 = vst [vmem:[#allocation4 + $0xd8] sm:$0xff] %v455
      %477 = vst [vmem:[#allocation4 + $0xe0] sm:$0xff] %v456
      %478 = vst.msk [vmem:[#allocation4 + $0xe8] sm:$0xff] %vm348, %v439
      %479 = vst [vmem:[#allocation4 + $0xf0] sm:$0xff] %v457
      %480 = vst [vmem:[#allocation4 + $0xf8] sm:$0xff] %v458
      %481 = vst.msk [vmem:[#allocation4 + $0x100] sm:$0xff] %vm348, %v445
      %482 = vst [vmem:[#allocation4 + $0x108] sm:$0xff] %v459
      %483 = vst [vmem:[#allocation4 + $0x110] sm:$0xff] %v460
      %484 = vst.msk [vmem:[#allocation4 + $0x118] sm:$0xff] %vm348, %v451
      %485 = vrot.lane.b32.xlu0 %v334, 110
      %v486 = vpop.permute.xlu0 %485
      %487 = vrot.lane.b32.xlu0 %v335, 110
      %v488 = vpop.permute.xlu0 %487
      %489 = vrot.lane.b32.xlu0 %v336, 110
      %v490 = vpop.permute.xlu0 %489
      %491 = vrot.lane.b32.xlu0 %v337, 110
      %v492 = vpop.permute.xlu0 %491
      %493 = vrot.lane.b32.xlu0 %v338, 110
      %v494 = vpop.permute.xlu0 %493
      %495 = vrot.lane.b32.xlu0 %v339, 110
      %v496 = vpop.permute.xlu0 %495
      %497 = vrot.lane.b32.xlu0 %v340, 110
      %v498 = vpop.permute.xlu0 %497
      %499 = vrot.lane.b32.xlu0 %v341, 110
      %v500 = vpop.permute.xlu0 %499
      %501 = vrot.lane.b32.xlu0 %v342, 110
      %v502 = vpop.permute.xlu0 %501
      %503 = vrot.lane.b32.xlu0 %v343, 110
      %v504 = vpop.permute.xlu0 %503
      %505 = vrot.lane.b32.xlu0 %v344, 110
      %v506 = vpop.permute.xlu0 %505
      %507 = vrot.lane.b32.xlu0 %v345, 110
      %v508 = vpop.permute.xlu0 %507
      %vm509 = vcmask 900096
      %v510 = vsel %vm509, %v486, %v488
      %v511 = vsel %vm509, %v488, %v490
      %v512 = vsel %vm509, %v492, %v494
      %v513 = vsel %vm509, %v494, %v496
      %v514 = vsel %vm509, %v498, %v500
      %v515 = vsel %vm509, %v500, %v502
      %v516 = vsel %vm509, %v504, %v506
      %v517 = vsel %vm509, %v506, %v508
      %530 = vst [vmem:[#allocation4 + $0x120] sm:$0xff] %v510
      %531 = vst [vmem:[#allocation4 + $0x128] sm:$0xff] %v511
      %532 = vst.msk [vmem:[#allocation4 + $0x130] sm:$0xff] %vm348, %v490
      %533 = vst [vmem:[#allocation4 + $0x138] sm:$0xff] %v512
      %534 = vst [vmem:[#allocation4 + $0x140] sm:$0xff] %v513
      %535 = vst.msk [vmem:[#allocation4 + $0x148] sm:$0xff] %vm348, %v496
      %536 = vst [vmem:[#allocation4 + $0x150] sm:$0xff] %v514
      %537 = vst [vmem:[#allocation4 + $0x158] sm:$0xff] %v515
      %538 = vst.msk [vmem:[#allocation4 + $0x160] sm:$0xff] %vm348, %v502
      %539 = vst [vmem:[#allocation4 + $0x168] sm:$0xff] %v516
      %540 = vst [vmem:[#allocation4 + $0x170] sm:$0xff] %v517
      %541 = vst.msk [vmem:[#allocation4 + $0x178] sm:$0xff] %vm348, %v508
      %542 = vrot.lane.b32.xlu0 %v334, 109
      %v543 = vpop.permute.xlu0 %542
      %544 = vrot.lane.b32.xlu0 %v335, 109
      %v545 = vpop.permute.xlu0 %544
      %546 = vrot.lane.b32.xlu0 %v336, 109
      %v547 = vpop.permute.xlu0 %546
      %548 = vrot.lane.b32.xlu0 %v337, 109
      %v549 = vpop.permute.xlu0 %548
      %550 = vrot.lane.b32.xlu0 %v338, 109
      %v551 = vpop.permute.xlu0 %550
      %552 = vrot.lane.b32.xlu0 %v339, 109
      %v553 = vpop.permute.xlu0 %552
      %554 = vrot.lane.b32.xlu0 %v340, 109
      %v555 = vpop.permute.xlu0 %554
      %556 = vrot.lane.b32.xlu0 %v341, 109
      %v557 = vpop.permute.xlu0 %556
      %558 = vrot.lane.b32.xlu0 %v342, 109
      %v559 = vpop.permute.xlu0 %558
      %560 = vrot.lane.b32.xlu0 %v343, 109
      %v561 = vpop.permute.xlu0 %560
      %562 = vrot.lane.b32.xlu0 %v344, 109
      %v563 = vpop.permute.xlu0 %562
      %564 = vrot.lane.b32.xlu0 %v345, 109
      %v565 = vpop.permute.xlu0 %564
      %vm566 = vcmask 891904
      %v567 = vsel %vm566, %v543, %v545
      %v568 = vsel %vm566, %v545, %v547
      %v569 = vsel %vm566, %v549, %v551
      %v570 = vsel %vm566, %v551, %v553
      %v571 = vsel %vm566, %v555, %v557
      %v572 = vsel %vm566, %v557, %v559
      %v573 = vsel %vm566, %v561, %v563
      %v574 = vsel %vm566, %v563, %v565
      %587 = vst [vmem:[#allocation4 + $0x180] sm:$0xff] %v567
      %588 = vst [vmem:[#allocation4 + $0x188] sm:$0xff] %v568
      %589 = vst.msk [vmem:[#allocation4 + $0x190] sm:$0xff] %vm348, %v547
      %590 = vst [vmem:[#allocation4 + $0x198] sm:$0xff] %v569
      %591 = vst [vmem:[#allocation4 + $0x1a0] sm:$0xff] %v570
      %592 = vst.msk [vmem:[#allocation4 + $0x1a8] sm:$0xff] %vm348, %v553
      %593 = vst [vmem:[#allocation4 + $0x1b0] sm:$0xff] %v571
      %594 = vst [vmem:[#allocation4 + $0x1b8] sm:$0xff] %v572
      %595 = vst.msk [vmem:[#allocation4 + $0x1c0] sm:$0xff] %vm348, %v559
      %596 = vst [vmem:[#allocation4 + $0x1c8] sm:$0xff] %v573
      %597 = vst [vmem:[#allocation4 + $0x1d0] sm:$0xff] %v574
      %598 = vst.msk [vmem:[#allocation4 + $0x1d8] sm:$0xff] %vm348, %v565
      %599 = vrot.lane.b32.xlu0 %v334, 108
      %v600 = vpop.permute.xlu0 %599
      %601 = vrot.lane.b32.xlu0 %v335, 108
      %v602 = vpop.permute.xlu0 %601
      %603 = vrot.lane.b32.xlu0 %v336, 108
      %v604 = vpop.permute.xlu0 %603
      %605 = vrot.lane.b32.xlu0 %v337, 108
      %v606 = vpop.permute.xlu0 %605
      %607 = vrot.lane.b32.xlu0 %v338, 108
      %v608 = vpop.permute.xlu0 %607
      %609 = vrot.lane.b32.xlu0 %v339, 108
      %v610 = vpop.permute.xlu0 %609
      %611 = vrot.lane.b32.xlu0 %v340, 108
      %v612 = vpop.permute.xlu0 %611
      %613 = vrot.lane.b32.xlu0 %v341, 108
      %v614 = vpop.permute.xlu0 %613
      %615 = vrot.lane.b32.xlu0 %v342, 108
      %v616 = vpop.permute.xlu0 %615
      %617 = vrot.lane.b32.xlu0 %v343, 108
      %v618 = vpop.permute.xlu0 %617
      %619 = vrot.lane.b32.xlu0 %v344, 108
      %v620 = vpop.permute.xlu0 %619
      %621 = vrot.lane.b32.xlu0 %v345, 108
      %v622 = vpop.permute.xlu0 %621
      %vm623 = vcmask 883712
      %v624 = vsel %vm623, %v600, %v602
      %v625 = vsel %vm623, %v602, %v604
      %v626 = vsel %vm623, %v606, %v608
      %v627 = vsel %vm623, %v608, %v610
      %v628 = vsel %vm623, %v612, %v614
      %v629 = vsel %vm623, %v614, %v616
      %v630 = vsel %vm623, %v618, %v620
      %v631 = vsel %vm623, %v620, %v622
      %644 = vst [vmem:[#allocation4 + $0x1e0] sm:$0xff] %v624
      %645 = vst [vmem:[#allocation4 + $0x1e8] sm:$0xff] %v625
      %646 = vst.msk [vmem:[#allocation4 + $0x1f0] sm:$0xff] %vm348, %v604
      %647 = vst [vmem:[#allocation4 + $0x1f8] sm:$0xff] %v626
      %648 = vst [vmem:[#allocation4 + $0x200] sm:$0xff] %v627
      %649 = vst.msk [vmem:[#allocation4 + $0x208] sm:$0xff] %vm348, %v610
      %650 = vst [vmem:[#allocation4 + $0x210] sm:$0xff] %v628
      %651 = vst [vmem:[#allocation4 + $0x218] sm:$0xff] %v629
      %652 = vst.msk [vmem:[#allocation4 + $0x220] sm:$0xff] %vm348, %v616
      %653 = vst [vmem:[#allocation4 + $0x228] sm:$0xff] %v630
      %654 = vst [vmem:[#allocation4 + $0x230] sm:$0xff] %v631
      %655 = vst.msk [vmem:[#allocation4 + $0x238] sm:$0xff] %vm348, %v622
      %656 = vrot.lane.b32.xlu0 %v334, 92
      %v657 = vpop.permute.xlu0 %656
      %658 = vrot.lane.b32.xlu0 %v335, 92
      %v659 = vpop.permute.xlu0 %658
      %660 = vrot.lane.b32.xlu0 %v336, 92
      %v661 = vpop.permute.xlu0 %660
      %662 = vrot.lane.b32.xlu0 %v337, 92
      %v663 = vpop.permute.xlu0 %662
      %664 = vrot.lane.b32.xlu0 %v338, 92
      %v665 = vpop.permute.xlu0 %664
      %666 = vrot.lane.b32.xlu0 %v339, 92
      %v667 = vpop.permute.xlu0 %666
      %668 = vrot.lane.b32.xlu0 %v340, 92
      %v669 = vpop.permute.xlu0 %668
      %670 = vrot.lane.b32.xlu0 %v341, 92
      %v671 = vpop.permute.xlu0 %670
      %672 = vrot.lane.b32.xlu0 %v342, 92
      %v673 = vpop.permute.xlu0 %672
      %674 = vrot.lane.b32.xlu0 %v343, 92
      %v675 = vpop.permute.xlu0 %674
      %676 = vrot.lane.b32.xlu0 %v344, 92
      %v677 = vpop.permute.xlu0 %676
      %678 = vrot.lane.b32.xlu0 %v345, 92
      %v679 = vpop.permute.xlu0 %678
      %vm680 = vcmask 752640
      %v681 = vsel %vm680, %v657, %v659
      %v682 = vsel %vm680, %v659, %v661
      %v683 = vsel %vm680, %v663, %v665
      %v684 = vsel %vm680, %v665, %v667
      %v685 = vsel %vm680, %v669, %v671
      %v686 = vsel %vm680, %v671, %v673
      %v687 = vsel %vm680, %v675, %v677
      %v688 = vsel %vm680, %v677, %v679
      %701 = vst [vmem:[#allocation4 + $0x240] sm:$0xff] %v681
      %702 = vst [vmem:[#allocation4 + $0x248] sm:$0xff] %v682
      %703 = vst.msk [vmem:[#allocation4 + $0x250] sm:$0xff] %vm348, %v661
      %704 = vst [vmem:[#allocation4 + $0x258] sm:$0xff] %v683
      %705 = vst [vmem:[#allocation4 + $0x260] sm:$0xff] %v684
      %706 = vst.msk [vmem:[#allocation4 + $0x268] sm:$0xff] %vm348, %v667
      %707 = vst [vmem:[#allocation4 + $0x270] sm:$0xff] %v685
      %708 = vst [vmem:[#allocation4 + $0x278] sm:$0xff] %v686
      %709 = vst.msk [vmem:[#allocation4 + $0x280] sm:$0xff] %vm348, %v673
      %710 = vst [vmem:[#allocation4 + $0x288] sm:$0xff] %v687
      %711 = vst [vmem:[#allocation4 + $0x290] sm:$0xff] %v688
      %712 = vst.msk [vmem:[#allocation4 + $0x298] sm:$0xff] %vm348, %v679
      %713 = vrot.lane.b32.xlu0 %v334, 91
      %v714 = vpop.permute.xlu0 %713
      %715 = vrot.lane.b32.xlu0 %v335, 91
      %v716 = vpop.permute.xlu0 %715
      %717 = vrot.lane.b32.xlu0 %v336, 91
      %v718 = vpop.permute.xlu0 %717
      %719 = vrot.lane.b32.xlu0 %v337, 91
      %v720 = vpop.permute.xlu0 %719
      %721 = vrot.lane.b32.xlu0 %v338, 91
      %v722 = vpop.permute.xlu0 %721
      %723 = vrot.lane.b32.xlu0 %v339, 91
      %v724 = vpop.permute.xlu0 %723
      %725 = vrot.lane.b32.xlu0 %v340, 91
      %v726 = vpop.permute.xlu0 %725
      %727 = vrot.lane.b32.xlu0 %v341, 91
      %v728 = vpop.permute.xlu0 %727
      %729 = vrot.lane.b32.xlu0 %v342, 91
      %v730 = vpop.permute.xlu0 %729
      %731 = vrot.lane.b32.xlu0 %v343, 91
      %v732 = vpop.permute.xlu0 %731
      %733 = vrot.lane.b32.xlu0 %v344, 91
      %v734 = vpop.permute.xlu0 %733
      %735 = vrot.lane.b32.xlu0 %v345, 91
      %v736 = vpop.permute.xlu0 %735
      %vm737 = vcmask 744448
      %v738 = vsel %vm737, %v714, %v716
      %v739 = vsel %vm737, %v716, %v718
      %v740 = vsel %vm737, %v720, %v722
      %v741 = vsel %vm737, %v722, %v724
      %v742 = vsel %vm737, %v726, %v728
      %v743 = vsel %vm737, %v728, %v730
      %v744 = vsel %vm737, %v732, %v734
      %v745 = vsel %vm737, %v734, %v736
      %758 = vst [vmem:[#allocation4 + $0x2a0] sm:$0xff] %v738
      %759 = vst [vmem:[#allocation4 + $0x2a8] sm:$0xff] %v739
      %760 = vst.msk [vmem:[#allocation4 + $0x2b0] sm:$0xff] %vm348, %v718
      %761 = vst [vmem:[#allocation4 + $0x2b8] sm:$0xff] %v740
      %762 = vst [vmem:[#allocation4 + $0x2c0] sm:$0xff] %v741
      %763 = vst.msk [vmem:[#allocation4 + $0x2c8] sm:$0xff] %vm348, %v724
      %764 = vst [vmem:[#allocation4 + $0x2d0] sm:$0xff] %v742
      %765 = vst [vmem:[#allocation4 + $0x2d8] sm:$0xff] %v743
      %766 = vst.msk [vmem:[#allocation4 + $0x2e0] sm:$0xff] %vm348, %v730
      %767 = vst [vmem:[#allocation4 + $0x2e8] sm:$0xff] %v744
      %768 = vst [vmem:[#allocation4 + $0x2f0] sm:$0xff] %v745
      %769 = vst.msk [vmem:[#allocation4 + $0x2f8] sm:$0xff] %vm348, %v736
      %770 = vrot.lane.b32.xlu0 %v334, 90
      %v771 = vpop.permute.xlu0 %770
      %772 = vrot.lane.b32.xlu0 %v335, 90
      %v773 = vpop.permute.xlu0 %772
      %774 = vrot.lane.b32.xlu0 %v336, 90
      %v775 = vpop.permute.xlu0 %774
      %776 = vrot.lane.b32.xlu0 %v337, 90
      %v777 = vpop.permute.xlu0 %776
      %778 = vrot.lane.b32.xlu0 %v338, 90
      %v779 = vpop.permute.xlu0 %778
      %780 = vrot.lane.b32.xlu0 %v339, 90
      %v781 = vpop.permute.xlu0 %780
      %782 = vrot.lane.b32.xlu0 %v340, 90
      %v783 = vpop.permute.xlu0 %782
      %784 = vrot.lane.b32.xlu0 %v341, 90
      %v785 = vpop.permute.xlu0 %784
      %786 = vrot.lane.b32.xlu0 %v342, 90
      %v787 = vpop.permute.xlu0 %786
      %788 = vrot.lane.b32.xlu0 %v343, 90
      %v789 = vpop.permute.xlu0 %788
      %790 = vrot.lane.b32.xlu0 %v344, 90
      %v791 = vpop.permute.xlu0 %790
      %792 = vrot.lane.b32.xlu0 %v345, 90
      %v793 = vpop.permute.xlu0 %792
      %vm794 = vcmask 736256
      %v795 = vsel %vm794, %v771, %v773
      %v796 = vsel %vm794, %v773, %v775
      %v797 = vsel %vm794, %v777, %v779
      %v798 = vsel %vm794, %v779, %v781
      %v799 = vsel %vm794, %v783, %v785
      %v800 = vsel %vm794, %v785, %v787
      %v801 = vsel %vm794, %v789, %v791
      %v802 = vsel %vm794, %v791, %v793
      %815 = vst [vmem:[#allocation4 + $0x300] sm:$0xff] %v795
      %816 = vst [vmem:[#allocation4 + $0x308] sm:$0xff] %v796
      %817 = vst.msk [vmem:[#allocation4 + $0x310] sm:$0xff] %vm348, %v775
      %818 = vst [vmem:[#allocation4 + $0x318] sm:$0xff] %v797
      %819 = vst [vmem:[#allocation4 + $0x320] sm:$0xff] %v798
      %820 = vst.msk [vmem:[#allocation4 + $0x328] sm:$0xff] %vm348, %v781
      %821 = vst [vmem:[#allocation4 + $0x330] sm:$0xff] %v799
      %822 = vst [vmem:[#allocation4 + $0x338] sm:$0xff] %v800
      %823 = vst.msk [vmem:[#allocation4 + $0x340] sm:$0xff] %vm348, %v787
      %824 = vst [vmem:[#allocation4 + $0x348] sm:$0xff] %v801
      %825 = vst [vmem:[#allocation4 + $0x350] sm:$0xff] %v802
      %826 = vst.msk [vmem:[#allocation4 + $0x358] sm:$0xff] %vm348, %v793
      %v827 = vld [vmem:[#allocation4] sm:$0xff]
      %v828 = vld [vmem:[#allocation4 + $0x8] sm:$0xff]
      %v829 = vld [vmem:[#allocation4 + $0x10] sm:$0xff]
      %v830 = vld [vmem:[#allocation4 + $0x18] sm:$0xff]
      %v831 = vld [vmem:[#allocation4 + $0x20] sm:$0xff]
      %v832 = vld [vmem:[#allocation4 + $0x28] sm:$0xff]
      %v833 = vld [vmem:[#allocation4 + $0x30] sm:$0xff]
      %v834 = vld [vmem:[#allocation4 + $0x38] sm:$0xff]
      %v835 = vld [vmem:[#allocation4 + $0x40] sm:$0xff]
      %v836 = vld [vmem:[#allocation4 + $0x48] sm:$0xff]
      %v837 = vld [vmem:[#allocation4 + $0x50] sm:$0xff]
      %v838 = vld [vmem:[#allocation4 + $0x58] sm:$0xff]
      %v839 = vld [vmem:[#allocation4 + $0x60] sm:$0xff]
      %v840 = vld [vmem:[#allocation4 + $0x68] sm:$0xff]
      %v841 = vld [vmem:[#allocation4 + $0x70] sm:$0xff]
      %v842 = vld [vmem:[#allocation4 + $0x78] sm:$0xff]
      %v843 = vld [vmem:[#allocation4 + $0x80] sm:$0xff]
      %v844 = vld [vmem:[#allocation4 + $0x88] sm:$0xff]
      %v845 = vld [vmem:[#allocation4 + $0x90] sm:$0xff]
      %v846 = vld [vmem:[#allocation4 + $0x98] sm:$0xff]
      %v847 = vld [vmem:[#allocation4 + $0xa0] sm:$0xff]
      %v848 = vld [vmem:[#allocation4 + $0xa8] sm:$0xff]
      %v849 = vld [vmem:[#allocation4 + $0xb0] sm:$0xff]
      %v850 = vld [vmem:[#allocation4 + $0xb8] sm:$0xff]
      %v851 = vld [vmem:[#allocation4 + $0xc0] sm:$0xff]
      %v852 = vld [vmem:[#allocation4 + $0xc8] sm:$0xff]
      %v853 = vld [vmem:[#allocation4 + $0xd0] sm:$0xff]
      %v854 = vld [vmem:[#allocation4 + $0xd8] sm:$0xff]
      %v855 = vld [vmem:[#allocation4 + $0xe0] sm:$0xff]
      %v856 = vld [vmem:[#allocation4 + $0xe8] sm:$0xff]
      %v857 = vld [vmem:[#allocation4 + $0xf0] sm:$0xff]
      %v858 = vld [vmem:[#allocation4 + $0xf8] sm:$0xff]
      %v859 = vld [vmem:[#allocation4 + $0x100] sm:$0xff]
      %v860 = vld [vmem:[#allocation4 + $0x108] sm:$0xff]
      %v861 = vld [vmem:[#allocation4 + $0x110] sm:$0xff]
      %v862 = vld [vmem:[#allocation4 + $0x118] sm:$0xff]
      %v863 = vld [vmem:[#allocation4 + $0x120] sm:$0xff]
      %v864 = vld [vmem:[#allocation4 + $0x128] sm:$0xff]
      %v865 = vld [vmem:[#allocation4 + $0x130] sm:$0xff]
      %v866 = vld [vmem:[#allocation4 + $0x138] sm:$0xff]
      %v867 = vld [vmem:[#allocation4 + $0x140] sm:$0xff]
      %v868 = vld [vmem:[#allocation4 + $0x148] sm:$0xff]
      %v869 = vld [vmem:[#allocation4 + $0x150] sm:$0xff]
      %v870 = vld [vmem:[#allocation4 + $0x158] sm:$0xff]
      %v871 = vld [vmem:[#allocation4 + $0x160] sm:$0xff]
      %v872 = vld [vmem:[#allocation4 + $0x168] sm:$0xff]
      %v873 = vld [vmem:[#allocation4 + $0x170] sm:$0xff]
      %v874 = vld [vmem:[#allocation4 + $0x178] sm:$0xff]
      %v875 = vld [vmem:[#allocation4 + $0x180] sm:$0xff]
      %v876 = vld [vmem:[#allocation4 + $0x188] sm:$0xff]
      %v877 = vld [vmem:[#allocation4 + $0x190] sm:$0xff]
      %v878 = vld [vmem:[#allocation4 + $0x198] sm:$0xff]
      %v879 = vld [vmem:[#allocation4 + $0x1a0] sm:$0xff]
      %v880 = vld [vmem:[#allocation4 + $0x1a8] sm:$0xff]
      %v881 = vld [vmem:[#allocation4 + $0x1b0] sm:$0xff]
      %v882 = vld [vmem:[#allocation4 + $0x1b8] sm:$0xff]
      %v883 = vld [vmem:[#allocation4 + $0x1c0] sm:$0xff]
      %v884 = vld [vmem:[#allocation4 + $0x1c8] sm:$0xff]
      %v885 = vld [vmem:[#allocation4 + $0x1d0] sm:$0xff]
      %v886 = vld [vmem:[#allocation4 + $0x1d8] sm:$0xff]
      %v887 = vld [vmem:[#allocation4 + $0x1e0] sm:$0xff]
      %v888 = vld [vmem:[#allocation4 + $0x1e8] sm:$0xff]
      %v889 = vld [vmem:[#allocation4 + $0x1f0] sm:$0xff]
      %v890 = vld [vmem:[#allocation4 + $0x1f8] sm:$0xff]
      %v891 = vld [vmem:[#allocation4 + $0x200] sm:$0xff]
      %v892 = vld [vmem:[#allocation4 + $0x208] sm:$0xff]
      %v893 = vld [vmem:[#allocation4 + $0x210] sm:$0xff]
      %v894 = vld [vmem:[#allocation4 + $0x218] sm:$0xff]
      %v895 = vld [vmem:[#allocation4 + $0x220] sm:$0xff]
      %v896 = vld [vmem:[#allocation4 + $0x228] sm:$0xff]
      %v897 = vld [vmem:[#allocation4 + $0x230] sm:$0xff]
      %v898 = vld [vmem:[#allocation4 + $0x238] sm:$0xff]
      %v899 = vld [vmem:[#allocation4 + $0x240] sm:$0xff]
      %v900 = vld [vmem:[#allocation4 + $0x248] sm:$0xff]
      %v901 = vld [vmem:[#allocation4 + $0x250] sm:$0xff]
      %v902 = vld [vmem:[#allocation4 + $0x258] sm:$0xff]
      %v903 = vld [vmem:[#allocation4 + $0x260] sm:$0xff]
      %v904 = vld [vmem:[#allocation4 + $0x268] sm:$0xff]
      %v905 = vld [vmem:[#allocation4 + $0x270] sm:$0xff]
      %v906 = vld [vmem:[#allocation4 + $0x278] sm:$0xff]
      %v907 = vld [vmem:[#allocation4 + $0x280] sm:$0xff]
      %v908 = vld [vmem:[#allocation4 + $0x288] sm:$0xff]
      %v909 = vld [vmem:[#allocation4 + $0x290] sm:$0xff]
      %v910 = vld [vmem:[#allocation4 + $0x298] sm:$0xff]
      %v911 = vld [vmem:[#allocation4 + $0x2a0] sm:$0xff]
      %v912 = vld [vmem:[#allocation4 + $0x2a8] sm:$0xff]
      %v913 = vld [vmem:[#allocation4 + $0x2b0] sm:$0xff]
      %v914 = vld [vmem:[#allocation4 + $0x2b8] sm:$0xff]
      %v915 = vld [vmem:[#allocation4 + $0x2c0] sm:$0xff]
      %v916 = vld [vmem:[#allocation4 + $0x2c8] sm:$0xff]
      %v917 = vld [vmem:[#allocation4 + $0x2d0] sm:$0xff]
      %v918 = vld [vmem:[#allocation4 + $0x2d8] sm:$0xff]
      %v919 = vld [vmem:[#allocation4 + $0x2e0] sm:$0xff]
      %v920 = vld [vmem:[#allocation4 + $0x2e8] sm:$0xff]
      %v921 = vld [vmem:[#allocation4 + $0x2f0] sm:$0xff]
      %v922 = vld [vmem:[#allocation4 + $0x2f8] sm:$0xff]
      %v923 = vld [vmem:[#allocation4 + $0x300] sm:$0xff]
      %v924 = vld [vmem:[#allocation4 + $0x308] sm:$0xff]
      %v925 = vld [vmem:[#allocation4 + $0x310] sm:$0xff]
      %v926 = vld [vmem:[#allocation4 + $0x318] sm:$0xff]
      %v927 = vld [vmem:[#allocation4 + $0x320] sm:$0xff]
      %v928 = vld [vmem:[#allocation4 + $0x328] sm:$0xff]
      %v929 = vld [vmem:[#allocation4 + $0x330] sm:$0xff]
      %v930 = vld [vmem:[#allocation4 + $0x338] sm:$0xff]
      %v931 = vld [vmem:[#allocation4 + $0x340] sm:$0xff]
      %v932 = vld [vmem:[#allocation4 + $0x348] sm:$0xff]
      %v933 = vld [vmem:[#allocation4 + $0x350] sm:$0xff]
      %v934 = vld [vmem:[#allocation4 + $0x358] sm:$0xff]
      %v935 = vld [vmem:[%s1] sm:$0xff]
      %v936 = vld [vmem:[%s1 + $0x8] sm:$0xff]
      %v937 = vld [vmem:[%s1 + $0x10] sm:$0xff]
      %v938 = vld [vmem:[%s1 + $0x18] sm:$0xff]
      %v939 = vld [vmem:[%s1 + $0x20] sm:$0xff]
      %v940 = vld [vmem:[%s1 + $0x28] sm:$0xff]
      %v941 = vld [vmem:[%s1 + $0x30] sm:$0xff]
      %v942 = vld [vmem:[%s1 + $0x38] sm:$0xff]
      %v943 = vld [vmem:[%s1 + $0x40] sm:$0xff]
      %v944 = vld [vmem:[%s1 + $0x48] sm:$0xff]
      %v945 = vld [vmem:[%s1 + $0x50] sm:$0xff]
      %v946 = vld [vmem:[%s1 + $0x58] sm:$0xff]
      %v947 = vld [vmem:[%s2] sm:$0xff]
      %v948 = vld [vmem:[%s2 + $0x8] sm:$0xff]
      %v949 = vld [vmem:[%s2 + $0x10] sm:$0xff]
      %v950 = vld [vmem:[%s2 + $0x18] sm:$0xff]
      %952 = vset.pattern.permute.xlu0 0
      %953 = vperm.xlu0 %952, %v947
      %v954 = vpop.permute.xlu0 %953
      %957 = vset.pattern.permute.xlu0 0
      %958 = vperm.xlu0 %957, %v948
      %v959 = vpop.permute.xlu0 %958
      %962 = vset.pattern.permute.xlu0 0
      %963 = vperm.xlu0 %962, %v949
      %v964 = vpop.permute.xlu0 %963
      %967 = vset.pattern.permute.xlu0 0
      %968 = vperm.xlu0 %967, %v950
      %v969 = vpop.permute.xlu0 %968
      %vm971 = vcmask 261120
      %v973 = vsel %vm971, %v937, 0
      %v976 = vsel %vm971, %v940, 0
      %v979 = vsel %vm971, %v943, 0
      %v982 = vsel %vm971, %v946, 0
      %984 = vmatprep.subr.mxu0 %v828
      %985 = vmatpush1.msra.mxu0 %v827
      %986 = vmatprep.subr.mxu0 %v831
      %987 = vmatpush1.msra.mxu0 %v830
      %988 = vmatprep.subr.mxu0 %v834
      %989 = vmatpush1.msra.mxu0 %v833
      %990 = vmatprep.subr.mxu0 %v837
      %991 = vmatpush1.msra.mxu0 %v836
      %992 = vmatprep.subr.mxu0 %v840
      %993 = vmatpush1.msra.mxu0 %v839
      %994 = vmatprep.subr.mxu0 %v843
      %995 = vmatpush1.msra.mxu0 %v842
      %996 = vmatprep.subr.mxu0 %v846
      %997 = vmatpush1.msra.mxu0 %v845
      %998 = vmatprep.subr.mxu0 %v849
      %999 = vmatpush1.msra.mxu0 %v848
      %1000 = vmatprep.subr.mxu0 %v852
      %1001 = vmatpush1.msra.mxu0 %v851
      %1002 = vmatprep.subr.mxu0 %v855
      %1003 = vmatpush1.msra.mxu0 %v854
      %1004 = vmatprep.subr.mxu0 %v858
      %1005 = vmatpush1.msra.mxu0 %v857
      %1006 = vmatprep.subr.mxu0 %v861
      %1007 = vmatpush1.msra.mxu0 %v860
      %1008 = vmatprep.subr.mxu0 %v864
      %1009 = vmatpush1.msra.mxu0 %v863
      %1010 = vmatprep.subr.mxu0 %v867
      %1011 = vmatpush1.msra.mxu0 %v866
      %1012 = vmatprep.subr.mxu0 %v870
      %1013 = vmatpush1.msra.mxu0 %v869
      %1014 = vmatprep.subr.mxu0 %v873
      %1015 = vmatpush1.msra.mxu0 %v872
      %1016 = vmatprep.subr.mxu0 %v876
      %1017 = vmatpush1.msra.mxu0 %v875
      %1018 = vmatprep.subr.mxu0 %v879
      %1019 = vmatpush1.msra.mxu0 %v878
      %1020 = vmatprep.subr.mxu0 %v882
      %1021 = vmatpush1.msra.mxu0 %v881
      %1022 = vmatprep.subr.mxu0 %v885
      %1023 = vmatpush1.msra.mxu0 %v884
      %1024 = vmatprep.subr.mxu0 %v888
      %1025 = vmatpush1.msra.mxu0 %v887
      %1026 = vmatprep.subr.mxu0 %v891
      %1027 = vmatpush1.msra.mxu0 %v890
      %1028 = vmatprep.subr.mxu0 %v894
      %1029 = vmatpush1.msra.mxu0 %v893
      %1030 = vmatprep.subr.mxu0 %v897
      %1031 = vmatpush1.msra.mxu0 %v896
      %1032 = vmatprep.subr.mxu0 %v900
      %1033 = vmatpush1.msra.mxu0 %v899
      %1034 = vmatprep.subr.mxu0 %v903
      %1035 = vmatpush1.msra.mxu0 %v902
      %1036 = vmatprep.subr.mxu0 %v906
      %1037 = vmatpush1.msra.mxu0 %v905
      %1038 = vmatprep.subr.mxu0 %v909
      %1039 = vmatpush1.msra.mxu0 %v908
      %1040 = vmatprep.subr.mxu0 %v912
      %1041 = vmatpush1.msra.mxu0 %v911
      %1042 = vmatprep.subr.mxu0 %v915
      %1043 = vmatpush1.msra.mxu0 %v914
      %1044 = vmatprep.subr.mxu0 %v918
      %1045 = vmatpush1.msra.mxu0 %v917
      %1046 = vmatprep.subr.mxu0 %v921
      %1047 = vmatpush1.msra.mxu0 %v920
      %1048 = vmatprep.mubr.f32.mxu0 %v936
      %1049 = vmatmul.mubr.f32.gmra.mrb[0].mxu0 %v935
      %v1050 = vpop.f32.mrb[0].mxu0
      %v1051 = vadd.f32 %v954, %v1050
      %v1052 = vpop.f32.mrb[0].mxu0
      %v1053 = vadd.f32 %v954, %v1052
      %1054 = vmatprep.mubr.f32.mxu0 %v939
      %1055 = vmatmul.mubr.f32.gmra.mrb[0].mxu0 %v938
      %v1056 = vpop.f32.mrb[0].mxu0
      %v1057 = vadd.f32 %v959, %v1056
      %v1058 = vpop.f32.mrb[0].mxu0
      %v1059 = vadd.f32 %v959, %v1058
      %1060 = vmatprep.mubr.f32.mxu0 %v942
      %1061 = vmatmul.mubr.f32.gmra.mrb[0].mxu0 %v941
      %v1062 = vpop.f32.mrb[0].mxu0
      %v1063 = vadd.f32 %v964, %v1062
      %v1064 = vpop.f32.mrb[0].mxu0
      %v1065 = vadd.f32 %v964, %v1064
      %1066 = vmatprep.mubr.f32.mxu0 %v945
      %1067 = vmatmul.mubr.f32.gmra.mrb[0].mxu0 %v944
      %v1068 = vpop.f32.mrb[0].mxu0
      %v1069 = vadd.f32 %v969, %v1068
      %v1070 = vpop.f32.mrb[0].mxu0
      %v1071 = vadd.f32 %v969, %v1070
      %1072 = vdwg.mxu0
      %1073 = vmatprep.subr.mxu0 %v924
      %1074 = vmatpush1.msra.mxu0 %v923
      %1075 = vmatprep.subr.mxu0 %v927
      %1076 = vmatpush1.msra.mxu0 %v926
      %1077 = vmatprep.subr.mxu0 %v930
      %1078 = vmatpush1.msra.mxu0 %v929
      %1079 = vmatprep.subr.mxu0 %v933
      %1080 = vmatpush1.msra.mxu0 %v932
      %1081 = vmatprep.subr.mxu0 0.0
      %1082 = vmatpush1.msra.mxu0 0.0
      %1083 = vmatprep.subr.mxu0 0.0
      %1084 = vmatpush1.msra.mxu0 0.0
      %1085 = vmatprep.subr.mxu0 0.0
      %1086 = vmatpush1.msra.mxu0 0.0
      %1087 = vmatprep.subr.mxu0 0.0
      %1088 = vmatpush1.msra.mxu0 0.0
      %1089 = vmatprep.subr.mxu0 0.0
      %1090 = vmatpush1.msra.mxu0 0.0
      %1091 = vmatprep.subr.mxu0 0.0
      %1092 = vmatpush1.msra.mxu0 0.0
      %1093 = vmatprep.subr.mxu0 0.0
      %1094 = vmatpush1.msra.mxu0 0.0
      %1095 = vmatprep.subr.mxu0 0.0
      %1096 = vmatpush1.msra.mxu0 0.0
      %1097 = vmatprep.subr.mxu0 0.0
      %1098 = vmatpush1.msra.mxu0 0.0
      %1099 = vmatprep.subr.mxu0 0.0
      %1100 = vmatpush1.msra.mxu0 0.0
      %1101 = vmatprep.subr.mxu0 0.0
      %1102 = vmatpush1.msra.mxu0 0.0
      %1103 = vmatprep.subr.mxu0 0.0
      %1104 = vmatpush1.msra.mxu0 0.0
      %1105 = vmatprep.subr.mxu0 0.0
      %1106 = vmatpush1.msra.mxu0 0.0
      %1107 = vmatprep.subr.mxu0 0.0
      %1108 = vmatpush1.msra.mxu0 0.0
      %1109 = vmatprep.subr.mxu0 0.0
      %1110 = vmatpush1.msra.mxu0 0.0
      %1111 = vmatprep.subr.mxu0 0.0
      %1112 = vmatpush1.msra.mxu0 0.0
      %1113 = vmatprep.subr.mxu0 0.0
      %1114 = vmatpush1.msra.mxu0 0.0
      %1115 = vmatprep.subr.mxu0 0.0
      %1116 = vmatpush1.msra.mxu0 0.0
      %1117 = vmatprep.subr.mxu0 0.0
      %1118 = vmatpush1.msra.mxu0 0.0
      %1119 = vmatprep.subr.mxu0 0.0
      %1120 = vmatpush1.msra.mxu0 0.0
      %1121 = vmatprep.subr.mxu0 0.0
      %1122 = vmatpush1.msra.mxu0 0.0
      %1123 = vmatprep.subr.mxu0 0.0
      %1124 = vmatpush1.msra.mxu0 0.0
      %1125 = vmatprep.subr.mxu0 0.0
      %1126 = vmatpush1.msra.mxu0 0.0
      %1127 = vmatprep.subr.mxu0 0.0
      %1128 = vmatpush1.msra.mxu0 0.0
      %1129 = vmatprep.subr.mxu0 0.0
      %1130 = vmatpush1.msra.mxu0 0.0
      %1131 = vmatprep.subr.mxu0 0.0
      %1132 = vmatpush1.msra.mxu0 0.0
      %1133 = vmatprep.subr.mxu0 0.0
      %1134 = vmatpush1.msra.mxu0 0.0
      %1135 = vmatprep.subr.mxu0 0.0
      %1136 = vmatpush1.msra.mxu0 0.0
      %1137 = vmatprep.mubr.f32.mxu0 0.0
      %1138 = vmatmul.mubr.f32.gmra.mrb[0].mxu0 %v973
      %v1139 = vpop.f32.mrb[0].mxu0
      %v1140 = vadd.f32 %v1051, %v1139
      %v1141 = vpop.f32.mrb[0].mxu0
      %v1142 = vadd.f32 %v1053, %v1141
      %1143 = vmatprep.mubr.f32.mxu0 0.0
      %1144 = vmatmul.mubr.f32.gmra.mrb[0].mxu0 %v976
      %v1145 = vpop.f32.mrb[0].mxu0
      %v1146 = vadd.f32 %v1057, %v1145
      %v1147 = vpop.f32.mrb[0].mxu0
      %v1148 = vadd.f32 %v1059, %v1147
      %1149 = vmatprep.mubr.f32.mxu0 0.0
      %1150 = vmatmul.mubr.f32.gmra.mrb[0].mxu0 %v979
      %v1151 = vpop.f32.mrb[0].mxu0
      %v1152 = vadd.f32 %v1063, %v1151
      %v1153 = vpop.f32.mrb[0].mxu0
      %v1154 = vadd.f32 %v1065, %v1153
      %1155 = vmatprep.mubr.f32.mxu0 0.0
      %1156 = vmatmul.mubr.f32.gmra.mrb[0].mxu0 %v982
      %v1157 = vpop.f32.mrb[0].mxu0
      %v1158 = vadd.f32 %v1069, %v1157
      %v1159 = vpop.f32.mrb[0].mxu0
      %v1160 = vadd.f32 %v1071, %v1159
      %1161 = vdwg.mxu0
      %1162 = vmatprep.subr.mxu0 0.0
      %1163 = vmatpush1.msra.mxu0 %v829
      %1164 = vmatprep.subr.mxu0 0.0
      %1165 = vmatpush1.msra.mxu0 %v832
      %1166 = vmatprep.subr.mxu0 0.0
      %1167 = vmatpush1.msra.mxu0 %v835
      %1168 = vmatprep.subr.mxu0 0.0
      %1169 = vmatpush1.msra.mxu0 %v838
      %1170 = vmatprep.subr.mxu0 0.0
      %1171 = vmatpush1.msra.mxu0 %v841
      %1172 = vmatprep.subr.mxu0 0.0
      %1173 = vmatpush1.msra.mxu0 %v844
      %1174 = vmatprep.subr.mxu0 0.0
      %1175 = vmatpush1.msra.mxu0 %v847
      %1176 = vmatprep.subr.mxu0 0.0
      %1177 = vmatpush1.msra.mxu0 %v850
      %1178 = vmatprep.subr.mxu0 0.0
      %1179 = vmatpush1.msra.mxu0 %v853
      %1180 = vmatprep.subr.mxu0 0.0
      %1181 = vmatpush1.msra.mxu0 %v856
      %1182 = vmatprep.subr.mxu0 0.0
      %1183 = vmatpush1.msra.mxu0 %v859
      %1184 = vmatprep.subr.mxu0 0.0
      %1185 = vmatpush1.msra.mxu0 %v862
      %1186 = vmatprep.subr.mxu0 0.0
      %1187 = vmatpush1.msra.mxu0 %v865
      %1188 = vmatprep.subr.mxu0 0.0
      %1189 = vmatpush1.msra.mxu0 %v868
      %1190 = vmatprep.subr.mxu0 0.0
      %1191 = vmatpush1.msra.mxu0 %v871
      %1192 = vmatprep.subr.mxu0 0.0
      %1193 = vmatpush1.msra.mxu0 %v874
      %1194 = vmatprep.subr.mxu0 0.0
      %1195 = vmatpush1.msra.mxu0 %v877
      %1196 = vmatprep.subr.mxu0 0.0
      %1197 = vmatpush1.msra.mxu0 %v880
      %1198 = vmatprep.subr.mxu0 0.0
      %1199 = vmatpush1.msra.mxu0 %v883
      %1200 = vmatprep.subr.mxu0 0.0
      %1201 = vmatpush1.msra.mxu0 %v886
      %1202 = vmatprep.subr.mxu0 0.0
      %1203 = vmatpush1.msra.mxu0 %v889
      %1204 = vmatprep.subr.mxu0 0.0
      %1205 = vmatpush1.msra.mxu0 %v892
      %1206 = vmatprep.subr.mxu0 0.0
      %1207 = vmatpush1.msra.mxu0 %v895
      %1208 = vmatprep.subr.mxu0 0.0
      %1209 = vmatpush1.msra.mxu0 %v898
      %1210 = vmatprep.subr.mxu0 0.0
      %1211 = vmatpush1.msra.mxu0 %v901
      %1212 = vmatprep.subr.mxu0 0.0
      %1213 = vmatpush1.msra.mxu0 %v904
      %1214 = vmatprep.subr.mxu0 0.0
      %1215 = vmatpush1.msra.mxu0 %v907
      %1216 = vmatprep.subr.mxu0 0.0
      %1217 = vmatpush1.msra.mxu0 %v910
      %1218 = vmatprep.subr.mxu0 0.0
      %1219 = vmatpush1.msra.mxu0 %v913
      %1220 = vmatprep.subr.mxu0 0.0
      %1221 = vmatpush1.msra.mxu0 %v916
      %1222 = vmatprep.subr.mxu0 0.0
      %1223 = vmatpush1.msra.mxu0 %v919
      %1224 = vmatprep.subr.mxu0 0.0
      %1225 = vmatpush1.msra.mxu0 %v922
      %1226 = vmatprep.mubr.f32.mxu0 %v936
      %1227 = vmatmul.mubr.f32.gmra.mrb[0].mxu0 %v935
      %v1228 = vpop.f32.mrb[0].mxu0
      %v1229 = vadd.f32 %v954, %v1228
      %v1230 = vpop.f32.mrb[0].mxu0
      %1231 = vmatprep.mubr.f32.mxu0 %v939
      %1232 = vmatmul.mubr.f32.gmra.mrb[0].mxu0 %v938
      %v1233 = vpop.f32.mrb[0].mxu0
      %v1234 = vadd.f32 %v959, %v1233
      %v1235 = vpop.f32.mrb[0].mxu0
      %1236 = vmatprep.mubr.f32.mxu0 %v942
      %1237 = vmatmul.mubr.f32.gmra.mrb[0].mxu0 %v941
      %v1238 = vpop.f32.mrb[0].mxu0
      %v1239 = vadd.f32 %v964, %v1238
      %v1240 = vpop.f32.mrb[0].mxu0
      %1241 = vmatprep.mubr.f32.mxu0 %v945
      %1242 = vmatmul.mubr.f32.gmra.mrb[0].mxu0 %v944
      %v1243 = vpop.f32.mrb[0].mxu0
      %v1244 = vadd.f32 %v969, %v1243
      %v1245 = vpop.f32.mrb[0].mxu0
      %1246 = vdwg.mxu0
      %1247 = vmatprep.subr.mxu0 0.0
      %1248 = vmatpush1.msra.mxu0 %v925
      %1249 = vmatprep.subr.mxu0 0.0
      %1250 = vmatpush1.msra.mxu0 %v928
      %1251 = vmatprep.subr.mxu0 0.0
      %1252 = vmatpush1.msra.mxu0 %v931
      %1253 = vmatprep.subr.mxu0 0.0
      %1254 = vmatpush1.msra.mxu0 %v934
      %1255 = vmatprep.subr.mxu0 0.0
      %1256 = vmatpush1.msra.mxu0 0.0
      %1257 = vmatprep.subr.mxu0 0.0
      %1258 = vmatpush1.msra.mxu0 0.0
      %1259 = vmatprep.subr.mxu0 0.0
      %1260 = vmatpush1.msra.mxu0 0.0
      %1261 = vmatprep.subr.mxu0 0.0
      %1262 = vmatpush1.msra.mxu0 0.0
      %1263 = vmatprep.subr.mxu0 0.0
      %1264 = vmatpush1.msra.mxu0 0.0
      %1265 = vmatprep.subr.mxu0 0.0
      %1266 = vmatpush1.msra.mxu0 0.0
      %1267 = vmatprep.subr.mxu0 0.0
      %1268 = vmatpush1.msra.mxu0 0.0
      %1269 = vmatprep.subr.mxu0 0.0
      %1270 = vmatpush1.msra.mxu0 0.0
      %1271 = vmatprep.subr.mxu0 0.0
      %1272 = vmatpush1.msra.mxu0 0.0
      %1273 = vmatprep.subr.mxu0 0.0
      %1274 = vmatpush1.msra.mxu0 0.0
      %1275 = vmatprep.subr.mxu0 0.0
      %1276 = vmatpush1.msra.mxu0 0.0
      %1277 = vmatprep.subr.mxu0 0.0
      %1278 = vmatpush1.msra.mxu0 0.0
      %1279 = vmatprep.subr.mxu0 0.0
      %1280 = vmatpush1.msra.mxu0 0.0
      %1281 = vmatprep.subr.mxu0 0.0
      %1282 = vmatpush1.msra.mxu0 0.0
      %1283 = vmatprep.subr.mxu0 0.0
      %1284 = vmatpush1.msra.mxu0 0.0
      %1285 = vmatprep.subr.mxu0 0.0
      %1286 = vmatpush1.msra.mxu0 0.0
      %1287 = vmatprep.subr.mxu0 0.0
      %1288 = vmatpush1.msra.mxu0 0.0
      %1289 = vmatprep.subr.mxu0 0.0
      %1290 = vmatpush1.msra.mxu0 0.0
      %1291 = vmatprep.subr.mxu0 0.0
      %1292 = vmatpush1.msra.mxu0 0.0
      %1293 = vmatprep.subr.mxu0 0.0
      %1294 = vmatpush1.msra.mxu0 0.0
      %1295 = vmatprep.subr.mxu0 0.0
      %1296 = vmatpush1.msra.mxu0 0.0
      %1297 = vmatprep.subr.mxu0 0.0
      %1298 = vmatpush1.msra.mxu0 0.0
      %1299 = vmatprep.subr.mxu0 0.0
      %1300 = vmatpush1.msra.mxu0 0.0
      %1301 = vmatprep.subr.mxu0 0.0
      %1302 = vmatpush1.msra.mxu0 0.0
      %1303 = vmatprep.subr.mxu0 0.0
      %1304 = vmatpush1.msra.mxu0 0.0
      %1305 = vmatprep.subr.mxu0 0.0
      %1306 = vmatpush1.msra.mxu0 0.0
      %1307 = vmatprep.subr.mxu0 0.0
      %1308 = vmatpush1.msra.mxu0 0.0
      %1309 = vmatprep.subr.mxu0 0.0
      %1310 = vmatpush1.msra.mxu0 0.0
      %1311 = vmatprep.mubr.f32.mxu0 0.0
      %1312 = vmatmul.mubr.f32.gmra.mrb[0].mxu0 %v973
      %v1313 = vpop.f32.mrb[0].mxu0
      %v1314 = vadd.f32 %v1229, %v1313
      %v1315 = vpop.f32.mrb[0].mxu0
      %1316 = vmatprep.mubr.f32.mxu0 0.0
      %1317 = vmatmul.mubr.f32.gmra.mrb[0].mxu0 %v976
      %v1318 = vpop.f32.mrb[0].mxu0
      %v1319 = vadd.f32 %v1234, %v1318
      %v1320 = vpop.f32.mrb[0].mxu0
      %1321 = vmatprep.mubr.f32.mxu0 0.0
      %1322 = vmatmul.mubr.f32.gmra.mrb[0].mxu0 %v979
      %v1323 = vpop.f32.mrb[0].mxu0
      %v1324 = vadd.f32 %v1239, %v1323
      %v1325 = vpop.f32.mrb[0].mxu0
      %1326 = vmatprep.mubr.f32.mxu0 0.0
      %1327 = vmatmul.mubr.f32.gmra.mrb[0].mxu0 %v982
      %v1328 = vpop.f32.mrb[0].mxu0
      %v1329 = vadd.f32 %v1244, %v1328
      %v1330 = vpop.f32.mrb[0].mxu0
      %1331 = vdwg.mxu0
      %v1332 = vmax.f32 %v1140, 0.0
      %v1333 = vmax.f32 %v1142, 0.0
      %v1334 = vmax.f32 %v1314, 0.0
      %v1335 = vmax.f32 %v1146, 0.0
      %v1336 = vmax.f32 %v1148, 0.0
      %v1337 = vmax.f32 %v1319, 0.0
      %v1338 = vmax.f32 %v1152, 0.0
      %v1339 = vmax.f32 %v1154, 0.0
      %v1340 = vmax.f32 %v1324, 0.0
      %v1341 = vmax.f32 %v1158, 0.0
      %v1342 = vmax.f32 %v1160, 0.0
      %v1343 = vmax.f32 %v1329, 0.0
      %v1345 = vlaneseq
      %v1346 = vshrl.u32 %v1345, 7
      %v1347 = vsub.s32 0, %v1346
      %v1348 = vrot.slane %v333, %v1347
      %v1349 = vlaneseq
      %v1350 = vshrl.u32 %v1349, 7
      %v1351 = vsub.s32 1, %v1350
      %v1352 = vrot.slane %v333, %v1351
      %v1353 = vlaneseq
      %v1354 = vshrl.u32 %v1353, 7
      %v1355 = vsub.s32 2, %v1354
      %v1356 = vrot.slane %v333, %v1355
      %v1360 = vmul.f32 %v1332, %v1348
      %v1361 = vmul.f32 %v1333, %v1352
      %v1362 = vmul.f32 %v1334, %v1356
      %v1363 = vmul.f32 %v1335, %v1348
      %v1364 = vmul.f32 %v1336, %v1352
      %v1365 = vmul.f32 %v1337, %v1356
      %v1366 = vmul.f32 %v1338, %v1348
      %v1367 = vmul.f32 %v1339, %v1352
      %v1368 = vmul.f32 %v1340, %v1356
      %v1369 = vmul.f32 %v1341, %v1348
      %v1370 = vmul.f32 %v1342, %v1352
      %v1371 = vmul.f32 %v1343, %v1356
      %1384 = vrot.lane.b32.xlu0 %v1360, 19
      %v1385 = vpop.permute.xlu0 %1384
      %1386 = vrot.lane.b32.xlu0 %v1361, 19
      %v1387 = vpop.permute.xlu0 %1386
      %1388 = vrot.lane.b32.xlu0 %v1362, 19
      %v1389 = vpop.permute.xlu0 %1388
      %1390 = vrot.lane.b32.xlu0 %v1363, 19
      %v1391 = vpop.permute.xlu0 %1390
      %1392 = vrot.lane.b32.xlu0 %v1364, 19
      %v1393 = vpop.permute.xlu0 %1392
      %1394 = vrot.lane.b32.xlu0 %v1365, 19
      %v1395 = vpop.permute.xlu0 %1394
      %1396 = vrot.lane.b32.xlu0 %v1366, 19
      %v1397 = vpop.permute.xlu0 %1396
      %1398 = vrot.lane.b32.xlu0 %v1367, 19
      %v1399 = vpop.permute.xlu0 %1398
      %1400 = vrot.lane.b32.xlu0 %v1368, 19
      %v1401 = vpop.permute.xlu0 %1400
      %1402 = vrot.lane.b32.xlu0 %v1369, 19
      %v1403 = vpop.permute.xlu0 %1402
      %1404 = vrot.lane.b32.xlu0 %v1370, 19
      %v1405 = vpop.permute.xlu0 %1404
      %1406 = vrot.lane.b32.xlu0 %v1371, 19
      %v1407 = vpop.permute.xlu0 %1406
      %v1408 = vsel %vm298, %v1385, %v1387
      %v1409 = vsel %vm298, %v1387, %v1389
      %v1410 = vsel %vm298, %v1391, %v1393
      %v1411 = vsel %vm298, %v1393, %v1395
      %v1412 = vsel %vm298, %v1397, %v1399
      %v1413 = vsel %vm298, %v1399, %v1401
      %v1414 = vsel %vm298, %v1403, %v1405
      %v1415 = vsel %vm298, %v1405, %v1407
      %1428 = vst.msk [vmem:[#allocation3] sm:$0xff] %vm319, %v1385
      %1429 = vst [vmem:[#allocation3 + $0x8] sm:$0xff] %v1408
      %1430 = vst.msk [vmem:[#allocation3 + $0x10] sm:$0xff] %vm322, %v1409
      %1431 = vst.msk [vmem:[#allocation3 + $0x18] sm:$0xff] %vm319, %v1391
      %1432 = vst [vmem:[#allocation3 + $0x20] sm:$0xff] %v1410
      %1433 = vst.msk [vmem:[#allocation3 + $0x28] sm:$0xff] %vm322, %v1411
      %1434 = vst.msk [vmem:[#allocation3 + $0x30] sm:$0xff] %vm319, %v1397
      %1435 = vst [vmem:[#allocation3 + $0x38] sm:$0xff] %v1412
      %1436 = vst.msk [vmem:[#allocation3 + $0x40] sm:$0xff] %vm322, %v1413
      %1437 = vst.msk [vmem:[#allocation3 + $0x48] sm:$0xff] %vm319, %v1403
      %1438 = vst [vmem:[#allocation3 + $0x50] sm:$0xff] %v1414
      %1439 = vst.msk [vmem:[#allocation3 + $0x58] sm:$0xff] %vm322, %v1415
      %v1440 = vld [vmem:[#allocation3] sm:$0xff]
      %v1441 = vld [vmem:[#allocation3 + $0x8] sm:$0xff]
      %v1442 = vld [vmem:[#allocation3 + $0x10] sm:$0xff]
      %v1443 = vld [vmem:[#allocation3 + $0x18] sm:$0xff]
      %v1444 = vld [vmem:[#allocation3 + $0x20] sm:$0xff]
      %v1445 = vld [vmem:[#allocation3 + $0x28] sm:$0xff]
      %v1446 = vld [vmem:[#allocation3 + $0x30] sm:$0xff]
      %v1447 = vld [vmem:[#allocation3 + $0x38] sm:$0xff]
      %v1448 = vld [vmem:[#allocation3 + $0x40] sm:$0xff]
      %v1449 = vld [vmem:[#allocation3 + $0x48] sm:$0xff]
      %v1450 = vld [vmem:[#allocation3 + $0x50] sm:$0xff]
      %v1451 = vld [vmem:[#allocation3 + $0x58] sm:$0xff]
      %1452 = vst [vmem:[#allocation4] sm:$0xff] %v1440
      %1453 = vst [vmem:[#allocation4 + $0x8] sm:$0xff] %v1441
      %1454 = vst.msk [vmem:[#allocation4 + $0x10] sm:$0xff] %vm348, %v1442
      %1455 = vst [vmem:[#allocation4 + $0x18] sm:$0xff] %v1443
      %1456 = vst [vmem:[#allocation4 + $0x20] sm:$0xff] %v1444
      %1457 = vst.msk [vmem:[#allocation4 + $0x28] sm:$0xff] %vm348, %v1445
      %1458 = vst [vmem:[#allocation4 + $0x30] sm:$0xff] %v1446
      %1459 = vst [vmem:[#allocation4 + $0x38] sm:$0xff] %v1447
      %1460 = vst.msk [vmem:[#allocation4 + $0x40] sm:$0xff] %vm348, %v1448
      %1461 = vst [vmem:[#allocation4 + $0x48] sm:$0xff] %v1449
      %1462 = vst [vmem:[#allocation4 + $0x50] sm:$0xff] %v1450
      %1463 = vst.msk [vmem:[#allocation4 + $0x58] sm:$0xff] %vm348, %v1451
      %1476 = vrot.lane.b32.xlu0 %v1440, 127
      %v1477 = vpop.permute.xlu0 %1476
      %1478 = vrot.lane.b32.xlu0 %v1441, 127
      %v1479 = vpop.permute.xlu0 %1478
      %1480 = vrot.lane.b32.xlu0 %v1442, 127
      %v1481 = vpop.permute.xlu0 %1480
      %1482 = vrot.lane.b32.xlu0 %v1443, 127
      %v1483 = vpop.permute.xlu0 %1482
      %1484 = vrot.lane.b32.xlu0 %v1444, 127
      %v1485 = vpop.permute.xlu0 %1484
      %1486 = vrot.lane.b32.xlu0 %v1445, 127
      %v1487 = vpop.permute.xlu0 %1486
      %1488 = vrot.lane.b32.xlu0 %v1446, 127
      %v1489 = vpop.permute.xlu0 %1488
      %1490 = vrot.lane.b32.xlu0 %v1447, 127
      %v1491 = vpop.permute.xlu0 %1490
      %1492 = vrot.lane.b32.xlu0 %v1448, 127
      %v1493 = vpop.permute.xlu0 %1492
      %1494 = vrot.lane.b32.xlu0 %v1449, 127
      %v1495 = vpop.permute.xlu0 %1494
      %1496 = vrot.lane.b32.xlu0 %v1450, 127
      %v1497 = vpop.permute.xlu0 %1496
      %1498 = vrot.lane.b32.xlu0 %v1451, 127
      %v1499 = vpop.permute.xlu0 %1498
      %v1500 = vsel %vm395, %v1477, %v1479
      %v1501 = vsel %vm395, %v1479, %v1481
      %v1502 = vsel %vm395, %v1483, %v1485
      %v1503 = vsel %vm395, %v1485, %v1487
      %v1504 = vsel %vm395, %v1489, %v1491
      %v1505 = vsel %vm395, %v1491, %v1493
      %v1506 = vsel %vm395, %v1495, %v1497
      %v1507 = vsel %vm395, %v1497, %v1499
      %1520 = vst [vmem:[#allocation4 + $0x60] sm:$0xff] %v1500
      %1521 = vst [vmem:[#allocation4 + $0x68] sm:$0xff] %v1501
      %1522 = vst.msk [vmem:[#allocation4 + $0x70] sm:$0xff] %vm348, %v1481
      %1523 = vst [vmem:[#allocation4 + $0x78] sm:$0xff] %v1502
      %1524 = vst [vmem:[#allocation4 + $0x80] sm:$0xff] %v1503
      %1525 = vst.msk [vmem:[#allocation4 + $0x88] sm:$0xff] %vm348, %v1487
      %1526 = vst [vmem:[#allocation4 + $0x90] sm:$0xff] %v1504
      %1527 = vst [vmem:[#allocation4 + $0x98] sm:$0xff] %v1505
      %1528 = vst.msk [vmem:[#allocation4 + $0xa0] sm:$0xff] %vm348, %v1493
      %1529 = vst [vmem:[#allocation4 + $0xa8] sm:$0xff] %v1506
      %1530 = vst [vmem:[#allocation4 + $0xb0] sm:$0xff] %v1507
      %1531 = vst.msk [vmem:[#allocation4 + $0xb8] sm:$0xff] %vm348, %v1499
      %1532 = vrot.lane.b32.xlu0 %v1440, 126
      %v1533 = vpop.permute.xlu0 %1532
      %1534 = vrot.lane.b32.xlu0 %v1441, 126
      %v1535 = vpop.permute.xlu0 %1534
      %1536 = vrot.lane.b32.xlu0 %v1442, 126
      %v1537 = vpop.permute.xlu0 %1536
      %1538 = vrot.lane.b32.xlu0 %v1443, 126
      %v1539 = vpop.permute.xlu0 %1538
      %1540 = vrot.lane.b32.xlu0 %v1444, 126
      %v1541 = vpop.permute.xlu0 %1540
      %1542 = vrot.lane.b32.xlu0 %v1445, 126
      %v1543 = vpop.permute.xlu0 %1542
      %1544 = vrot.lane.b32.xlu0 %v1446, 126
      %v1545 = vpop.permute.xlu0 %1544
      %1546 = vrot.lane.b32.xlu0 %v1447, 126
      %v1547 = vpop.permute.xlu0 %1546
      %1548 = vrot.lane.b32.xlu0 %v1448, 126
      %v1549 = vpop.permute.xlu0 %1548
      %1550 = vrot.lane.b32.xlu0 %v1449, 126
      %v1551 = vpop.permute.xlu0 %1550
      %1552 = vrot.lane.b32.xlu0 %v1450, 126
      %v1553 = vpop.permute.xlu0 %1552
      %1554 = vrot.lane.b32.xlu0 %v1451, 126
      %v1555 = vpop.permute.xlu0 %1554
      %v1556 = vsel %vm452, %v1533, %v1535
      %v1557 = vsel %vm452, %v1535, %v1537
      %v1558 = vsel %vm452, %v1539, %v1541
      %v1559 = vsel %vm452, %v1541, %v1543
      %v1560 = vsel %vm452, %v1545, %v1547
      %v1561 = vsel %vm452, %v1547, %v1549
      %v1562 = vsel %vm452, %v1551, %v1553
      %v1563 = vsel %vm452, %v1553, %v1555
      %1576 = vst [vmem:[#allocation4 + $0xc0] sm:$0xff] %v1556
      %1577 = vst [vmem:[#allocation4 + $0xc8] sm:$0xff] %v1557
      %1578 = vst.msk [vmem:[#allocation4 + $0xd0] sm:$0xff] %vm348, %v1537
      %1579 = vst [vmem:[#allocation4 + $0xd8] sm:$0xff] %v1558
      %1580 = vst [vmem:[#allocation4 + $0xe0] sm:$0xff] %v1559
      %1581 = vst.msk [vmem:[#allocation4 + $0xe8] sm:$0xff] %vm348, %v1543
      %1582 = vst [vmem:[#allocation4 + $0xf0] sm:$0xff] %v1560
      %1583 = vst [vmem:[#allocation4 + $0xf8] sm:$0xff] %v1561
      %1584 = vst.msk [vmem:[#allocation4 + $0x100] sm:$0xff] %vm348, %v1549
      %1585 = vst [vmem:[#allocation4 + $0x108] sm:$0xff] %v1562
      %1586 = vst [vmem:[#allocation4 + $0x110] sm:$0xff] %v1563
      %1587 = vst.msk [vmem:[#allocation4 + $0x118] sm:$0xff] %vm348, %v1555
      %1588 = vrot.lane.b32.xlu0 %v1440, 110
      %v1589 = vpop.permute.xlu0 %1588
      %1590 = vrot.lane.b32.xlu0 %v1441, 110
      %v1591 = vpop.permute.xlu0 %1590
      %1592 = vrot.lane.b32.xlu0 %v1442, 110
      %v1593 = vpop.permute.xlu0 %1592
      %1594 = vrot.lane.b32.xlu0 %v1443, 110
      %v1595 = vpop.permute.xlu0 %1594
      %1596 = vrot.lane.b32.xlu0 %v1444, 110
      %v1597 = vpop.permute.xlu0 %1596
      %1598 = vrot.lane.b32.xlu0 %v1445, 110
      %v1599 = vpop.permute.xlu0 %1598
      %1600 = vrot.lane.b32.xlu0 %v1446, 110
      %v1601 = vpop.permute.xlu0 %1600
      %1602 = vrot.lane.b32.xlu0 %v1447, 110
      %v1603 = vpop.permute.xlu0 %1602
      %1604 = vrot.lane.b32.xlu0 %v1448, 110
      %v1605 = vpop.permute.xlu0 %1604
      %1606 = vrot.lane.b32.xlu0 %v1449, 110
      %v1607 = vpop.permute.xlu0 %1606
      %1608 = vrot.lane.b32.xlu0 %v1450, 110
      %v1609 = vpop.permute.xlu0 %1608
      %1610 = vrot.lane.b32.xlu0 %v1451, 110
      %v1611 = vpop.permute.xlu0 %1610
      %v1612 = vsel %vm509, %v1589, %v1591
      %v1613 = vsel %vm509, %v1591, %v1593
      %v1614 = vsel %vm509, %v1595, %v1597
      %v1615 = vsel %vm509, %v1597, %v1599
      %v1616 = vsel %vm509, %v1601, %v1603
      %v1617 = vsel %vm509, %v1603, %v1605
      %v1618 = vsel %vm509, %v1607, %v1609
      %v1619 = vsel %vm509, %v1609, %v1611
      %1632 = vst [vmem:[#allocation4 + $0x120] sm:$0xff] %v1612
      %1633 = vst [vmem:[#allocation4 + $0x128] sm:$0xff] %v1613
      %1634 = vst.msk [vmem:[#allocation4 + $0x130] sm:$0xff] %vm348, %v1593
      %1635 = vst [vmem:[#allocation4 + $0x138] sm:$0xff] %v1614
      %1636 = vst [vmem:[#allocation4 + $0x140] sm:$0xff] %v1615
      %1637 = vst.msk [vmem:[#allocation4 + $0x148] sm:$0xff] %vm348, %v1599
      %1638 = vst [vmem:[#allocation4 + $0x150] sm:$0xff] %v1616
      %1639 = vst [vmem:[#allocation4 + $0x158] sm:$0xff] %v1617
      %1640 = vst.msk [vmem:[#allocation4 + $0x160] sm:$0xff] %vm348, %v1605
      %1641 = vst [vmem:[#allocation4 + $0x168] sm:$0xff] %v1618
      %1642 = vst [vmem:[#allocation4 + $0x170] sm:$0xff] %v1619
      %1643 = vst.msk [vmem:[#allocation4 + $0x178] sm:$0xff] %vm348, %v1611
      %1644 = vrot.lane.b32.xlu0 %v1440, 109
      %v1645 = vpop.permute.xlu0 %1644
      %1646 = vrot.lane.b32.xlu0 %v1441, 109
      %v1647 = vpop.permute.xlu0 %1646
      %1648 = vrot.lane.b32.xlu0 %v1442, 109
      %v1649 = vpop.permute.xlu0 %1648
      %1650 = vrot.lane.b32.xlu0 %v1443, 109
      %v1651 = vpop.permute.xlu0 %1650
      %1652 = vrot.lane.b32.xlu0 %v1444, 109
      %v1653 = vpop.permute.xlu0 %1652
      %1654 = vrot.lane.b32.xlu0 %v1445, 109
      %v1655 = vpop.permute.xlu0 %1654
      %1656 = vrot.lane.b32.xlu0 %v1446, 109
      %v1657 = vpop.permute.xlu0 %1656
      %1658 = vrot.lane.b32.xlu0 %v1447, 109
      %v1659 = vpop.permute.xlu0 %1658
      %1660 = vrot.lane.b32.xlu0 %v1448, 109
      %v1661 = vpop.permute.xlu0 %1660
      %1662 = vrot.lane.b32.xlu0 %v1449, 109
      %v1663 = vpop.permute.xlu0 %1662
      %1664 = vrot.lane.b32.xlu0 %v1450, 109
      %v1665 = vpop.permute.xlu0 %1664
      %1666 = vrot.lane.b32.xlu0 %v1451, 109
      %v1667 = vpop.permute.xlu0 %1666
      %v1668 = vsel %vm566, %v1645, %v1647
      %v1669 = vsel %vm566, %v1647, %v1649
      %v1670 = vsel %vm566, %v1651, %v1653
      %v1671 = vsel %vm566, %v1653, %v1655
      %v1672 = vsel %vm566, %v1657, %v1659
      %v1673 = vsel %vm566, %v1659, %v1661
      %v1674 = vsel %vm566, %v1663, %v1665
      %v1675 = vsel %vm566, %v1665, %v1667
      %1688 = vst [vmem:[#allocation4 + $0x180] sm:$0xff] %v1668
      %1689 = vst [vmem:[#allocation4 + $0x188] sm:$0xff] %v1669
      %1690 = vst.msk [vmem:[#allocation4 + $0x190] sm:$0xff] %vm348, %v1649
      %1691 = vst [vmem:[#allocation4 + $0x198] sm:$0xff] %v1670
      %1692 = vst [vmem:[#allocation4 + $0x1a0] sm:$0xff] %v1671
      %1693 = vst.msk [vmem:[#allocation4 + $0x1a8] sm:$0xff] %vm348, %v1655
      %1694 = vst [vmem:[#allocation4 + $0x1b0] sm:$0xff] %v1672
      %1695 = vst [vmem:[#allocation4 + $0x1b8] sm:$0xff] %v1673
      %1696 = vst.msk [vmem:[#allocation4 + $0x1c0] sm:$0xff] %vm348, %v1661
      %1697 = vst [vmem:[#allocation4 + $0x1c8] sm:$0xff] %v1674
      %1698 = vst [vmem:[#allocation4 + $0x1d0] sm:$0xff] %v1675
      %1699 = vst.msk [vmem:[#allocation4 + $0x1d8] sm:$0xff] %vm348, %v1667
      %1700 = vrot.lane.b32.xlu0 %v1440, 108
      %v1701 = vpop.permute.xlu0 %1700
      %1702 = vrot.lane.b32.xlu0 %v1441, 108
      %v1703 = vpop.permute.xlu0 %1702
      %1704 = vrot.lane.b32.xlu0 %v1442, 108
      %v1705 = vpop.permute.xlu0 %1704
      %1706 = vrot.lane.b32.xlu0 %v1443, 108
      %v1707 = vpop.permute.xlu0 %1706
      %1708 = vrot.lane.b32.xlu0 %v1444, 108
      %v1709 = vpop.permute.xlu0 %1708
      %1710 = vrot.lane.b32.xlu0 %v1445, 108
      %v1711 = vpop.permute.xlu0 %1710
      %1712 = vrot.lane.b32.xlu0 %v1446, 108
      %v1713 = vpop.permute.xlu0 %1712
      %1714 = vrot.lane.b32.xlu0 %v1447, 108
      %v1715 = vpop.permute.xlu0 %1714
      %1716 = vrot.lane.b32.xlu0 %v1448, 108
      %v1717 = vpop.permute.xlu0 %1716
      %1718 = vrot.lane.b32.xlu0 %v1449, 108
      %v1719 = vpop.permute.xlu0 %1718
      %1720 = vrot.lane.b32.xlu0 %v1450, 108
      %v1721 = vpop.permute.xlu0 %1720
      %1722 = vrot.lane.b32.xlu0 %v1451, 108
      %v1723 = vpop.permute.xlu0 %1722
      %v1724 = vsel %vm623, %v1701, %v1703
      %v1725 = vsel %vm623, %v1703, %v1705
      %v1726 = vsel %vm623, %v1707, %v1709
      %v1727 = vsel %vm623, %v1709, %v1711
      %v1728 = vsel %vm623, %v1713, %v1715
      %v1729 = vsel %vm623, %v1715, %v1717
      %v1730 = vsel %vm623, %v1719, %v1721
      %v1731 = vsel %vm623, %v1721, %v1723
      %1744 = vst [vmem:[#allocation4 + $0x1e0] sm:$0xff] %v1724
      %1745 = vst [vmem:[#allocation4 + $0x1e8] sm:$0xff] %v1725
      %1746 = vst.msk [vmem:[#allocation4 + $0x1f0] sm:$0xff] %vm348, %v1705
      %1747 = vst [vmem:[#allocation4 + $0x1f8] sm:$0xff] %v1726
      %1748 = vst [vmem:[#allocation4 + $0x200] sm:$0xff] %v1727
      %1749 = vst.msk [vmem:[#allocation4 + $0x208] sm:$0xff] %vm348, %v1711
      %1750 = vst [vmem:[#allocation4 + $0x210] sm:$0xff] %v1728
      %1751 = vst [vmem:[#allocation4 + $0x218] sm:$0xff] %v1729
      %1752 = vst.msk [vmem:[#allocation4 + $0x220] sm:$0xff] %vm348, %v1717
      %1753 = vst [vmem:[#allocation4 + $0x228] sm:$0xff] %v1730
      %1754 = vst [vmem:[#allocation4 + $0x230] sm:$0xff] %v1731
      %1755 = vst.msk [vmem:[#allocation4 + $0x238] sm:$0xff] %vm348, %v1723
      %1756 = vrot.lane.b32.xlu0 %v1440, 92
      %v1757 = vpop.permute.xlu0 %1756
      %1758 = vrot.lane.b32.xlu0 %v1441, 92
      %v1759 = vpop.permute.xlu0 %1758
      %1760 = vrot.lane.b32.xlu0 %v1442, 92
      %v1761 = vpop.permute.xlu0 %1760
      %1762 = vrot.lane.b32.xlu0 %v1443, 92
      %v1763 = vpop.permute.xlu0 %1762
      %1764 = vrot.lane.b32.xlu0 %v1444, 92
      %v1765 = vpop.permute.xlu0 %1764
      %1766 = vrot.lane.b32.xlu0 %v1445, 92
      %v1767 = vpop.permute.xlu0 %1766
      %1768 = vrot.lane.b32.xlu0 %v1446, 92
      %v1769 = vpop.permute.xlu0 %1768
      %1770 = vrot.lane.b32.xlu0 %v1447, 92
      %v1771 = vpop.permute.xlu0 %1770
      %1772 = vrot.lane.b32.xlu0 %v1448, 92
      %v1773 = vpop.permute.xlu0 %1772
      %1774 = vrot.lane.b32.xlu0 %v1449, 92
      %v1775 = vpop.permute.xlu0 %1774
      %1776 = vrot.lane.b32.xlu0 %v1450, 92
      %v1777 = vpop.permute.xlu0 %1776
      %1778 = vrot.lane.b32.xlu0 %v1451, 92
      %v1779 = vpop.permute.xlu0 %1778
      %v1780 = vsel %vm680, %v1757, %v1759
      %v1781 = vsel %vm680, %v1759, %v1761
      %v1782 = vsel %vm680, %v1763, %v1765
      %v1783 = vsel %vm680, %v1765, %v1767
      %v1784 = vsel %vm680, %v1769, %v1771
      %v1785 = vsel %vm680, %v1771, %v1773
      %v1786 = vsel %vm680, %v1775, %v1777
      %v1787 = vsel %vm680, %v1777, %v1779
      %1800 = vst [vmem:[#allocation4 + $0x240] sm:$0xff] %v1780
      %1801 = vst [vmem:[#allocation4 + $0x248] sm:$0xff] %v1781
      %1802 = vst.msk [vmem:[#allocation4 + $0x250] sm:$0xff] %vm348, %v1761
      %1803 = vst [vmem:[#allocation4 + $0x258] sm:$0xff] %v1782
      %1804 = vst [vmem:[#allocation4 + $0x260] sm:$0xff] %v1783
      %1805 = vst.msk [vmem:[#allocation4 + $0x268] sm:$0xff] %vm348, %v1767
      %1806 = vst [vmem:[#allocation4 + $0x270] sm:$0xff] %v1784
      %1807 = vst [vmem:[#allocation4 + $0x278] sm:$0xff] %v1785
      %1808 = vst.msk [vmem:[#allocation4 + $0x280] sm:$0xff] %vm348, %v1773
      %1809 = vst [vmem:[#allocation4 + $0x288] sm:$0xff] %v1786
      %1810 = vst [vmem:[#allocation4 + $0x290] sm:$0xff] %v1787
      %1811 = vst.msk [vmem:[#allocation4 + $0x298] sm:$0xff] %vm348, %v1779
      %1812 = vrot.lane.b32.xlu0 %v1440, 91
      %v1813 = vpop.permute.xlu0 %1812
      %1814 = vrot.lane.b32.xlu0 %v1441, 91
      %v1815 = vpop.permute.xlu0 %1814
      %1816 = vrot.lane.b32.xlu0 %v1442, 91
      %v1817 = vpop.permute.xlu0 %1816
      %1818 = vrot.lane.b32.xlu0 %v1443, 91
      %v1819 = vpop.permute.xlu0 %1818
      %1820 = vrot.lane.b32.xlu0 %v1444, 91
      %v1821 = vpop.permute.xlu0 %1820
      %1822 = vrot.lane.b32.xlu0 %v1445, 91
      %v1823 = vpop.permute.xlu0 %1822
      %1824 = vrot.lane.b32.xlu0 %v1446, 91
      %v1825 = vpop.permute.xlu0 %1824
      %1826 = vrot.lane.b32.xlu0 %v1447, 91
      %v1827 = vpop.permute.xlu0 %1826
      %1828 = vrot.lane.b32.xlu0 %v1448, 91
      %v1829 = vpop.permute.xlu0 %1828
      %1830 = vrot.lane.b32.xlu0 %v1449, 91
      %v1831 = vpop.permute.xlu0 %1830
      %1832 = vrot.lane.b32.xlu0 %v1450, 91
      %v1833 = vpop.permute.xlu0 %1832
      %1834 = vrot.lane.b32.xlu0 %v1451, 91
      %v1835 = vpop.permute.xlu0 %1834
      %v1836 = vsel %vm737, %v1813, %v1815
      %v1837 = vsel %vm737, %v1815, %v1817
      %v1838 = vsel %vm737, %v1819, %v1821
      %v1839 = vsel %vm737, %v1821, %v1823
      %v1840 = vsel %vm737, %v1825, %v1827
      %v1841 = vsel %vm737, %v1827, %v1829
      %v1842 = vsel %vm737, %v1831, %v1833
      %v1843 = vsel %vm737, %v1833, %v1835
      %1856 = vst [vmem:[#allocation4 + $0x2a0] sm:$0xff] %v1836
      %1857 = vst [vmem:[#allocation4 + $0x2a8] sm:$0xff] %v1837
      %1858 = vst.msk [vmem:[#allocation4 + $0x2b0] sm:$0xff] %vm348, %v1817
      %1859 = vst [vmem:[#allocation4 + $0x2b8] sm:$0xff] %v1838
      %1860 = vst [vmem:[#allocation4 + $0x2c0] sm:$0xff] %v1839
      %1861 = vst.msk [vmem:[#allocation4 + $0x2c8] sm:$0xff] %vm348, %v1823
      %1862 = vst [vmem:[#allocation4 + $0x2d0] sm:$0xff] %v1840
      %1863 = vst [vmem:[#allocation4 + $0x2d8] sm:$0xff] %v1841
      %1864 = vst.msk [vmem:[#allocation4 + $0x2e0] sm:$0xff] %vm348, %v1829
      %1865 = vst [vmem:[#allocation4 + $0x2e8] sm:$0xff] %v1842
      %1866 = vst [vmem:[#allocation4 + $0x2f0] sm:$0xff] %v1843
      %1867 = vst.msk [vmem:[#allocation4 + $0x2f8] sm:$0xff] %vm348, %v1835
      %1868 = vrot.lane.b32.xlu0 %v1440, 90
      %v1869 = vpop.permute.xlu0 %1868
      %1870 = vrot.lane.b32.xlu0 %v1441, 90
      %v1871 = vpop.permute.xlu0 %1870
      %1872 = vrot.lane.b32.xlu0 %v1442, 90
      %v1873 = vpop.permute.xlu0 %1872
      %1874 = vrot.lane.b32.xlu0 %v1443, 90
      %v1875 = vpop.permute.xlu0 %1874
      %1876 = vrot.lane.b32.xlu0 %v1444, 90
      %v1877 = vpop.permute.xlu0 %1876
      %1878 = vrot.lane.b32.xlu0 %v1445, 90
      %v1879 = vpop.permute.xlu0 %1878
      %1880 = vrot.lane.b32.xlu0 %v1446, 90
      %v1881 = vpop.permute.xlu0 %1880
      %1882 = vrot.lane.b32.xlu0 %v1447, 90
      %v1883 = vpop.permute.xlu0 %1882
      %1884 = vrot.lane.b32.xlu0 %v1448, 90
      %v1885 = vpop.permute.xlu0 %1884
      %1886 = vrot.lane.b32.xlu0 %v1449, 90
      %v1887 = vpop.permute.xlu0 %1886
      %1888 = vrot.lane.b32.xlu0 %v1450, 90
      %v1889 = vpop.permute.xlu0 %1888
      %1890 = vrot.lane.b32.xlu0 %v1451, 90
      %v1891 = vpop.permute.xlu0 %1890
      %v1892 = vsel %vm794, %v1869, %v1871
      %v1893 = vsel %vm794, %v1871, %v1873
      %v1894 = vsel %vm794, %v1875, %v1877
      %v1895 = vsel %vm794, %v1877, %v1879
      %v1896 = vsel %vm794, %v1881, %v1883
      %v1897 = vsel %vm794, %v1883, %v1885
      %v1898 = vsel %vm794, %v1887, %v1889
      %v1899 = vsel %vm794, %v1889, %v1891
      %1912 = vst [vmem:[#allocation4 + $0x300] sm:$0xff] %v1892
      %1913 = vst [vmem:[#allocation4 + $0x308] sm:$0xff] %v1893
      %1914 = vst.msk [vmem:[#allocation4 + $0x310] sm:$0xff] %vm348, %v1873
      %1915 = vst [vmem:[#allocation4 + $0x318] sm:$0xff] %v1894
      %1916 = vst [vmem:[#allocation4 + $0x320] sm:$0xff] %v1895
      %1917 = vst.msk [vmem:[#allocation4 + $0x328] sm:$0xff] %vm348, %v1879
      %1918 = vst [vmem:[#allocation4 + $0x330] sm:$0xff] %v1896
      %1919 = vst [vmem:[#allocation4 + $0x338] sm:$0xff] %v1897
      %1920 = vst.msk [vmem:[#allocation4 + $0x340] sm:$0xff] %vm348, %v1885
      %1921 = vst [vmem:[#allocation4 + $0x348] sm:$0xff] %v1898
      %1922 = vst [vmem:[#allocation4 + $0x350] sm:$0xff] %v1899
      %1923 = vst.msk [vmem:[#allocation4 + $0x358] sm:$0xff] %vm348, %v1891
      %v1924 = vld [vmem:[#allocation4] sm:$0xff]
      %v1925 = vld [vmem:[#allocation4 + $0x8] sm:$0xff]
      %v1926 = vld [vmem:[#allocation4 + $0x10] sm:$0xff]
      %v1927 = vld [vmem:[#allocation4 + $0x18] sm:$0xff]
      %v1928 = vld [vmem:[#allocation4 + $0x20] sm:$0xff]
      %v1929 = vld [vmem:[#allocation4 + $0x28] sm:$0xff]
      %v1930 = vld [vmem:[#allocation4 + $0x30] sm:$0xff]
      %v1931 = vld [vmem:[#allocation4 + $0x38] sm:$0xff]
      %v1932 = vld [vmem:[#allocation4 + $0x40] sm:$0xff]
      %v1933 = vld [vmem:[#allocation4 + $0x48] sm:$0xff]
      %v1934 = vld [vmem:[#allocation4 + $0x50] sm:$0xff]
      %v1935 = vld [vmem:[#allocation4 + $0x58] sm:$0xff]
      %v1936 = vld [vmem:[#allocation4 + $0x60] sm:$0xff]
      %v1937 = vld [vmem:[#allocation4 + $0x68] sm:$0xff]
      %v1938 = vld [vmem:[#allocation4 + $0x70] sm:$0xff]
      %v1939 = vld [vmem:[#allocation4 + $0x78] sm:$0xff]
      %v1940 = vld [vmem:[#allocation4 + $0x80] sm:$0xff]
      %v1941 = vld [vmem:[#allocation4 + $0x88] sm:$0xff]
      %v1942 = vld [vmem:[#allocation4 + $0x90] sm:$0xff]
      %v1943 = vld [vmem:[#allocation4 + $0x98] sm:$0xff]
      %v1944 = vld [vmem:[#allocation4 + $0xa0] sm:$0xff]
      %v1945 = vld [vmem:[#allocation4 + $0xa8] sm:$0xff]
      %v1946 = vld [vmem:[#allocation4 + $0xb0] sm:$0xff]
      %v1947 = vld [vmem:[#allocation4 + $0xb8] sm:$0xff]
      %v1948 = vld [vmem:[#allocation4 + $0xc0] sm:$0xff]
      %v1949 = vld [vmem:[#allocation4 + $0xc8] sm:$0xff]
      %v1950 = vld [vmem:[#allocation4 + $0xd0] sm:$0xff]
      %v1951 = vld [vmem:[#allocation4 + $0xd8] sm:$0xff]
      %v1952 = vld [vmem:[#allocation4 + $0xe0] sm:$0xff]
      %v1953 = vld [vmem:[#allocation4 + $0xe8] sm:$0xff]
      %v1954 = vld [vmem:[#allocation4 + $0xf0] sm:$0xff]
      %v1955 = vld [vmem:[#allocation4 + $0xf8] sm:$0xff]
      %v1956 = vld [vmem:[#allocation4 + $0x100] sm:$0xff]
      %v1957 = vld [vmem:[#allocation4 + $0x108] sm:$0xff]
      %v1958 = vld [vmem:[#allocation4 + $0x110] sm:$0xff]
      %v1959 = vld [vmem:[#allocation4 + $0x118] sm:$0xff]
      %v1960 = vld [vmem:[#allocation4 + $0x120] sm:$0xff]
      %v1961 = vld [vmem:[#allocation4 + $0x128] sm:$0xff]
      %v1962 = vld [vmem:[#allocation4 + $0x130] sm:$0xff]
      %v1963 = vld [vmem:[#allocation4 + $0x138] sm:$0xff]
      %v1964 = vld [vmem:[#allocation4 + $0x140] sm:$0xff]
      %v1965 = vld [vmem:[#allocation4 + $0x148] sm:$0xff]
      %v1966 = vld [vmem:[#allocation4 + $0x150] sm:$0xff]
      %v1967 = vld [vmem:[#allocation4 + $0x158] sm:$0xff]
      %v1968 = vld [vmem:[#allocation4 + $0x160] sm:$0xff]
      %v1969 = vld [vmem:[#allocation4 + $0x168] sm:$0xff]
      %v1970 = vld [vmem:[#allocation4 + $0x170] sm:$0xff]
      %v1971 = vld [vmem:[#allocation4 + $0x178] sm:$0xff]
      %v1972 = vld [vmem:[#allocation4 + $0x180] sm:$0xff]
      %v1973 = vld [vmem:[#allocation4 + $0x188] sm:$0xff]
      %v1974 = vld [vmem:[#allocation4 + $0x190] sm:$0xff]
      %v1975 = vld [vmem:[#allocation4 + $0x198] sm:$0xff]
      %v1976 = vld [vmem:[#allocation4 + $0x1a0] sm:$0xff]
      %v1977 = vld [vmem:[#allocation4 + $0x1a8] sm:$0xff]
      %v1978 = vld [vmem:[#allocation4 + $0x1b0] sm:$0xff]
      %v1979 = vld [vmem:[#allocation4 + $0x1b8] sm:$0xff]
      %v1980 = vld [vmem:[#allocation4 + $0x1c0] sm:$0xff]
      %v1981 = vld [vmem:[#allocation4 + $0x1c8] sm:$0xff]
      %v1982 = vld [vmem:[#allocation4 + $0x1d0] sm:$0xff]
      %v1983 = vld [vmem:[#allocation4 + $0x1d8] sm:$0xff]
      %v1984 = vld [vmem:[#allocation4 + $0x1e0] sm:$0xff]
      %v1985 = vld [vmem:[#allocation4 + $0x1e8] sm:$0xff]
      %v1986 = vld [vmem:[#allocation4 + $0x1f0] sm:$0xff]
      %v1987 = vld [vmem:[#allocation4 + $0x1f8] sm:$0xff]
      %v1988 = vld [vmem:[#allocation4 + $0x200] sm:$0xff]
      %v1989 = vld [vmem:[#allocation4 + $0x208] sm:$0xff]
      %v1990 = vld [vmem:[#allocation4 + $0x210] sm:$0xff]
      %v1991 = vld [vmem:[#allocation4 + $0x218] sm:$0xff]
      %v1992 = vld [vmem:[#allocation4 + $0x220] sm:$0xff]
      %v1993 = vld [vmem:[#allocation4 + $0x228] sm:$0xff]
      %v1994 = vld [vmem:[#allocation4 + $0x230] sm:$0xff]
      %v1995 = vld [vmem:[#allocation4 + $0x238] sm:$0xff]
      %v1996 = vld [vmem:[#allocation4 + $0x240] sm:$0xff]
      %v1997 = vld [vmem:[#allocation4 + $0x248] sm:$0xff]
      %v1998 = vld [vmem:[#allocation4 + $0x250] sm:$0xff]
      %v1999 = vld [vmem:[#allocation4 + $0x258] sm:$0xff]
      %v2000 = vld [vmem:[#allocation4 + $0x260] sm:$0xff]
      %v2001 = vld [vmem:[#allocation4 + $0x268] sm:$0xff]
      %v2002 = vld [vmem:[#allocation4 + $0x270] sm:$0xff]
      %v2003 = vld [vmem:[#allocation4 + $0x278] sm:$0xff]
      %v2004 = vld [vmem:[#allocation4 + $0x280] sm:$0xff]
      %v2005 = vld [vmem:[#allocation4 + $0x288] sm:$0xff]
      %v2006 = vld [vmem:[#allocation4 + $0x290] sm:$0xff]
      %v2007 = vld [vmem:[#allocation4 + $0x298] sm:$0xff]
      %v2008 = vld [vmem:[#allocation4 + $0x2a0] sm:$0xff]
      %v2009 = vld [vmem:[#allocation4 + $0x2a8] sm:$0xff]
      %v2010 = vld [vmem:[#allocation4 + $0x2b0] sm:$0xff]
      %v2011 = vld [vmem:[#allocation4 + $0x2b8] sm:$0xff]
      %v2012 = vld [vmem:[#allocation4 + $0x2c0] sm:$0xff]
      %v2013 = vld [vmem:[#allocation4 + $0x2c8] sm:$0xff]
      %v2014 = vld [vmem:[#allocation4 + $0x2d0] sm:$0xff]
      %v2015 = vld [vmem:[#allocation4 + $0x2d8] sm:$0xff]
      %v2016 = vld [vmem:[#allocation4 + $0x2e0] sm:$0xff]
      %v2017 = vld [vmem:[#allocation4 + $0x2e8] sm:$0xff]
      %v2018 = vld [vmem:[#allocation4 + $0x2f0] sm:$0xff]
      %v2019 = vld [vmem:[#allocation4 + $0x2f8] sm:$0xff]
      %v2020 = vld [vmem:[#allocation4 + $0x300] sm:$0xff]
      %v2021 = vld [vmem:[#allocation4 + $0x308] sm:$0xff]
      %v2022 = vld [vmem:[#allocation4 + $0x310] sm:$0xff]
      %v2023 = vld [vmem:[#allocation4 + $0x318] sm:$0xff]
      %v2024 = vld [vmem:[#allocation4 + $0x320] sm:$0xff]
      %v2025 = vld [vmem:[#allocation4 + $0x328] sm:$0xff]
      %v2026 = vld [vmem:[#allocation4 + $0x330] sm:$0xff]
      %v2027 = vld [vmem:[#allocation4 + $0x338] sm:$0xff]
      %v2028 = vld [vmem:[#allocation4 + $0x340] sm:$0xff]
      %v2029 = vld [vmem:[#allocation4 + $0x348] sm:$0xff]
      %v2030 = vld [vmem:[#allocation4 + $0x350] sm:$0xff]
      %v2031 = vld [vmem:[#allocation4 + $0x358] sm:$0xff]
      %s2032 = scalar_lea.vmem %s1, 96
      %v2033 = vld [vmem:[%s2032] sm:$0xff]
      %v2034 = vld [vmem:[%s2032 + $0x8] sm:$0xff]
      %v2035 = vld [vmem:[%s2032 + $0x10] sm:$0xff]
      %v2036 = vld [vmem:[%s2032 + $0x18] sm:$0xff]
      %v2037 = vld [vmem:[%s2032 + $0x20] sm:$0xff]
      %v2038 = vld [vmem:[%s2032 + $0x28] sm:$0xff]
      %v2039 = vld [vmem:[%s2032 + $0x30] sm:$0xff]
      %v2040 = vld [vmem:[%s2032 + $0x38] sm:$0xff]
      %v2041 = vld [vmem:[%s2032 + $0x40] sm:$0xff]
      %v2042 = vld [vmem:[%s2032 + $0x48] sm:$0xff]
      %v2043 = vld [vmem:[%s2032 + $0x50] sm:$0xff]
      %v2044 = vld [vmem:[%s2032 + $0x58] sm:$0xff]
      %s2045 = scalar_lea.vmem %s2, 32
      %v2046 = vld [vmem:[%s2045] sm:$0xff]
      %v2047 = vld [vmem:[%s2045 + $0x8] sm:$0xff]
      %v2048 = vld [vmem:[%s2045 + $0x10] sm:$0xff]
      %v2049 = vld [vmem:[%s2045 + $0x18] sm:$0xff]
      %2051 = vset.pattern.permute.xlu0 0
      %2052 = vperm.xlu0 %2051, %v2046
      %v2053 = vpop.permute.xlu0 %2052
      %2056 = vset.pattern.permute.xlu0 0
      %2057 = vperm.xlu0 %2056, %v2047
      %v2058 = vpop.permute.xlu0 %2057
      %2061 = vset.pattern.permute.xlu0 0
      %2062 = vperm.xlu0 %2061, %v2048
      %v2063 = vpop.permute.xlu0 %2062
      %2066 = vset.pattern.permute.xlu0 0
      %2067 = vperm.xlu0 %2066, %v2049
      %v2068 = vpop.permute.xlu0 %2067
      %v2071 = vsel %vm971, %v2035, 0
      %v2074 = vsel %vm971, %v2038, 0
      %v2077 = vsel %vm971, %v2041, 0
      %v2080 = vsel %vm971, %v2044, 0
      %2082 = vmatprep.subr.mxu0 %v1925
      %2083 = vmatpush1.msra.mxu0 %v1924
      %2084 = vmatprep.subr.mxu0 %v1928
      %2085 = vmatpush1.msra.mxu0 %v1927
      %2086 = vmatprep.subr.mxu0 %v1931
      %2087 = vmatpush1.msra.mxu0 %v1930
      %2088 = vmatprep.subr.mxu0 %v1934
      %2089 = vmatpush1.msra.mxu0 %v1933
      %2090 = vmatprep.subr.mxu0 %v1937
      %2091 = vmatpush1.msra.mxu0 %v1936
      %2092 = vmatprep.subr.mxu0 %v1940
      %2093 = vmatpush1.msra.mxu0 %v1939
      %2094 = vmatprep.subr.mxu0 %v1943
      %2095 = vmatpush1.msra.mxu0 %v1942
      %2096 = vmatprep.subr.mxu0 %v1946
      %2097 = vmatpush1.msra.mxu0 %v1945
      %2098 = vmatprep.subr.mxu0 %v1949
      %2099 = vmatpush1.msra.mxu0 %v1948
      %2100 = vmatprep.subr.mxu0 %v1952
      %2101 = vmatpush1.msra.mxu0 %v1951
      %2102 = vmatprep.subr.mxu0 %v1955
      %2103 = vmatpush1.msra.mxu0 %v1954
      %2104 = vmatprep.subr.mxu0 %v1958
      %2105 = vmatpush1.msra.mxu0 %v1957
      %2106 = vmatprep.subr.mxu0 %v1961
      %2107 = vmatpush1.msra.mxu0 %v1960
      %2108 = vmatprep.subr.mxu0 %v1964
      %2109 = vmatpush1.msra.mxu0 %v1963
      %2110 = vmatprep.subr.mxu0 %v1967
      %2111 = vmatpush1.msra.mxu0 %v1966
      %2112 = vmatprep.subr.mxu0 %v1970
      %2113 = vmatpush1.msra.mxu0 %v1969
      %2114 = vmatprep.subr.mxu0 %v1973
      %2115 = vmatpush1.msra.mxu0 %v1972
      %2116 = vmatprep.subr.mxu0 %v1976
      %2117 = vmatpush1.msra.mxu0 %v1975
      %2118 = vmatprep.subr.mxu0 %v1979
      %2119 = vmatpush1.msra.mxu0 %v1978
      %2120 = vmatprep.subr.mxu0 %v1982
      %2121 = vmatpush1.msra.mxu0 %v1981
      %2122 = vmatprep.subr.mxu0 %v1985
      %2123 = vmatpush1.msra.mxu0 %v1984
      %2124 = vmatprep.subr.mxu0 %v1988
      %2125 = vmatpush1.msra.mxu0 %v1987
      %2126 = vmatprep.subr.mxu0 %v1991
      %2127 = vmatpush1.msra.mxu0 %v1990
      %2128 = vmatprep.subr.mxu0 %v1994
      %2129 = vmatpush1.msra.mxu0 %v1993
      %2130 = vmatprep.subr.mxu0 %v1997
      %2131 = vmatpush1.msra.mxu0 %v1996
      %2132 = vmatprep.subr.mxu0 %v2000
      %2133 = vmatpush1.msra.mxu0 %v1999
      %2134 = vmatprep.subr.mxu0 %v2003
      %2135 = vmatpush1.msra.mxu0 %v2002
      %2136 = vmatprep.subr.mxu0 %v2006
      %2137 = vmatpush1.msra.mxu0 %v2005
      %2138 = vmatprep.subr.mxu0 %v2009
      %2139 = vmatpush1.msra.mxu0 %v2008
      %2140 = vmatprep.subr.mxu0 %v2012
      %2141 = vmatpush1.msra.mxu0 %v2011
      %2142 = vmatprep.subr.mxu0 %v2015
      %2143 = vmatpush1.msra.mxu0 %v2014
      %2144 = vmatprep.subr.mxu0 %v2018
      %2145 = vmatpush1.msra.mxu0 %v2017
      %2146 = vmatprep.mubr.f32.mxu0 %v2034
      %2147 = vmatmul.mubr.f32.gmra.mrb[0].mxu0 %v2033
      %v2148 = vpop.f32.mrb[0].mxu0
      %v2149 = vadd.f32 %v2053, %v2148
      %v2150 = vpop.f32.mrb[0].mxu0
      %v2151 = vadd.f32 %v2053, %v2150
      %2152 = vmatprep.mubr.f32.mxu0 %v2037
      %2153 = vmatmul.mubr.f32.gmra.mrb[0].mxu0 %v2036
      %v2154 = vpop.f32.mrb[0].mxu0
      %v2155 = vadd.f32 %v2058, %v2154
      %v2156 = vpop.f32.mrb[0].mxu0
      %v2157 = vadd.f32 %v2058, %v2156
      %2158 = vmatprep.mubr.f32.mxu0 %v2040
      %2159 = vmatmul.mubr.f32.gmra.mrb[0].mxu0 %v2039
      %v2160 = vpop.f32.mrb[0].mxu0
      %v2161 = vadd.f32 %v2063, %v2160
      %v2162 = vpop.f32.mrb[0].mxu0
      %v2163 = vadd.f32 %v2063, %v2162
      %2164 = vmatprep.mubr.f32.mxu0 %v2043
      %2165 = vmatmul.mubr.f32.gmra.mrb[0].mxu0 %v2042
      %v2166 = vpop.f32.mrb[0].mxu0
      %v2167 = vadd.f32 %v2068, %v2166
      %v2168 = vpop.f32.mrb[0].mxu0
      %v2169 = vadd.f32 %v2068, %v2168
      %2170 = vdwg.mxu0
      %2171 = vmatprep.subr.mxu0 %v2021
      %2172 = vmatpush1.msra.mxu0 %v2020
      %2173 = vmatprep.subr.mxu0 %v2024
      %2174 = vmatpush1.msra.mxu0 %v2023
      %2175 = vmatprep.subr.mxu0 %v2027
      %2176 = vmatpush1.msra.mxu0 %v2026
      %2177 = vmatprep.subr.mxu0 %v2030
      %2178 = vmatpush1.msra.mxu0 %v2029
      %2179 = vmatprep.subr.mxu0 0.0
      %2180 = vmatpush1.msra.mxu0 0.0
      %2181 = vmatprep.subr.mxu0 0.0
      %2182 = vmatpush1.msra.mxu0 0.0
      %2183 = vmatprep.subr.mxu0 0.0
      %2184 = vmatpush1.msra.mxu0 0.0
      %2185 = vmatprep.subr.mxu0 0.0
      %2186 = vmatpush1.msra.mxu0 0.0
      %2187 = vmatprep.subr.mxu0 0.0
      %2188 = vmatpush1.msra.mxu0 0.0
      %2189 = vmatprep.subr.mxu0 0.0
      %2190 = vmatpush1.msra.mxu0 0.0
      %2191 = vmatprep.subr.mxu0 0.0
      %2192 = vmatpush1.msra.mxu0 0.0
      %2193 = vmatprep.subr.mxu0 0.0
      %2194 = vmatpush1.msra.mxu0 0.0
      %2195 = vmatprep.subr.mxu0 0.0
      %2196 = vmatpush1.msra.mxu0 0.0
      %2197 = vmatprep.subr.mxu0 0.0
      %2198 = vmatpush1.msra.mxu0 0.0
      %2199 = vmatprep.subr.mxu0 0.0
      %2200 = vmatpush1.msra.mxu0 0.0
      %2201 = vmatprep.subr.mxu0 0.0
      %2202 = vmatpush1.msra.mxu0 0.0
      %2203 = vmatprep.subr.mxu0 0.0
      %2204 = vmatpush1.msra.mxu0 0.0
      %2205 = vmatprep.subr.mxu0 0.0
      %2206 = vmatpush1.msra.mxu0 0.0
      %2207 = vmatprep.subr.mxu0 0.0
      %2208 = vmatpush1.msra.mxu0 0.0
      %2209 = vmatprep.subr.mxu0 0.0
      %2210 = vmatpush1.msra.mxu0 0.0
      %2211 = vmatprep.subr.mxu0 0.0
      %2212 = vmatpush1.msra.mxu0 0.0
      %2213 = vmatprep.subr.mxu0 0.0
      %2214 = vmatpush1.msra.mxu0 0.0
      %2215 = vmatprep.subr.mxu0 0.0
      %2216 = vmatpush1.msra.mxu0 0.0
      %2217 = vmatprep.subr.mxu0 0.0
      %2218 = vmatpush1.msra.mxu0 0.0
      %2219 = vmatprep.subr.mxu0 0.0
      %2220 = vmatpush1.msra.mxu0 0.0
      %2221 = vmatprep.subr.mxu0 0.0
      %2222 = vmatpush1.msra.mxu0 0.0
      %2223 = vmatprep.subr.mxu0 0.0
      %2224 = vmatpush1.msra.mxu0 0.0
      %2225 = vmatprep.subr.mxu0 0.0
      %2226 = vmatpush1.msra.mxu0 0.0
      %2227 = vmatprep.subr.mxu0 0.0
      %2228 = vmatpush1.msra.mxu0 0.0
      %2229 = vmatprep.subr.mxu0 0.0
      %2230 = vmatpush1.msra.mxu0 0.0
      %2231 = vmatprep.subr.mxu0 0.0
      %2232 = vmatpush1.msra.mxu0 0.0
      %2233 = vmatprep.subr.mxu0 0.0
      %2234 = vmatpush1.msra.mxu0 0.0
      %2235 = vmatprep.mubr.f32.mxu0 0.0
      %2236 = vmatmul.mubr.f32.gmra.mrb[0].mxu0 %v2071
      %v2237 = vpop.f32.mrb[0].mxu0
      %v2238 = vadd.f32 %v2149, %v2237
      %v2239 = vpop.f32.mrb[0].mxu0
      %v2240 = vadd.f32 %v2151, %v2239
      %2241 = vmatprep.mubr.f32.mxu0 0.0
      %2242 = vmatmul.mubr.f32.gmra.mrb[0].mxu0 %v2074
      %v2243 = vpop.f32.mrb[0].mxu0
      %v2244 = vadd.f32 %v2155, %v2243
      %v2245 = vpop.f32.mrb[0].mxu0
      %v2246 = vadd.f32 %v2157, %v2245
      %2247 = vmatprep.mubr.f32.mxu0 0.0
      %2248 = vmatmul.mubr.f32.gmra.mrb[0].mxu0 %v2077
      %v2249 = vpop.f32.mrb[0].mxu0
      %v2250 = vadd.f32 %v2161, %v2249
      %v2251 = vpop.f32.mrb[0].mxu0
      %v2252 = vadd.f32 %v2163, %v2251
      %2253 = vmatprep.mubr.f32.mxu0 0.0
      %2254 = vmatmul.mubr.f32.gmra.mrb[0].mxu0 %v2080
      %v2255 = vpop.f32.mrb[0].mxu0
      %v2256 = vadd.f32 %v2167, %v2255
      %v2257 = vpop.f32.mrb[0].mxu0
      %v2258 = vadd.f32 %v2169, %v2257
      %2259 = vdwg.mxu0
      %2260 = vmatprep.subr.mxu0 0.0
      %2261 = vmatpush1.msra.mxu0 %v1926
      %2262 = vmatprep.subr.mxu0 0.0
      %2263 = vmatpush1.msra.mxu0 %v1929
      %2264 = vmatprep.subr.mxu0 0.0
      %2265 = vmatpush1.msra.mxu0 %v1932
      %2266 = vmatprep.subr.mxu0 0.0
      %2267 = vmatpush1.msra.mxu0 %v1935
      %2268 = vmatprep.subr.mxu0 0.0
      %2269 = vmatpush1.msra.mxu0 %v1938
      %2270 = vmatprep.subr.mxu0 0.0
      %2271 = vmatpush1.msra.mxu0 %v1941
      %2272 = vmatprep.subr.mxu0 0.0
      %2273 = vmatpush1.msra.mxu0 %v1944
      %2274 = vmatprep.subr.mxu0 0.0
      %2275 = vmatpush1.msra.mxu0 %v1947
      %2276 = vmatprep.subr.mxu0 0.0
      %2277 = vmatpush1.msra.mxu0 %v1950
      %2278 = vmatprep.subr.mxu0 0.0
      %2279 = vmatpush1.msra.mxu0 %v1953
      %2280 = vmatprep.subr.mxu0 0.0
      %2281 = vmatpush1.msra.mxu0 %v1956
      %2282 = vmatprep.subr.mxu0 0.0
      %2283 = vmatpush1.msra.mxu0 %v1959
      %2284 = vmatprep.subr.mxu0 0.0
      %2285 = vmatpush1.msra.mxu0 %v1962
      %2286 = vmatprep.subr.mxu0 0.0
      %2287 = vmatpush1.msra.mxu0 %v1965
      %2288 = vmatprep.subr.mxu0 0.0
      %2289 = vmatpush1.msra.mxu0 %v1968
      %2290 = vmatprep.subr.mxu0 0.0
      %2291 = vmatpush1.msra.mxu0 %v1971
      %2292 = vmatprep.subr.mxu0 0.0
      %2293 = vmatpush1.msra.mxu0 %v1974
      %2294 = vmatprep.subr.mxu0 0.0
      %2295 = vmatpush1.msra.mxu0 %v1977
      %2296 = vmatprep.subr.mxu0 0.0
      %2297 = vmatpush1.msra.mxu0 %v1980
      %2298 = vmatprep.subr.mxu0 0.0
      %2299 = vmatpush1.msra.mxu0 %v1983
      %2300 = vmatprep.subr.mxu0 0.0
      %2301 = vmatpush1.msra.mxu0 %v1986
      %2302 = vmatprep.subr.mxu0 0.0
      %2303 = vmatpush1.msra.mxu0 %v1989
      %2304 = vmatprep.subr.mxu0 0.0
      %2305 = vmatpush1.msra.mxu0 %v1992
      %2306 = vmatprep.subr.mxu0 0.0
      %2307 = vmatpush1.msra.mxu0 %v1995
      %2308 = vmatprep.subr.mxu0 0.0
      %2309 = vmatpush1.msra.mxu0 %v1998
      %2310 = vmatprep.subr.mxu0 0.0
      %2311 = vmatpush1.msra.mxu0 %v2001
      %2312 = vmatprep.subr.mxu0 0.0
      %2313 = vmatpush1.msra.mxu0 %v2004
      %2314 = vmatprep.subr.mxu0 0.0
      %2315 = vmatpush1.msra.mxu0 %v2007
      %2316 = vmatprep.subr.mxu0 0.0
      %2317 = vmatpush1.msra.mxu0 %v2010
      %2318 = vmatprep.subr.mxu0 0.0
      %2319 = vmatpush1.msra.mxu0 %v2013
      %2320 = vmatprep.subr.mxu0 0.0
      %2321 = vmatpush1.msra.mxu0 %v2016
      %2322 = vmatprep.subr.mxu0 0.0
      %2323 = vmatpush1.msra.mxu0 %v2019
      %2324 = vmatprep.mubr.f32.mxu0 %v2034
      %2325 = vmatmul.mubr.f32.gmra.mrb[0].mxu0 %v2033
      %v2326 = vpop.f32.mrb[0].mxu0
      %v2327 = vadd.f32 %v2053, %v2326
      %v2328 = vpop.f32.mrb[0].mxu0
      %2329 = vmatprep.mubr.f32.mxu0 %v2037
      %2330 = vmatmul.mubr.f32.gmra.mrb[0].mxu0 %v2036
      %v2331 = vpop.f32.mrb[0].mxu0
      %v2332 = vadd.f32 %v2058, %v2331
      %v2333 = vpop.f32.mrb[0].mxu0
      %2334 = vmatprep.mubr.f32.mxu0 %v2040
      %2335 = vmatmul.mubr.f32.gmra.mrb[0].mxu0 %v2039
      %v2336 = vpop.f32.mrb[0].mxu0
      %v2337 = vadd.f32 %v2063, %v2336
      %v2338 = vpop.f32.mrb[0].mxu0
      %2339 = vmatprep.mubr.f32.mxu0 %v2043
      %2340 = vmatmul.mubr.f32.gmra.mrb[0].mxu0 %v2042
      %v2341 = vpop.f32.mrb[0].mxu0
      %v2342 = vadd.f32 %v2068, %v2341
      %v2343 = vpop.f32.mrb[0].mxu0
      %2344 = vdwg.mxu0
      %2345 = vmatprep.subr.mxu0 0.0
      %2346 = vmatpush1.msra.mxu0 %v2022
      %2347 = vmatprep.subr.mxu0 0.0
      %2348 = vmatpush1.msra.mxu0 %v2025
      %2349 = vmatprep.subr.mxu0 0.0
      %2350 = vmatpush1.msra.mxu0 %v2028
      %2351 = vmatprep.subr.mxu0 0.0
      %2352 = vmatpush1.msra.mxu0 %v2031
      %2353 = vmatprep.subr.mxu0 0.0
      %2354 = vmatpush1.msra.mxu0 0.0
      %2355 = vmatprep.subr.mxu0 0.0
      %2356 = vmatpush1.msra.mxu0 0.0
      %2357 = vmatprep.subr.mxu0 0.0
      %2358 = vmatpush1.msra.mxu0 0.0
      %2359 = vmatprep.subr.mxu0 0.0
      %2360 = vmatpush1.msra.mxu0 0.0
      %2361 = vmatprep.subr.mxu0 0.0
      %2362 = vmatpush1.msra.mxu0 0.0
      %2363 = vmatprep.subr.mxu0 0.0
      %2364 = vmatpush1.msra.mxu0 0.0
      %2365 = vmatprep.subr.mxu0 0.0
      %2366 = vmatpush1.msra.mxu0 0.0
      %2367 = vmatprep.subr.mxu0 0.0
      %2368 = vmatpush1.msra.mxu0 0.0
      %2369 = vmatprep.subr.mxu0 0.0
      %2370 = vmatpush1.msra.mxu0 0.0
      %2371 = vmatprep.subr.mxu0 0.0
      %2372 = vmatpush1.msra.mxu0 0.0
      %2373 = vmatprep.subr.mxu0 0.0
      %2374 = vmatpush1.msra.mxu0 0.0
      %2375 = vmatprep.subr.mxu0 0.0
      %2376 = vmatpush1.msra.mxu0 0.0
      %2377 = vmatprep.subr.mxu0 0.0
      %2378 = vmatpush1.msra.mxu0 0.0
      %2379 = vmatprep.subr.mxu0 0.0
      %2380 = vmatpush1.msra.mxu0 0.0
      %2381 = vmatprep.subr.mxu0 0.0
      %2382 = vmatpush1.msra.mxu0 0.0
      %2383 = vmatprep.subr.mxu0 0.0
      %2384 = vmatpush1.msra.mxu0 0.0
      %2385 = vmatprep.subr.mxu0 0.0
      %2386 = vmatpush1.msra.mxu0 0.0
      %2387 = vmatprep.subr.mxu0 0.0
      %2388 = vmatpush1.msra.mxu0 0.0
      %2389 = vmatprep.subr.mxu0 0.0
      %2390 = vmatpush1.msra.mxu0 0.0
      %2391 = vmatprep.subr.mxu0 0.0
      %2392 = vmatpush1.msra.mxu0 0.0
      %2393 = vmatprep.subr.mxu0 0.0
      %2394 = vmatpush1.msra.mxu0 0.0
      %2395 = vmatprep.subr.mxu0 0.0
      %2396 = vmatpush1.msra.mxu0 0.0
      %2397 = vmatprep.subr.mxu0 0.0
      %2398 = vmatpush1.msra.mxu0 0.0
      %2399 = vmatprep.subr.mxu0 0.0
      %2400 = vmatpush1.msra.mxu0 0.0
      %2401 = vmatprep.subr.mxu0 0.0
      %2402 = vmatpush1.msra.mxu0 0.0
      %2403 = vmatprep.subr.mxu0 0.0
      %2404 = vmatpush1.msra.mxu0 0.0
      %2405 = vmatprep.subr.mxu0 0.0
      %2406 = vmatpush1.msra.mxu0 0.0
      %2407 = vmatprep.subr.mxu0 0.0
      %2408 = vmatpush1.msra.mxu0 0.0
      %2409 = vmatprep.mubr.f32.mxu0 0.0
      %2410 = vmatmul.mubr.f32.gmra.mrb[0].mxu0 %v2071
      %v2411 = vpop.f32.mrb[0].mxu0
      %v2412 = vadd.f32 %v2327, %v2411
      %v2413 = vpop.f32.mrb[0].mxu0
      %2414 = vmatprep.mubr.f32.mxu0 0.0
      %2415 = vmatmul.mubr.f32.gmra.mrb[0].mxu0 %v2074
      %v2416 = vpop.f32.mrb[0].mxu0
      %v2417 = vadd.f32 %v2332, %v2416
      %v2418 = vpop.f32.mrb[0].mxu0
      %2419 = vmatprep.mubr.f32.mxu0 0.0
      %2420 = vmatmul.mubr.f32.gmra.mrb[0].mxu0 %v2077
      %v2421 = vpop.f32.mrb[0].mxu0
      %v2422 = vadd.f32 %v2337, %v2421
      %v2423 = vpop.f32.mrb[0].mxu0
      %2424 = vmatprep.mubr.f32.mxu0 0.0
      %2425 = vmatmul.mubr.f32.gmra.mrb[0].mxu0 %v2080
      %v2426 = vpop.f32.mrb[0].mxu0
      %v2427 = vadd.f32 %v2342, %v2426
      %v2428 = vpop.f32.mrb[0].mxu0
      %2429 = vdwg.mxu0
      %v2430 = vmax.f32 %v2238, 0.0
      %v2431 = vmax.f32 %v2240, 0.0
      %v2432 = vmax.f32 %v2412, 0.0
      %v2433 = vmax.f32 %v2244, 0.0
      %v2434 = vmax.f32 %v2246, 0.0
      %v2435 = vmax.f32 %v2417, 0.0
      %v2436 = vmax.f32 %v2250, 0.0
      %v2437 = vmax.f32 %v2252, 0.0
      %v2438 = vmax.f32 %v2422, 0.0
      %v2439 = vmax.f32 %v2256, 0.0
      %v2440 = vmax.f32 %v2258, 0.0
      %v2441 = vmax.f32 %v2427, 0.0
      %v2442 = vmul.f32 %v2430, %v1348
      %v2443 = vmul.f32 %v2431, %v1352
      %v2444 = vmul.f32 %v2432, %v1356
      %v2445 = vmul.f32 %v2433, %v1348
      %v2446 = vmul.f32 %v2434, %v1352
      %v2447 = vmul.f32 %v2435, %v1356
      %v2448 = vmul.f32 %v2436, %v1348
      %v2449 = vmul.f32 %v2437, %v1352
      %v2450 = vmul.f32 %v2438, %v1356
      %v2451 = vmul.f32 %v2439, %v1348
      %v2452 = vmul.f32 %v2440, %v1352
      %v2453 = vmul.f32 %v2441, %v1356
      %2466 = vrot.lane.b32.xlu0 %v2442, 19
      %v2467 = vpop.permute.xlu0 %2466
      %2468 = vrot.lane.b32.xlu0 %v2443, 19
      %v2469 = vpop.permute.xlu0 %2468
      %2470 = vrot.lane.b32.xlu0 %v2444, 19
      %v2471 = vpop.permute.xlu0 %2470
      %2472 = vrot.lane.b32.xlu0 %v2445, 19
      %v2473 = vpop.permute.xlu0 %2472
      %2474 = vrot.lane.b32.xlu0 %v2446, 19
      %v2475 = vpop.permute.xlu0 %2474
      %2476 = vrot.lane.b32.xlu0 %v2447, 19
      %v2477 = vpop.permute.xlu0 %2476
      %2478 = vrot.lane.b32.xlu0 %v2448, 19
      %v2479 = vpop.permute.xlu0 %2478
      %2480 = vrot.lane.b32.xlu0 %v2449, 19
      %v2481 = vpop.permute.xlu0 %2480
      %2482 = vrot.lane.b32.xlu0 %v2450, 19
      %v2483 = vpop.permute.xlu0 %2482
      %2484 = vrot.lane.b32.xlu0 %v2451, 19
      %v2485 = vpop.permute.xlu0 %2484
      %2486 = vrot.lane.b32.xlu0 %v2452, 19
      %v2487 = vpop.permute.xlu0 %2486
      %2488 = vrot.lane.b32.xlu0 %v2453, 19
      %v2489 = vpop.permute.xlu0 %2488
      %v2490 = vsel %vm298, %v2467, %v2469
      %v2491 = vsel %vm298, %v2469, %v2471
      %v2492 = vsel %vm298, %v2473, %v2475
      %v2493 = vsel %vm298, %v2475, %v2477
      %v2494 = vsel %vm298, %v2479, %v2481
      %v2495 = vsel %vm298, %v2481, %v2483
      %v2496 = vsel %vm298, %v2485, %v2487
      %v2497 = vsel %vm298, %v2487, %v2489
      %2510 = vst.msk [vmem:[#allocation2] sm:$0xff] %vm319, %v2467
      %2511 = vst [vmem:[#allocation2 + $0x8] sm:$0xff] %v2490
      %2512 = vst.msk [vmem:[#allocation2 + $0x10] sm:$0xff] %vm322, %v2491
      %2513 = vst.msk [vmem:[#allocation2 + $0x18] sm:$0xff] %vm319, %v2473
      %2514 = vst [vmem:[#allocation2 + $0x20] sm:$0xff] %v2492
      %2515 = vst.msk [vmem:[#allocation2 + $0x28] sm:$0xff] %vm322, %v2493
      %2516 = vst.msk [vmem:[#allocation2 + $0x30] sm:$0xff] %vm319, %v2479
      %2517 = vst [vmem:[#allocation2 + $0x38] sm:$0xff] %v2494
      %2518 = vst.msk [vmem:[#allocation2 + $0x40] sm:$0xff] %vm322, %v2495
      %2519 = vst.msk [vmem:[#allocation2 + $0x48] sm:$0xff] %vm319, %v2485
      %2520 = vst [vmem:[#allocation2 + $0x50] sm:$0xff] %v2496
      %2521 = vst.msk [vmem:[#allocation2 + $0x58] sm:$0xff] %vm322, %v2497
      %v2522 = vld [vmem:[#allocation2] sm:$0xff]
      %v2523 = vld [vmem:[#allocation2 + $0x8] sm:$0xff]
      %v2524 = vld [vmem:[#allocation2 + $0x10] sm:$0xff]
      %v2525 = vld [vmem:[#allocation2 + $0x18] sm:$0xff]
      %v2526 = vld [vmem:[#allocation2 + $0x20] sm:$0xff]
      %v2527 = vld [vmem:[#allocation2 + $0x28] sm:$0xff]
      %v2528 = vld [vmem:[#allocation2 + $0x30] sm:$0xff]
      %v2529 = vld [vmem:[#allocation2 + $0x38] sm:$0xff]
      %v2530 = vld [vmem:[#allocation2 + $0x40] sm:$0xff]
      %v2531 = vld [vmem:[#allocation2 + $0x48] sm:$0xff]
      %v2532 = vld [vmem:[#allocation2 + $0x50] sm:$0xff]
      %v2533 = vld [vmem:[#allocation2 + $0x58] sm:$0xff]
      %2534 = vst [vmem:[#allocation4] sm:$0xff] %v2522
      %2535 = vst [vmem:[#allocation4 + $0x8] sm:$0xff] %v2523
      %2536 = vst.msk [vmem:[#allocation4 + $0x10] sm:$0xff] %vm348, %v2524
      %2537 = vst [vmem:[#allocation4 + $0x18] sm:$0xff] %v2525
      %2538 = vst [vmem:[#allocation4 + $0x20] sm:$0xff] %v2526
      %2539 = vst.msk [vmem:[#allocation4 + $0x28] sm:$0xff] %vm348, %v2527
      %2540 = vst [vmem:[#allocation4 + $0x30] sm:$0xff] %v2528
      %2541 = vst [vmem:[#allocation4 + $0x38] sm:$0xff] %v2529
      %2542 = vst.msk [vmem:[#allocation4 + $0x40] sm:$0xff] %vm348, %v2530
      %2543 = vst [vmem:[#allocation4 + $0x48] sm:$0xff] %v2531
      %2544 = vst [vmem:[#allocation4 + $0x50] sm:$0xff] %v2532
      %2545 = vst.msk [vmem:[#allocation4 + $0x58] sm:$0xff] %vm348, %v2533
      %2558 = vrot.lane.b32.xlu0 %v2522, 127
      %v2559 = vpop.permute.xlu0 %2558
      %2560 = vrot.lane.b32.xlu0 %v2523, 127
      %v2561 = vpop.permute.xlu0 %2560
      %2562 = vrot.lane.b32.xlu0 %v2524, 127
      %v2563 = vpop.permute.xlu0 %2562
      %2564 = vrot.lane.b32.xlu0 %v2525, 127
      %v2565 = vpop.permute.xlu0 %2564
      %2566 = vrot.lane.b32.xlu0 %v2526, 127
      %v2567 = vpop.permute.xlu0 %2566
      %2568 = vrot.lane.b32.xlu0 %v2527, 127
      %v2569 = vpop.permute.xlu0 %2568
      %2570 = vrot.lane.b32.xlu0 %v2528, 127
      %v2571 = vpop.permute.xlu0 %2570
      %2572 = vrot.lane.b32.xlu0 %v2529, 127
      %v2573 = vpop.permute.xlu0 %2572
      %2574 = vrot.lane.b32.xlu0 %v2530, 127
      %v2575 = vpop.permute.xlu0 %2574
      %2576 = vrot.lane.b32.xlu0 %v2531, 127
      %v2577 = vpop.permute.xlu0 %2576
      %2578 = vrot.lane.b32.xlu0 %v2532, 127
      %v2579 = vpop.permute.xlu0 %2578
      %2580 = vrot.lane.b32.xlu0 %v2533, 127
      %v2581 = vpop.permute.xlu0 %2580
      %v2582 = vsel %vm395, %v2559, %v2561
      %v2583 = vsel %vm395, %v2561, %v2563
      %v2584 = vsel %vm395, %v2565, %v2567
      %v2585 = vsel %vm395, %v2567, %v2569
      %v2586 = vsel %vm395, %v2571, %v2573
      %v2587 = vsel %vm395, %v2573, %v2575
      %v2588 = vsel %vm395, %v2577, %v2579
      %v2589 = vsel %vm395, %v2579, %v2581
      %2602 = vst [vmem:[#allocation4 + $0x60] sm:$0xff] %v2582
      %2603 = vst [vmem:[#allocation4 + $0x68] sm:$0xff] %v2583
      %2604 = vst.msk [vmem:[#allocation4 + $0x70] sm:$0xff] %vm348, %v2563
      %2605 = vst [vmem:[#allocation4 + $0x78] sm:$0xff] %v2584
      %2606 = vst [vmem:[#allocation4 + $0x80] sm:$0xff] %v2585
      %2607 = vst.msk [vmem:[#allocation4 + $0x88] sm:$0xff] %vm348, %v2569
      %2608 = vst [vmem:[#allocation4 + $0x90] sm:$0xff] %v2586
      %2609 = vst [vmem:[#allocation4 + $0x98] sm:$0xff] %v2587
      %2610 = vst.msk [vmem:[#allocation4 + $0xa0] sm:$0xff] %vm348, %v2575
      %2611 = vst [vmem:[#allocation4 + $0xa8] sm:$0xff] %v2588
      %2612 = vst [vmem:[#allocation4 + $0xb0] sm:$0xff] %v2589
      %2613 = vst.msk [vmem:[#allocation4 + $0xb8] sm:$0xff] %vm348, %v2581
      %2614 = vrot.lane.b32.xlu0 %v2522, 126
      %v2615 = vpop.permute.xlu0 %2614
      %2616 = vrot.lane.b32.xlu0 %v2523, 126
      %v2617 = vpop.permute.xlu0 %2616
      %2618 = vrot.lane.b32.xlu0 %v2524, 126
      %v2619 = vpop.permute.xlu0 %2618
      %2620 = vrot.lane.b32.xlu0 %v2525, 126
      %v2621 = vpop.permute.xlu0 %2620
      %2622 = vrot.lane.b32.xlu0 %v2526, 126
      %v2623 = vpop.permute.xlu0 %2622
      %2624 = vrot.lane.b32.xlu0 %v2527, 126
      %v2625 = vpop.permute.xlu0 %2624
      %2626 = vrot.lane.b32.xlu0 %v2528, 126
      %v2627 = vpop.permute.xlu0 %2626
      %2628 = vrot.lane.b32.xlu0 %v2529, 126
      %v2629 = vpop.permute.xlu0 %2628
      %2630 = vrot.lane.b32.xlu0 %v2530, 126
      %v2631 = vpop.permute.xlu0 %2630
      %2632 = vrot.lane.b32.xlu0 %v2531, 126
      %v2633 = vpop.permute.xlu0 %2632
      %2634 = vrot.lane.b32.xlu0 %v2532, 126
      %v2635 = vpop.permute.xlu0 %2634
      %2636 = vrot.lane.b32.xlu0 %v2533, 126
      %v2637 = vpop.permute.xlu0 %2636
      %v2638 = vsel %vm452, %v2615, %v2617
      %v2639 = vsel %vm452, %v2617, %v2619
      %v2640 = vsel %vm452, %v2621, %v2623
      %v2641 = vsel %vm452, %v2623, %v2625
      %v2642 = vsel %vm452, %v2627, %v2629
      %v2643 = vsel %vm452, %v2629, %v2631
      %v2644 = vsel %vm452, %v2633, %v2635
      %v2645 = vsel %vm452, %v2635, %v2637
      %2658 = vst [vmem:[#allocation4 + $0xc0] sm:$0xff] %v2638
      %2659 = vst [vmem:[#allocation4 + $0xc8] sm:$0xff] %v2639
      %2660 = vst.msk [vmem:[#allocation4 + $0xd0] sm:$0xff] %vm348, %v2619
      %2661 = vst [vmem:[#allocation4 + $0xd8] sm:$0xff] %v2640
      %2662 = vst [vmem:[#allocation4 + $0xe0] sm:$0xff] %v2641
      %2663 = vst.msk [vmem:[#allocation4 + $0xe8] sm:$0xff] %vm348, %v2625
      %2664 = vst [vmem:[#allocation4 + $0xf0] sm:$0xff] %v2642
      %2665 = vst [vmem:[#allocation4 + $0xf8] sm:$0xff] %v2643
      %2666 = vst.msk [vmem:[#allocation4 + $0x100] sm:$0xff] %vm348, %v2631
      %2667 = vst [vmem:[#allocation4 + $0x108] sm:$0xff] %v2644
      %2668 = vst [vmem:[#allocation4 + $0x110] sm:$0xff] %v2645
      %2669 = vst.msk [vmem:[#allocation4 + $0x118] sm:$0xff] %vm348, %v2637
      %2670 = vrot.lane.b32.xlu0 %v2522, 110
      %v2671 = vpop.permute.xlu0 %2670
      %2672 = vrot.lane.b32.xlu0 %v2523, 110
      %v2673 = vpop.permute.xlu0 %2672
      %2674 = vrot.lane.b32.xlu0 %v2524, 110
      %v2675 = vpop.permute.xlu0 %2674
      %2676 = vrot.lane.b32.xlu0 %v2525, 110
      %v2677 = vpop.permute.xlu0 %2676
      %2678 = vrot.lane.b32.xlu0 %v2526, 110
      %v2679 = vpop.permute.xlu0 %2678
      %2680 = vrot.lane.b32.xlu0 %v2527, 110
      %v2681 = vpop.permute.xlu0 %2680
      %2682 = vrot.lane.b32.xlu0 %v2528, 110
      %v2683 = vpop.permute.xlu0 %2682
      %2684 = vrot.lane.b32.xlu0 %v2529, 110
      %v2685 = vpop.permute.xlu0 %2684
      %2686 = vrot.lane.b32.xlu0 %v2530, 110
      %v2687 = vpop.permute.xlu0 %2686
      %2688 = vrot.lane.b32.xlu0 %v2531, 110
      %v2689 = vpop.permute.xlu0 %2688
      %2690 = vrot.lane.b32.xlu0 %v2532, 110
      %v2691 = vpop.permute.xlu0 %2690
      %2692 = vrot.lane.b32.xlu0 %v2533, 110
      %v2693 = vpop.permute.xlu0 %2692
      %v2694 = vsel %vm509, %v2671, %v2673
      %v2695 = vsel %vm509, %v2673, %v2675
      %v2696 = vsel %vm509, %v2677, %v2679
      %v2697 = vsel %vm509, %v2679, %v2681
      %v2698 = vsel %vm509, %v2683, %v2685
      %v2699 = vsel %vm509, %v2685, %v2687
      %v2700 = vsel %vm509, %v2689, %v2691
      %v2701 = vsel %vm509, %v2691, %v2693
      %2714 = vst [vmem:[#allocation4 + $0x120] sm:$0xff] %v2694
      %2715 = vst [vmem:[#allocation4 + $0x128] sm:$0xff] %v2695
      %2716 = vst.msk [vmem:[#allocation4 + $0x130] sm:$0xff] %vm348, %v2675
      %2717 = vst [vmem:[#allocation4 + $0x138] sm:$0xff] %v2696
      %2718 = vst [vmem:[#allocation4 + $0x140] sm:$0xff] %v2697
      %2719 = vst.msk [vmem:[#allocation4 + $0x148] sm:$0xff] %vm348, %v2681
      %2720 = vst [vmem:[#allocation4 + $0x150] sm:$0xff] %v2698
      %2721 = vst [vmem:[#allocation4 + $0x158] sm:$0xff] %v2699
      %2722 = vst.msk [vmem:[#allocation4 + $0x160] sm:$0xff] %vm348, %v2687
      %2723 = vst [vmem:[#allocation4 + $0x168] sm:$0xff] %v2700
      %2724 = vst [vmem:[#allocation4 + $0x170] sm:$0xff] %v2701
      %2725 = vst.msk [vmem:[#allocation4 + $0x178] sm:$0xff] %vm348, %v2693
      %2726 = vrot.lane.b32.xlu0 %v2522, 109
      %v2727 = vpop.permute.xlu0 %2726
      %2728 = vrot.lane.b32.xlu0 %v2523, 109
      %v2729 = vpop.permute.xlu0 %2728
      %2730 = vrot.lane.b32.xlu0 %v2524, 109
      %v2731 = vpop.permute.xlu0 %2730
      %2732 = vrot.lane.b32.xlu0 %v2525, 109
      %v2733 = vpop.permute.xlu0 %2732
      %2734 = vrot.lane.b32.xlu0 %v2526, 109
      %v2735 = vpop.permute.xlu0 %2734
      %2736 = vrot.lane.b32.xlu0 %v2527, 109
      %v2737 = vpop.permute.xlu0 %2736
      %2738 = vrot.lane.b32.xlu0 %v2528, 109
      %v2739 = vpop.permute.xlu0 %2738
      %2740 = vrot.lane.b32.xlu0 %v2529, 109
      %v2741 = vpop.permute.xlu0 %2740
      %2742 = vrot.lane.b32.xlu0 %v2530, 109
      %v2743 = vpop.permute.xlu0 %2742
      %2744 = vrot.lane.b32.xlu0 %v2531, 109
      %v2745 = vpop.permute.xlu0 %2744
      %2746 = vrot.lane.b32.xlu0 %v2532, 109
      %v2747 = vpop.permute.xlu0 %2746
      %2748 = vrot.lane.b32.xlu0 %v2533, 109
      %v2749 = vpop.permute.xlu0 %2748
      %v2750 = vsel %vm566, %v2727, %v2729
      %v2751 = vsel %vm566, %v2729, %v2731
      %v2752 = vsel %vm566, %v2733, %v2735
      %v2753 = vsel %vm566, %v2735, %v2737
      %v2754 = vsel %vm566, %v2739, %v2741
      %v2755 = vsel %vm566, %v2741, %v2743
      %v2756 = vsel %vm566, %v2745, %v2747
      %v2757 = vsel %vm566, %v2747, %v2749
      %2770 = vst [vmem:[#allocation4 + $0x180] sm:$0xff] %v2750
      %2771 = vst [vmem:[#allocation4 + $0x188] sm:$0xff] %v2751
      %2772 = vst.msk [vmem:[#allocation4 + $0x190] sm:$0xff] %vm348, %v2731
      %2773 = vst [vmem:[#allocation4 + $0x198] sm:$0xff] %v2752
      %2774 = vst [vmem:[#allocation4 + $0x1a0] sm:$0xff] %v2753
      %2775 = vst.msk [vmem:[#allocation4 + $0x1a8] sm:$0xff] %vm348, %v2737
      %2776 = vst [vmem:[#allocation4 + $0x1b0] sm:$0xff] %v2754
      %2777 = vst [vmem:[#allocation4 + $0x1b8] sm:$0xff] %v2755
      %2778 = vst.msk [vmem:[#allocation4 + $0x1c0] sm:$0xff] %vm348, %v2743
      %2779 = vst [vmem:[#allocation4 + $0x1c8] sm:$0xff] %v2756
      %2780 = vst [vmem:[#allocation4 + $0x1d0] sm:$0xff] %v2757
      %2781 = vst.msk [vmem:[#allocation4 + $0x1d8] sm:$0xff] %vm348, %v2749
      %2782 = vrot.lane.b32.xlu0 %v2522, 108
      %v2783 = vpop.permute.xlu0 %2782
      %2784 = vrot.lane.b32.xlu0 %v2523, 108
      %v2785 = vpop.permute.xlu0 %2784
      %2786 = vrot.lane.b32.xlu0 %v2524, 108
      %v2787 = vpop.permute.xlu0 %2786
      %2788 = vrot.lane.b32.xlu0 %v2525, 108
      %v2789 = vpop.permute.xlu0 %2788
      %2790 = vrot.lane.b32.xlu0 %v2526, 108
      %v2791 = vpop.permute.xlu0 %2790
      %2792 = vrot.lane.b32.xlu0 %v2527, 108
      %v2793 = vpop.permute.xlu0 %2792
      %2794 = vrot.lane.b32.xlu0 %v2528, 108
      %v2795 = vpop.permute.xlu0 %2794
      %2796 = vrot.lane.b32.xlu0 %v2529, 108
      %v2797 = vpop.permute.xlu0 %2796
      %2798 = vrot.lane.b32.xlu0 %v2530, 108
      %v2799 = vpop.permute.xlu0 %2798
      %2800 = vrot.lane.b32.xlu0 %v2531, 108
      %v2801 = vpop.permute.xlu0 %2800
      %2802 = vrot.lane.b32.xlu0 %v2532, 108
      %v2803 = vpop.permute.xlu0 %2802
      %2804 = vrot.lane.b32.xlu0 %v2533, 108
      %v2805 = vpop.permute.xlu0 %2804
      %v2806 = vsel %vm623, %v2783, %v2785
      %v2807 = vsel %vm623, %v2785, %v2787
      %v2808 = vsel %vm623, %v2789, %v2791
      %v2809 = vsel %vm623, %v2791, %v2793
      %v2810 = vsel %vm623, %v2795, %v2797
      %v2811 = vsel %vm623, %v2797, %v2799
      %v2812 = vsel %vm623, %v2801, %v2803
      %v2813 = vsel %vm623, %v2803, %v2805
      %2826 = vst [vmem:[#allocation4 + $0x1e0] sm:$0xff] %v2806
      %2827 = vst [vmem:[#allocation4 + $0x1e8] sm:$0xff] %v2807
      %2828 = vst.msk [vmem:[#allocation4 + $0x1f0] sm:$0xff] %vm348, %v2787
      %2829 = vst [vmem:[#allocation4 + $0x1f8] sm:$0xff] %v2808
      %2830 = vst [vmem:[#allocation4 + $0x200] sm:$0xff] %v2809
      %2831 = vst.msk [vmem:[#allocation4 + $0x208] sm:$0xff] %vm348, %v2793
      %2832 = vst [vmem:[#allocation4 + $0x210] sm:$0xff] %v2810
      %2833 = vst [vmem:[#allocation4 + $0x218] sm:$0xff] %v2811
      %2834 = vst.msk [vmem:[#allocation4 + $0x220] sm:$0xff] %vm348, %v2799
      %2835 = vst [vmem:[#allocation4 + $0x228] sm:$0xff] %v2812
      %2836 = vst [vmem:[#allocation4 + $0x230] sm:$0xff] %v2813
      %2837 = vst.msk [vmem:[#allocation4 + $0x238] sm:$0xff] %vm348, %v2805
      %2838 = vrot.lane.b32.xlu0 %v2522, 92
      %v2839 = vpop.permute.xlu0 %2838
      %2840 = vrot.lane.b32.xlu0 %v2523, 92
      %v2841 = vpop.permute.xlu0 %2840
      %2842 = vrot.lane.b32.xlu0 %v2524, 92
      %v2843 = vpop.permute.xlu0 %2842
      %2844 = vrot.lane.b32.xlu0 %v2525, 92
      %v2845 = vpop.permute.xlu0 %2844
      %2846 = vrot.lane.b32.xlu0 %v2526, 92
      %v2847 = vpop.permute.xlu0 %2846
      %2848 = vrot.lane.b32.xlu0 %v2527, 92
      %v2849 = vpop.permute.xlu0 %2848
      %2850 = vrot.lane.b32.xlu0 %v2528, 92
      %v2851 = vpop.permute.xlu0 %2850
      %2852 = vrot.lane.b32.xlu0 %v2529, 92
      %v2853 = vpop.permute.xlu0 %2852
      %2854 = vrot.lane.b32.xlu0 %v2530, 92
      %v2855 = vpop.permute.xlu0 %2854
      %2856 = vrot.lane.b32.xlu0 %v2531, 92
      %v2857 = vpop.permute.xlu0 %2856
      %2858 = vrot.lane.b32.xlu0 %v2532, 92
      %v2859 = vpop.permute.xlu0 %2858
      %2860 = vrot.lane.b32.xlu0 %v2533, 92
      %v2861 = vpop.permute.xlu0 %2860
      %v2862 = vsel %vm680, %v2839, %v2841
      %v2863 = vsel %vm680, %v2841, %v2843
      %v2864 = vsel %vm680, %v2845, %v2847
      %v2865 = vsel %vm680, %v2847, %v2849
      %v2866 = vsel %vm680, %v2851, %v2853
      %v2867 = vsel %vm680, %v2853, %v2855
      %v2868 = vsel %vm680, %v2857, %v2859
      %v2869 = vsel %vm680, %v2859, %v2861
      %2882 = vst [vmem:[#allocation4 + $0x240] sm:$0xff] %v2862
      %2883 = vst [vmem:[#allocation4 + $0x248] sm:$0xff] %v2863
      %2884 = vst.msk [vmem:[#allocation4 + $0x250] sm:$0xff] %vm348, %v2843
      %2885 = vst [vmem:[#allocation4 + $0x258] sm:$0xff] %v2864
      %2886 = vst [vmem:[#allocation4 + $0x260] sm:$0xff] %v2865
      %2887 = vst.msk [vmem:[#allocation4 + $0x268] sm:$0xff] %vm348, %v2849
      %2888 = vst [vmem:[#allocation4 + $0x270] sm:$0xff] %v2866
      %2889 = vst [vmem:[#allocation4 + $0x278] sm:$0xff] %v2867
      %2890 = vst.msk [vmem:[#allocation4 + $0x280] sm:$0xff] %vm348, %v2855
      %2891 = vst [vmem:[#allocation4 + $0x288] sm:$0xff] %v2868
      %2892 = vst [vmem:[#allocation4 + $0x290] sm:$0xff] %v2869
      %2893 = vst.msk [vmem:[#allocation4 + $0x298] sm:$0xff] %vm348, %v2861
      %2894 = vrot.lane.b32.xlu0 %v2522, 91
      %v2895 = vpop.permute.xlu0 %2894
      %2896 = vrot.lane.b32.xlu0 %v2523, 91
      %v2897 = vpop.permute.xlu0 %2896
      %2898 = vrot.lane.b32.xlu0 %v2524, 91
      %v2899 = vpop.permute.xlu0 %2898
      %2900 = vrot.lane.b32.xlu0 %v2525, 91
      %v2901 = vpop.permute.xlu0 %2900
      %2902 = vrot.lane.b32.xlu0 %v2526, 91
      %v2903 = vpop.permute.xlu0 %2902
      %2904 = vrot.lane.b32.xlu0 %v2527, 91
      %v2905 = vpop.permute.xlu0 %2904
      %2906 = vrot.lane.b32.xlu0 %v2528, 91
      %v2907 = vpop.permute.xlu0 %2906
      %2908 = vrot.lane.b32.xlu0 %v2529, 91
      %v2909 = vpop.permute.xlu0 %2908
      %2910 = vrot.lane.b32.xlu0 %v2530, 91
      %v2911 = vpop.permute.xlu0 %2910
      %2912 = vrot.lane.b32.xlu0 %v2531, 91
      %v2913 = vpop.permute.xlu0 %2912
      %2914 = vrot.lane.b32.xlu0 %v2532, 91
      %v2915 = vpop.permute.xlu0 %2914
      %2916 = vrot.lane.b32.xlu0 %v2533, 91
      %v2917 = vpop.permute.xlu0 %2916
      %v2918 = vsel %vm737, %v2895, %v2897
      %v2919 = vsel %vm737, %v2897, %v2899
      %v2920 = vsel %vm737, %v2901, %v2903
      %v2921 = vsel %vm737, %v2903, %v2905
      %v2922 = vsel %vm737, %v2907, %v2909
      %v2923 = vsel %vm737, %v2909, %v2911
      %v2924 = vsel %vm737, %v2913, %v2915
      %v2925 = vsel %vm737, %v2915, %v2917
      %2938 = vst [vmem:[#allocation4 + $0x2a0] sm:$0xff] %v2918
      %2939 = vst [vmem:[#allocation4 + $0x2a8] sm:$0xff] %v2919
      %2940 = vst.msk [vmem:[#allocation4 + $0x2b0] sm:$0xff] %vm348, %v2899
      %2941 = vst [vmem:[#allocation4 + $0x2b8] sm:$0xff] %v2920
      %2942 = vst [vmem:[#allocation4 + $0x2c0] sm:$0xff] %v2921
      %2943 = vst.msk [vmem:[#allocation4 + $0x2c8] sm:$0xff] %vm348, %v2905
      %2944 = vst [vmem:[#allocation4 + $0x2d0] sm:$0xff] %v2922
      %2945 = vst [vmem:[#allocation4 + $0x2d8] sm:$0xff] %v2923
      %2946 = vst.msk [vmem:[#allocation4 + $0x2e0] sm:$0xff] %vm348, %v2911
      %2947 = vst [vmem:[#allocation4 + $0x2e8] sm:$0xff] %v2924
      %2948 = vst [vmem:[#allocation4 + $0x2f0] sm:$0xff] %v2925
      %2949 = vst.msk [vmem:[#allocation4 + $0x2f8] sm:$0xff] %vm348, %v2917
      %2950 = vrot.lane.b32.xlu0 %v2522, 90
      %v2951 = vpop.permute.xlu0 %2950
      %2952 = vrot.lane.b32.xlu0 %v2523, 90
      %v2953 = vpop.permute.xlu0 %2952
      %2954 = vrot.lane.b32.xlu0 %v2524, 90
      %v2955 = vpop.permute.xlu0 %2954
      %2956 = vrot.lane.b32.xlu0 %v2525, 90
      %v2957 = vpop.permute.xlu0 %2956
      %2958 = vrot.lane.b32.xlu0 %v2526, 90
      %v2959 = vpop.permute.xlu0 %2958
      %2960 = vrot.lane.b32.xlu0 %v2527, 90
      %v2961 = vpop.permute.xlu0 %2960
      %2962 = vrot.lane.b32.xlu0 %v2528, 90
      %v2963 = vpop.permute.xlu0 %2962
      %2964 = vrot.lane.b32.xlu0 %v2529, 90
      %v2965 = vpop.permute.xlu0 %2964
      %2966 = vrot.lane.b32.xlu0 %v2530, 90
      %v2967 = vpop.permute.xlu0 %2966
      %2968 = vrot.lane.b32.xlu0 %v2531, 90
      %v2969 = vpop.permute.xlu0 %2968
      %2970 = vrot.lane.b32.xlu0 %v2532, 90
      %v2971 = vpop.permute.xlu0 %2970
      %2972 = vrot.lane.b32.xlu0 %v2533, 90
      %v2973 = vpop.permute.xlu0 %2972
      %v2974 = vsel %vm794, %v2951, %v2953
      %v2975 = vsel %vm794, %v2953, %v2955
      %v2976 = vsel %vm794, %v2957, %v2959
      %v2977 = vsel %vm794, %v2959, %v2961
      %v2978 = vsel %vm794, %v2963, %v2965
      %v2979 = vsel %vm794, %v2965, %v2967
      %v2980 = vsel %vm794, %v2969, %v2971
      %v2981 = vsel %vm794, %v2971, %v2973
      %2994 = vst [vmem:[#allocation4 + $0x300] sm:$0xff] %v2974
      %2995 = vst [vmem:[#allocation4 + $0x308] sm:$0xff] %v2975
      %2996 = vst.msk [vmem:[#allocation4 + $0x310] sm:$0xff] %vm348, %v2955
      %2997 = vst [vmem:[#allocation4 + $0x318] sm:$0xff] %v2976
      %2998 = vst [vmem:[#allocation4 + $0x320] sm:$0xff] %v2977
      %2999 = vst.msk [vmem:[#allocation4 + $0x328] sm:$0xff] %vm348, %v2961
      %3000 = vst [vmem:[#allocation4 + $0x330] sm:$0xff] %v2978
      %3001 = vst [vmem:[#allocation4 + $0x338] sm:$0xff] %v2979
      %3002 = vst.msk [vmem:[#allocation4 + $0x340] sm:$0xff] %vm348, %v2967
      %3003 = vst [vmem:[#allocation4 + $0x348] sm:$0xff] %v2980
      %3004 = vst [vmem:[#allocation4 + $0x350] sm:$0xff] %v2981
      %3005 = vst.msk [vmem:[#allocation4 + $0x358] sm:$0xff] %vm348, %v2973
      %v3006 = vld [vmem:[#allocation4] sm:$0xff]
      %v3007 = vld [vmem:[#allocation4 + $0x8] sm:$0xff]
      %v3008 = vld [vmem:[#allocation4 + $0x10] sm:$0xff]
      %v3009 = vld [vmem:[#allocation4 + $0x18] sm:$0xff]
      %v3010 = vld [vmem:[#allocation4 + $0x20] sm:$0xff]
      %v3011 = vld [vmem:[#allocation4 + $0x28] sm:$0xff]
      %v3012 = vld [vmem:[#allocation4 + $0x30] sm:$0xff]
      %v3013 = vld [vmem:[#allocation4 + $0x38] sm:$0xff]
      %v3014 = vld [vmem:[#allocation4 + $0x40] sm:$0xff]
      %v3015 = vld [vmem:[#allocation4 + $0x48] sm:$0xff]
      %v3016 = vld [vmem:[#allocation4 + $0x50] sm:$0xff]
      %v3017 = vld [vmem:[#allocation4 + $0x58] sm:$0xff]
      %v3018 = vld [vmem:[#allocation4 + $0x60] sm:$0xff]
      %v3019 = vld [vmem:[#allocation4 + $0x68] sm:$0xff]
      %v3020 = vld [vmem:[#allocation4 + $0x70] sm:$0xff]
      %v3021 = vld [vmem:[#allocation4 + $0x78] sm:$0xff]
      %v3022 = vld [vmem:[#allocation4 + $0x80] sm:$0xff]
      %v3023 = vld [vmem:[#allocation4 + $0x88] sm:$0xff]
      %v3024 = vld [vmem:[#allocation4 + $0x90] sm:$0xff]
      %v3025 = vld [vmem:[#allocation4 + $0x98] sm:$0xff]
      %v3026 = vld [vmem:[#allocation4 + $0xa0] sm:$0xff]
      %v3027 = vld [vmem:[#allocation4 + $0xa8] sm:$0xff]
      %v3028 = vld [vmem:[#allocation4 + $0xb0] sm:$0xff]
      %v3029 = vld [vmem:[#allocation4 + $0xb8] sm:$0xff]
      %v3030 = vld [vmem:[#allocation4 + $0xc0] sm:$0xff]
      %v3031 = vld [vmem:[#allocation4 + $0xc8] sm:$0xff]
      %v3032 = vld [vmem:[#allocation4 + $0xd0] sm:$0xff]
      %v3033 = vld [vmem:[#allocation4 + $0xd8] sm:$0xff]
      %v3034 = vld [vmem:[#allocation4 + $0xe0] sm:$0xff]
      %v3035 = vld [vmem:[#allocation4 + $0xe8] sm:$0xff]
      %v3036 = vld [vmem:[#allocation4 + $0xf0] sm:$0xff]
      %v3037 = vld [vmem:[#allocation4 + $0xf8] sm:$0xff]
      %v3038 = vld [vmem:[#allocation4 + $0x100] sm:$0xff]
      %v3039 = vld [vmem:[#allocation4 + $0x108] sm:$0xff]
      %v3040 = vld [vmem:[#allocation4 + $0x110] sm:$0xff]
      %v3041 = vld [vmem:[#allocation4 + $0x118] sm:$0xff]
      %v3042 = vld [vmem:[#allocation4 + $0x120] sm:$0xff]
      %v3043 = vld [vmem:[#allocation4 + $0x128] sm:$0xff]
      %v3044 = vld [vmem:[#allocation4 + $0x130] sm:$0xff]
      %v3045 = vld [vmem:[#allocation4 + $0x138] sm:$0xff]
      %v3046 = vld [vmem:[#allocation4 + $0x140] sm:$0xff]
      %v3047 = vld [vmem:[#allocation4 + $0x148] sm:$0xff]
      %v3048 = vld [vmem:[#allocation4 + $0x150] sm:$0xff]
      %v3049 = vld [vmem:[#allocation4 + $0x158] sm:$0xff]
      %v3050 = vld [vmem:[#allocation4 + $0x160] sm:$0xff]
      %v3051 = vld [vmem:[#allocation4 + $0x168] sm:$0xff]
      %v3052 = vld [vmem:[#allocation4 + $0x170] sm:$0xff]
      %v3053 = vld [vmem:[#allocation4 + $0x178] sm:$0xff]
      %v3054 = vld [vmem:[#allocation4 + $0x180] sm:$0xff]
      %v3055 = vld [vmem:[#allocation4 + $0x188] sm:$0xff]
      %v3056 = vld [vmem:[#allocation4 + $0x190] sm:$0xff]
      %v3057 = vld [vmem:[#allocation4 + $0x198] sm:$0xff]
      %v3058 = vld [vmem:[#allocation4 + $0x1a0] sm:$0xff]
      %v3059 = vld [vmem:[#allocation4 + $0x1a8] sm:$0xff]
      %v3060 = vld [vmem:[#allocation4 + $0x1b0] sm:$0xff]
      %v3061 = vld [vmem:[#allocation4 + $0x1b8] sm:$0xff]
      %v3062 = vld [vmem:[#allocation4 + $0x1c0] sm:$0xff]
      %v3063 = vld [vmem:[#allocation4 + $0x1c8] sm:$0xff]
      %v3064 = vld [vmem:[#allocation4 + $0x1d0] sm:$0xff]
      %v3065 = vld [vmem:[#allocation4 + $0x1d8] sm:$0xff]
      %v3066 = vld [vmem:[#allocation4 + $0x1e0] sm:$0xff]
      %v3067 = vld [vmem:[#allocation4 + $0x1e8] sm:$0xff]
      %v3068 = vld [vmem:[#allocation4 + $0x1f0] sm:$0xff]
      %v3069 = vld [vmem:[#allocation4 + $0x1f8] sm:$0xff]
      %v3070 = vld [vmem:[#allocation4 + $0x200] sm:$0xff]
      %v3071 = vld [vmem:[#allocation4 + $0x208] sm:$0xff]
      %v3072 = vld [vmem:[#allocation4 + $0x210] sm:$0xff]
      %v3073 = vld [vmem:[#allocation4 + $0x218] sm:$0xff]
      %v3074 = vld [vmem:[#allocation4 + $0x220] sm:$0xff]
      %v3075 = vld [vmem:[#allocation4 + $0x228] sm:$0xff]
      %v3076 = vld [vmem:[#allocation4 + $0x230] sm:$0xff]
      %v3077 = vld [vmem:[#allocation4 + $0x238] sm:$0xff]
      %v3078 = vld [vmem:[#allocation4 + $0x240] sm:$0xff]
      %v3079 = vld [vmem:[#allocation4 + $0x248] sm:$0xff]
      %v3080 = vld [vmem:[#allocation4 + $0x250] sm:$0xff]
      %v3081 = vld [vmem:[#allocation4 + $0x258] sm:$0xff]
      %v3082 = vld [vmem:[#allocation4 + $0x260] sm:$0xff]
      %v3083 = vld [vmem:[#allocation4 + $0x268] sm:$0xff]
      %v3084 = vld [vmem:[#allocation4 + $0x270] sm:$0xff]
      %v3085 = vld [vmem:[#allocation4 + $0x278] sm:$0xff]
      %v3086 = vld [vmem:[#allocation4 + $0x280] sm:$0xff]
      %v3087 = vld [vmem:[#allocation4 + $0x288] sm:$0xff]
      %v3088 = vld [vmem:[#allocation4 + $0x290] sm:$0xff]
      %v3089 = vld [vmem:[#allocation4 + $0x298] sm:$0xff]
      %v3090 = vld [vmem:[#allocation4 + $0x2a0] sm:$0xff]
      %v3091 = vld [vmem:[#allocation4 + $0x2a8] sm:$0xff]
      %v3092 = vld [vmem:[#allocation4 + $0x2b0] sm:$0xff]
      %v3093 = vld [vmem:[#allocation4 + $0x2b8] sm:$0xff]
      %v3094 = vld [vmem:[#allocation4 + $0x2c0] sm:$0xff]
      %v3095 = vld [vmem:[#allocation4 + $0x2c8] sm:$0xff]
      %v3096 = vld [vmem:[#allocation4 + $0x2d0] sm:$0xff]
      %v3097 = vld [vmem:[#allocation4 + $0x2d8] sm:$0xff]
      %v3098 = vld [vmem:[#allocation4 + $0x2e0] sm:$0xff]
      %v3099 = vld [vmem:[#allocation4 + $0x2e8] sm:$0xff]
      %v3100 = vld [vmem:[#allocation4 + $0x2f0] sm:$0xff]
      %v3101 = vld [vmem:[#allocation4 + $0x2f8] sm:$0xff]
      %v3102 = vld [vmem:[#allocation4 + $0x300] sm:$0xff]
      %v3103 = vld [vmem:[#allocation4 + $0x308] sm:$0xff]
      %v3104 = vld [vmem:[#allocation4 + $0x310] sm:$0xff]
      %v3105 = vld [vmem:[#allocation4 + $0x318] sm:$0xff]
      %v3106 = vld [vmem:[#allocation4 + $0x320] sm:$0xff]
      %v3107 = vld [vmem:[#allocation4 + $0x328] sm:$0xff]
      %v3108 = vld [vmem:[#allocation4 + $0x330] sm:$0xff]
      %v3109 = vld [vmem:[#allocation4 + $0x338] sm:$0xff]
      %v3110 = vld [vmem:[#allocation4 + $0x340] sm:$0xff]
      %v3111 = vld [vmem:[#allocation4 + $0x348] sm:$0xff]
      %v3112 = vld [vmem:[#allocation4 + $0x350] sm:$0xff]
      %v3113 = vld [vmem:[#allocation4 + $0x358] sm:$0xff]
      %s3114 = scalar_lea.vmem %s1, 192
      %v3115 = vld [vmem:[%s3114] sm:$0xff]
      %v3116 = vld [vmem:[%s3114 + $0x8] sm:$0xff]
      %v3117 = vld [vmem:[%s3114 + $0x10] sm:$0xff]
      %v3118 = vld [vmem:[%s3114 + $0x18] sm:$0xff]
      %v3119 = vld [vmem:[%s3114 + $0x20] sm:$0xff]
      %v3120 = vld [vmem:[%s3114 + $0x28] sm:$0xff]
      %v3121 = vld [vmem:[%s3114 + $0x30] sm:$0xff]
      %v3122 = vld [vmem:[%s3114 + $0x38] sm:$0xff]
      %v3123 = vld [vmem:[%s3114 + $0x40] sm:$0xff]
      %v3124 = vld [vmem:[%s3114 + $0x48] sm:$0xff]
      %v3125 = vld [vmem:[%s3114 + $0x50] sm:$0xff]
      %v3126 = vld [vmem:[%s3114 + $0x58] sm:$0xff]
      %s3127 = scalar_lea.vmem %s2, 64
      %v3128 = vld [vmem:[%s3127] sm:$0xff]
      %v3129 = vld [vmem:[%s3127 + $0x8] sm:$0xff]
      %v3130 = vld [vmem:[%s3127 + $0x10] sm:$0xff]
      %v3131 = vld [vmem:[%s3127 + $0x18] sm:$0xff]
      %3133 = vset.pattern.permute.xlu0 0
      %3134 = vperm.xlu0 %3133, %v3128
      %v3135 = vpop.permute.xlu0 %3134
      %3138 = vset.pattern.permute.xlu0 0
      %3139 = vperm.xlu0 %3138, %v3129
      %v3140 = vpop.permute.xlu0 %3139
      %3143 = vset.pattern.permute.xlu0 0
      %3144 = vperm.xlu0 %3143, %v3130
      %v3145 = vpop.permute.xlu0 %3144
      %3148 = vset.pattern.permute.xlu0 0
      %3149 = vperm.xlu0 %3148, %v3131
      %v3150 = vpop.permute.xlu0 %3149
      %v3153 = vsel %vm971, %v3117, 0
      %v3156 = vsel %vm971, %v3120, 0
      %v3159 = vsel %vm971, %v3123, 0
      %v3162 = vsel %vm971, %v3126, 0
      %3164 = vmatprep.subr.mxu0 %v3007
      %3165 = vmatpush1.msra.mxu0 %v3006
      %3166 = vmatprep.subr.mxu0 %v3010
      %3167 = vmatpush1.msra.mxu0 %v3009
      %3168 = vmatprep.subr.mxu0 %v3013
      %3169 = vmatpush1.msra.mxu0 %v3012
      %3170 = vmatprep.subr.mxu0 %v3016
      %3171 = vmatpush1.msra.mxu0 %v3015
      %3172 = vmatprep.subr.mxu0 %v3019
      %3173 = vmatpush1.msra.mxu0 %v3018
      %3174 = vmatprep.subr.mxu0 %v3022
      %3175 = vmatpush1.msra.mxu0 %v3021
      %3176 = vmatprep.subr.mxu0 %v3025
      %3177 = vmatpush1.msra.mxu0 %v3024
      %3178 = vmatprep.subr.mxu0 %v3028
      %3179 = vmatpush1.msra.mxu0 %v3027
      %3180 = vmatprep.subr.mxu0 %v3031
      %3181 = vmatpush1.msra.mxu0 %v3030
      %3182 = vmatprep.subr.mxu0 %v3034
      %3183 = vmatpush1.msra.mxu0 %v3033
      %3184 = vmatprep.subr.mxu0 %v3037
      %3185 = vmatpush1.msra.mxu0 %v3036
      %3186 = vmatprep.subr.mxu0 %v3040
      %3187 = vmatpush1.msra.mxu0 %v3039
      %3188 = vmatprep.subr.mxu0 %v3043
      %3189 = vmatpush1.msra.mxu0 %v3042
      %3190 = vmatprep.subr.mxu0 %v3046
      %3191 = vmatpush1.msra.mxu0 %v3045
      %3192 = vmatprep.subr.mxu0 %v3049
      %3193 = vmatpush1.msra.mxu0 %v3048
      %3194 = vmatprep.subr.mxu0 %v3052
      %3195 = vmatpush1.msra.mxu0 %v3051
      %3196 = vmatprep.subr.mxu0 %v3055
      %3197 = vmatpush1.msra.mxu0 %v3054
      %3198 = vmatprep.subr.mxu0 %v3058
      %3199 = vmatpush1.msra.mxu0 %v3057
      %3200 = vmatprep.subr.mxu0 %v3061
      %3201 = vmatpush1.msra.mxu0 %v3060
      %3202 = vmatprep.subr.mxu0 %v3064
      %3203 = vmatpush1.msra.mxu0 %v3063
      %3204 = vmatprep.subr.mxu0 %v3067
      %3205 = vmatpush1.msra.mxu0 %v3066
      %3206 = vmatprep.subr.mxu0 %v3070
      %3207 = vmatpush1.msra.mxu0 %v3069
      %3208 = vmatprep.subr.mxu0 %v3073
      %3209 = vmatpush1.msra.mxu0 %v3072
      %3210 = vmatprep.subr.mxu0 %v3076
      %3211 = vmatpush1.msra.mxu0 %v3075
      %3212 = vmatprep.subr.mxu0 %v3079
      %3213 = vmatpush1.msra.mxu0 %v3078
      %3214 = vmatprep.subr.mxu0 %v3082
      %3215 = vmatpush1.msra.mxu0 %v3081
      %3216 = vmatprep.subr.mxu0 %v3085
      %3217 = vmatpush1.msra.mxu0 %v3084
      %3218 = vmatprep.subr.mxu0 %v3088
      %3219 = vmatpush1.msra.mxu0 %v3087
      %3220 = vmatprep.subr.mxu0 %v3091
      %3221 = vmatpush1.msra.mxu0 %v3090
      %3222 = vmatprep.subr.mxu0 %v3094
      %3223 = vmatpush1.msra.mxu0 %v3093
      %3224 = vmatprep.subr.mxu0 %v3097
      %3225 = vmatpush1.msra.mxu0 %v3096
      %3226 = vmatprep.subr.mxu0 %v3100
      %3227 = vmatpush1.msra.mxu0 %v3099
      %3228 = vmatprep.mubr.f32.mxu0 %v3116
      %3229 = vmatmul.mubr.f32.gmra.mrb[0].mxu0 %v3115
      %v3230 = vpop.f32.mrb[0].mxu0
      %v3231 = vadd.f32 %v3135, %v3230
      %v3232 = vpop.f32.mrb[0].mxu0
      %v3233 = vadd.f32 %v3135, %v3232
      %3234 = vmatprep.mubr.f32.mxu0 %v3119
      %3235 = vmatmul.mubr.f32.gmra.mrb[0].mxu0 %v3118
      %v3236 = vpop.f32.mrb[0].mxu0
      %v3237 = vadd.f32 %v3140, %v3236
      %v3238 = vpop.f32.mrb[0].mxu0
      %v3239 = vadd.f32 %v3140, %v3238
      %3240 = vmatprep.mubr.f32.mxu0 %v3122
      %3241 = vmatmul.mubr.f32.gmra.mrb[0].mxu0 %v3121
      %v3242 = vpop.f32.mrb[0].mxu0
      %v3243 = vadd.f32 %v3145, %v3242
      %v3244 = vpop.f32.mrb[0].mxu0
      %v3245 = vadd.f32 %v3145, %v3244
      %3246 = vmatprep.mubr.f32.mxu0 %v3125
      %3247 = vmatmul.mubr.f32.gmra.mrb[0].mxu0 %v3124
      %v3248 = vpop.f32.mrb[0].mxu0
      %v3249 = vadd.f32 %v3150, %v3248
      %v3250 = vpop.f32.mrb[0].mxu0
      %v3251 = vadd.f32 %v3150, %v3250
      %3252 = vdwg.mxu0
      %3253 = vmatprep.subr.mxu0 %v3103
      %3254 = vmatpush1.msra.mxu0 %v3102
      %3255 = vmatprep.subr.mxu0 %v3106
      %3256 = vmatpush1.msra.mxu0 %v3105
      %3257 = vmatprep.subr.mxu0 %v3109
      %3258 = vmatpush1.msra.mxu0 %v3108
      %3259 = vmatprep.subr.mxu0 %v3112
      %3260 = vmatpush1.msra.mxu0 %v3111
      %3261 = vmatprep.subr.mxu0 0.0
      %3262 = vmatpush1.msra.mxu0 0.0
      %3263 = vmatprep.subr.mxu0 0.0
      %3264 = vmatpush1.msra.mxu0 0.0
      %3265 = vmatprep.subr.mxu0 0.0
      %3266 = vmatpush1.msra.mxu0 0.0
      %3267 = vmatprep.subr.mxu0 0.0
      %3268 = vmatpush1.msra.mxu0 0.0
      %3269 = vmatprep.subr.mxu0 0.0
      %3270 = vmatpush1.msra.mxu0 0.0
      %3271 = vmatprep.subr.mxu0 0.0
      %3272 = vmatpush1.msra.mxu0 0.0
      %3273 = vmatprep.subr.mxu0 0.0
      %3274 = vmatpush1.msra.mxu0 0.0
      %3275 = vmatprep.subr.mxu0 0.0
      %3276 = vmatpush1.msra.mxu0 0.0
      %3277 = vmatprep.subr.mxu0 0.0
      %3278 = vmatpush1.msra.mxu0 0.0
      %3279 = vmatprep.subr.mxu0 0.0
      %3280 = vmatpush1.msra.mxu0 0.0
      %3281 = vmatprep.subr.mxu0 0.0
      %3282 = vmatpush1.msra.mxu0 0.0
      %3283 = vmatprep.subr.mxu0 0.0
      %3284 = vmatpush1.msra.mxu0 0.0
      %3285 = vmatprep.subr.mxu0 0.0
      %3286 = vmatpush1.msra.mxu0 0.0
      %3287 = vmatprep.subr.mxu0 0.0
      %3288 = vmatpush1.msra.mxu0 0.0
      %3289 = vmatprep.subr.mxu0 0.0
      %3290 = vmatpush1.msra.mxu0 0.0
      %3291 = vmatprep.subr.mxu0 0.0
      %3292 = vmatpush1.msra.mxu0 0.0
      %3293 = vmatprep.subr.mxu0 0.0
      %3294 = vmatpush1.msra.mxu0 0.0
      %3295 = vmatprep.subr.mxu0 0.0
      %3296 = vmatpush1.msra.mxu0 0.0
      %3297 = vmatprep.subr.mxu0 0.0
      %3298 = vmatpush1.msra.mxu0 0.0
      %3299 = vmatprep.subr.mxu0 0.0
      %3300 = vmatpush1.msra.mxu0 0.0
      %3301 = vmatprep.subr.mxu0 0.0
      %3302 = vmatpush1.msra.mxu0 0.0
      %3303 = vmatprep.subr.mxu0 0.0
      %3304 = vmatpush1.msra.mxu0 0.0
      %3305 = vmatprep.subr.mxu0 0.0
      %3306 = vmatpush1.msra.mxu0 0.0
      %3307 = vmatprep.subr.mxu0 0.0
      %3308 = vmatpush1.msra.mxu0 0.0
      %3309 = vmatprep.subr.mxu0 0.0
      %3310 = vmatpush1.msra.mxu0 0.0
      %3311 = vmatprep.subr.mxu0 0.0
      %3312 = vmatpush1.msra.mxu0 0.0
      %3313 = vmatprep.subr.mxu0 0.0
      %3314 = vmatpush1.msra.mxu0 0.0
      %3315 = vmatprep.subr.mxu0 0.0
      %3316 = vmatpush1.msra.mxu0 0.0
      %3317 = vmatprep.mubr.f32.mxu0 0.0
      %3318 = vmatmul.mubr.f32.gmra.mrb[0].mxu0 %v3153
      %v3319 = vpop.f32.mrb[0].mxu0
      %v3320 = vadd.f32 %v3231, %v3319
      %v3321 = vpop.f32.mrb[0].mxu0
      %v3322 = vadd.f32 %v3233, %v3321
      %3323 = vmatprep.mubr.f32.mxu0 0.0
      %3324 = vmatmul.mubr.f32.gmra.mrb[0].mxu0 %v3156
      %v3325 = vpop.f32.mrb[0].mxu0
      %v3326 = vadd.f32 %v3237, %v3325
      %v3327 = vpop.f32.mrb[0].mxu0
      %v3328 = vadd.f32 %v3239, %v3327
      %3329 = vmatprep.mubr.f32.mxu0 0.0
      %3330 = vmatmul.mubr.f32.gmra.mrb[0].mxu0 %v3159
      %v3331 = vpop.f32.mrb[0].mxu0
      %v3332 = vadd.f32 %v3243, %v3331
      %v3333 = vpop.f32.mrb[0].mxu0
      %v3334 = vadd.f32 %v3245, %v3333
      %3335 = vmatprep.mubr.f32.mxu0 0.0
      %3336 = vmatmul.mubr.f32.gmra.mrb[0].mxu0 %v3162
      %v3337 = vpop.f32.mrb[0].mxu0
      %v3338 = vadd.f32 %v3249, %v3337
      %v3339 = vpop.f32.mrb[0].mxu0
      %v3340 = vadd.f32 %v3251, %v3339
      %3341 = vdwg.mxu0
      %3342 = vmatprep.subr.mxu0 0.0
      %3343 = vmatpush1.msra.mxu0 %v3008
      %3344 = vmatprep.subr.mxu0 0.0
      %3345 = vmatpush1.msra.mxu0 %v3011
      %3346 = vmatprep.subr.mxu0 0.0
      %3347 = vmatpush1.msra.mxu0 %v3014
      %3348 = vmatprep.subr.mxu0 0.0
      %3349 = vmatpush1.msra.mxu0 %v3017
      %3350 = vmatprep.subr.mxu0 0.0
      %3351 = vmatpush1.msra.mxu0 %v3020
      %3352 = vmatprep.subr.mxu0 0.0
      %3353 = vmatpush1.msra.mxu0 %v3023
      %3354 = vmatprep.subr.mxu0 0.0
      %3355 = vmatpush1.msra.mxu0 %v3026
      %3356 = vmatprep.subr.mxu0 0.0
      %3357 = vmatpush1.msra.mxu0 %v3029
      %3358 = vmatprep.subr.mxu0 0.0
      %3359 = vmatpush1.msra.mxu0 %v3032
      %3360 = vmatprep.subr.mxu0 0.0
      %3361 = vmatpush1.msra.mxu0 %v3035
      %3362 = vmatprep.subr.mxu0 0.0
      %3363 = vmatpush1.msra.mxu0 %v3038
      %3364 = vmatprep.subr.mxu0 0.0
      %3365 = vmatpush1.msra.mxu0 %v3041
      %3366 = vmatprep.subr.mxu0 0.0
      %3367 = vmatpush1.msra.mxu0 %v3044
      %3368 = vmatprep.subr.mxu0 0.0
      %3369 = vmatpush1.msra.mxu0 %v3047
      %3370 = vmatprep.subr.mxu0 0.0
      %3371 = vmatpush1.msra.mxu0 %v3050
      %3372 = vmatprep.subr.mxu0 0.0
      %3373 = vmatpush1.msra.mxu0 %v3053
      %3374 = vmatprep.subr.mxu0 0.0
      %3375 = vmatpush1.msra.mxu0 %v3056
      %3376 = vmatprep.subr.mxu0 0.0
      %3377 = vmatpush1.msra.mxu0 %v3059
      %3378 = vmatprep.subr.mxu0 0.0
      %3379 = vmatpush1.msra.mxu0 %v3062
      %3380 = vmatprep.subr.mxu0 0.0
      %3381 = vmatpush1.msra.mxu0 %v3065
      %3382 = vmatprep.subr.mxu0 0.0
      %3383 = vmatpush1.msra.mxu0 %v3068
      %3384 = vmatprep.subr.mxu0 0.0
      %3385 = vmatpush1.msra.mxu0 %v3071
      %3386 = vmatprep.subr.mxu0 0.0
      %3387 = vmatpush1.msra.mxu0 %v3074
      %3388 = vmatprep.subr.mxu0 0.0
      %3389 = vmatpush1.msra.mxu0 %v3077
      %3390 = vmatprep.subr.mxu0 0.0
      %3391 = vmatpush1.msra.mxu0 %v3080
      %3392 = vmatprep.subr.mxu0 0.0
      %3393 = vmatpush1.msra.mxu0 %v3083
      %3394 = vmatprep.subr.mxu0 0.0
      %3395 = vmatpush1.msra.mxu0 %v3086
      %3396 = vmatprep.subr.mxu0 0.0
      %3397 = vmatpush1.msra.mxu0 %v3089
      %3398 = vmatprep.subr.mxu0 0.0
      %3399 = vmatpush1.msra.mxu0 %v3092
      %3400 = vmatprep.subr.mxu0 0.0
      %3401 = vmatpush1.msra.mxu0 %v3095
      %3402 = vmatprep.subr.mxu0 0.0
      %3403 = vmatpush1.msra.mxu0 %v3098
      %3404 = vmatprep.subr.mxu0 0.0
      %3405 = vmatpush1.msra.mxu0 %v3101
      %3406 = vmatprep.mubr.f32.mxu0 %v3116
      %3407 = vmatmul.mubr.f32.gmra.mrb[0].mxu0 %v3115
      %v3408 = vpop.f32.mrb[0].mxu0
      %v3409 = vadd.f32 %v3135, %v3408
      %v3410 = vpop.f32.mrb[0].mxu0
      %3411 = vmatprep.mubr.f32.mxu0 %v3119
      %3412 = vmatmul.mubr.f32.gmra.mrb[0].mxu0 %v3118
      %v3413 = vpop.f32.mrb[0].mxu0
      %v3414 = vadd.f32 %v3140, %v3413
      %v3415 = vpop.f32.mrb[0].mxu0
      %3416 = vmatprep.mubr.f32.mxu0 %v3122
      %3417 = vmatmul.mubr.f32.gmra.mrb[0].mxu0 %v3121
      %v3418 = vpop.f32.mrb[0].mxu0
      %v3419 = vadd.f32 %v3145, %v3418
      %v3420 = vpop.f32.mrb[0].mxu0
      %3421 = vmatprep.mubr.f32.mxu0 %v3125
      %3422 = vmatmul.mubr.f32.gmra.mrb[0].mxu0 %v3124
      %v3423 = vpop.f32.mrb[0].mxu0
      %v3424 = vadd.f32 %v3150, %v3423
      %v3425 = vpop.f32.mrb[0].mxu0
      %3426 = vdwg.mxu0
      %3427 = vmatprep.subr.mxu0 0.0
      %3428 = vmatpush1.msra.mxu0 %v3104
      %3429 = vmatprep.subr.mxu0 0.0
      %3430 = vmatpush1.msra.mxu0 %v3107
      %3431 = vmatprep.subr.mxu0 0.0
      %3432 = vmatpush1.msra.mxu0 %v3110
      %3433 = vmatprep.subr.mxu0 0.0
      %3434 = vmatpush1.msra.mxu0 %v3113
      %3435 = vmatprep.subr.mxu0 0.0
      %3436 = vmatpush1.msra.mxu0 0.0
      %3437 = vmatprep.subr.mxu0 0.0
      %3438 = vmatpush1.msra.mxu0 0.0
      %3439 = vmatprep.subr.mxu0 0.0
      %3440 = vmatpush1.msra.mxu0 0.0
      %3441 = vmatprep.subr.mxu0 0.0
      %3442 = vmatpush1.msra.mxu0 0.0
      %3443 = vmatprep.subr.mxu0 0.0
      %3444 = vmatpush1.msra.mxu0 0.0
      %3445 = vmatprep.subr.mxu0 0.0
      %3446 = vmatpush1.msra.mxu0 0.0
      %3447 = vmatprep.subr.mxu0 0.0
      %3448 = vmatpush1.msra.mxu0 0.0
      %3449 = vmatprep.subr.mxu0 0.0
      %3450 = vmatpush1.msra.mxu0 0.0
      %3451 = vmatprep.subr.mxu0 0.0
      %3452 = vmatpush1.msra.mxu0 0.0
      %3453 = vmatprep.subr.mxu0 0.0
      %3454 = vmatpush1.msra.mxu0 0.0
      %3455 = vmatprep.subr.mxu0 0.0
      %3456 = vmatpush1.msra.mxu0 0.0
      %3457 = vmatprep.subr.mxu0 0.0
      %3458 = vmatpush1.msra.mxu0 0.0
      %3459 = vmatprep.subr.mxu0 0.0
      %3460 = vmatpush1.msra.mxu0 0.0
      %3461 = vmatprep.subr.mxu0 0.0
      %3462 = vmatpush1.msra.mxu0 0.0
      %3463 = vmatprep.subr.mxu0 0.0
      %3464 = vmatpush1.msra.mxu0 0.0
      %3465 = vmatprep.subr.mxu0 0.0
      %3466 = vmatpush1.msra.mxu0 0.0
      %3467 = vmatprep.subr.mxu0 0.0
      %3468 = vmatpush1.msra.mxu0 0.0
      %3469 = vmatprep.subr.mxu0 0.0
      %3470 = vmatpush1.msra.mxu0 0.0
      %3471 = vmatprep.subr.mxu0 0.0
      %3472 = vmatpush1.msra.mxu0 0.0
      %3473 = vmatprep.subr.mxu0 0.0
      %3474 = vmatpush1.msra.mxu0 0.0
      %3475 = vmatprep.subr.mxu0 0.0
      %3476 = vmatpush1.msra.mxu0 0.0
      %3477 = vmatprep.subr.mxu0 0.0
      %3478 = vmatpush1.msra.mxu0 0.0
      %3479 = vmatprep.subr.mxu0 0.0
      %3480 = vmatpush1.msra.mxu0 0.0
      %3481 = vmatprep.subr.mxu0 0.0
      %3482 = vmatpush1.msra.mxu0 0.0
      %3483 = vmatprep.subr.mxu0 0.0
      %3484 = vmatpush1.msra.mxu0 0.0
      %3485 = vmatprep.subr.mxu0 0.0
      %3486 = vmatpush1.msra.mxu0 0.0
      %3487 = vmatprep.subr.mxu0 0.0
      %3488 = vmatpush1.msra.mxu0 0.0
      %3489 = vmatprep.subr.mxu0 0.0
      %3490 = vmatpush1.msra.mxu0 0.0
      %3491 = vmatprep.mubr.f32.mxu0 0.0
      %3492 = vmatmul.mubr.f32.gmra.mrb[0].mxu0 %v3153
      %v3493 = vpop.f32.mrb[0].mxu0
      %v3494 = vadd.f32 %v3409, %v3493
      %v3495 = vpop.f32.mrb[0].mxu0
      %3496 = vmatprep.mubr.f32.mxu0 0.0
      %3497 = vmatmul.mubr.f32.gmra.mrb[0].mxu0 %v3156
      %v3498 = vpop.f32.mrb[0].mxu0
      %v3499 = vadd.f32 %v3414, %v3498
      %v3500 = vpop.f32.mrb[0].mxu0
      %3501 = vmatprep.mubr.f32.mxu0 0.0
      %3502 = vmatmul.mubr.f32.gmra.mrb[0].mxu0 %v3159
      %v3503 = vpop.f32.mrb[0].mxu0
      %v3504 = vadd.f32 %v3419, %v3503
      %v3505 = vpop.f32.mrb[0].mxu0
      %3506 = vmatprep.mubr.f32.mxu0 0.0
      %3507 = vmatmul.mubr.f32.gmra.mrb[0].mxu0 %v3162
      %v3508 = vpop.f32.mrb[0].mxu0
      %v3509 = vadd.f32 %v3424, %v3508
      %v3510 = vpop.f32.mrb[0].mxu0
      %3511 = vdwg.mxu0
      %v3512 = vmax.f32 %v3320, 0.0
      %v3513 = vmax.f32 %v3322, 0.0
      %v3514 = vmax.f32 %v3494, 0.0
      %v3515 = vmax.f32 %v3326, 0.0
      %v3516 = vmax.f32 %v3328, 0.0
      %v3517 = vmax.f32 %v3499, 0.0
      %v3518 = vmax.f32 %v3332, 0.0
      %v3519 = vmax.f32 %v3334, 0.0
      %v3520 = vmax.f32 %v3504, 0.0
      %v3521 = vmax.f32 %v3338, 0.0
      %v3522 = vmax.f32 %v3340, 0.0
      %v3523 = vmax.f32 %v3509, 0.0
      %v3524 = vmul.f32 %v3512, %v1348
      %v3525 = vmul.f32 %v3513, %v1352
      %v3526 = vmul.f32 %v3514, %v1356
      %v3527 = vmul.f32 %v3515, %v1348
      %v3528 = vmul.f32 %v3516, %v1352
      %v3529 = vmul.f32 %v3517, %v1356
      %v3530 = vmul.f32 %v3518, %v1348
      %v3531 = vmul.f32 %v3519, %v1352
      %v3532 = vmul.f32 %v3520, %v1356
      %v3533 = vmul.f32 %v3521, %v1348
      %v3534 = vmul.f32 %v3522, %v1352
      %v3535 = vmul.f32 %v3523, %v1356
      %3548 = vrot.lane.b32.xlu0 %v3524, 19
      %v3549 = vpop.permute.xlu0 %3548
      %3550 = vrot.lane.b32.xlu0 %v3525, 19
      %v3551 = vpop.permute.xlu0 %3550
      %3552 = vrot.lane.b32.xlu0 %v3526, 19
      %v3553 = vpop.permute.xlu0 %3552
      %3554 = vrot.lane.b32.xlu0 %v3527, 19
      %v3555 = vpop.permute.xlu0 %3554
      %3556 = vrot.lane.b32.xlu0 %v3528, 19
      %v3557 = vpop.permute.xlu0 %3556
      %3558 = vrot.lane.b32.xlu0 %v3529, 19
      %v3559 = vpop.permute.xlu0 %3558
      %3560 = vrot.lane.b32.xlu0 %v3530, 19
      %v3561 = vpop.permute.xlu0 %3560
      %3562 = vrot.lane.b32.xlu0 %v3531, 19
      %v3563 = vpop.permute.xlu0 %3562
      %3564 = vrot.lane.b32.xlu0 %v3532, 19
      %v3565 = vpop.permute.xlu0 %3564
      %3566 = vrot.lane.b32.xlu0 %v3533, 19
      %v3567 = vpop.permute.xlu0 %3566
      %3568 = vrot.lane.b32.xlu0 %v3534, 19
      %v3569 = vpop.permute.xlu0 %3568
      %3570 = vrot.lane.b32.xlu0 %v3535, 19
      %v3571 = vpop.permute.xlu0 %3570
      %v3572 = vsel %vm298, %v3549, %v3551
      %v3573 = vsel %vm298, %v3551, %v3553
      %v3574 = vsel %vm298, %v3555, %v3557
      %v3575 = vsel %vm298, %v3557, %v3559
      %v3576 = vsel %vm298, %v3561, %v3563
      %v3577 = vsel %vm298, %v3563, %v3565
      %v3578 = vsel %vm298, %v3567, %v3569
      %v3579 = vsel %vm298, %v3569, %v3571
      %3592 = vst.msk [vmem:[#allocation3] sm:$0xff] %vm319, %v3549
      %3593 = vst [vmem:[#allocation3 + $0x8] sm:$0xff] %v3572
      %3594 = vst.msk [vmem:[#allocation3 + $0x10] sm:$0xff] %vm322, %v3573
      %3595 = vst.msk [vmem:[#allocation3 + $0x18] sm:$0xff] %vm319, %v3555
      %3596 = vst [vmem:[#allocation3 + $0x20] sm:$0xff] %v3574
      %3597 = vst.msk [vmem:[#allocation3 + $0x28] sm:$0xff] %vm322, %v3575
      %3598 = vst.msk [vmem:[#allocation3 + $0x30] sm:$0xff] %vm319, %v3561
      %3599 = vst [vmem:[#allocation3 + $0x38] sm:$0xff] %v3576
      %3600 = vst.msk [vmem:[#allocation3 + $0x40] sm:$0xff] %vm322, %v3577
      %3601 = vst.msk [vmem:[#allocation3 + $0x48] sm:$0xff] %vm319, %v3567
      %3602 = vst [vmem:[#allocation3 + $0x50] sm:$0xff] %v3578
      %3603 = vst.msk [vmem:[#allocation3 + $0x58] sm:$0xff] %vm322, %v3579
      %v3604 = vld [vmem:[#allocation3] sm:$0xff]
      %v3605 = vld [vmem:[#allocation3 + $0x8] sm:$0xff]
      %v3606 = vld [vmem:[#allocation3 + $0x10] sm:$0xff]
      %v3607 = vld [vmem:[#allocation3 + $0x18] sm:$0xff]
      %v3608 = vld [vmem:[#allocation3 + $0x20] sm:$0xff]
      %v3609 = vld [vmem:[#allocation3 + $0x28] sm:$0xff]
      %v3610 = vld [vmem:[#allocation3 + $0x30] sm:$0xff]
      %v3611 = vld [vmem:[#allocation3 + $0x38] sm:$0xff]
      %v3612 = vld [vmem:[#allocation3 + $0x40] sm:$0xff]
      %v3613 = vld [vmem:[#allocation3 + $0x48] sm:$0xff]
      %v3614 = vld [vmem:[#allocation3 + $0x50] sm:$0xff]
      %v3615 = vld [vmem:[#allocation3 + $0x58] sm:$0xff]
      %3616 = vst [vmem:[#allocation4] sm:$0xff] %v3604
      %3617 = vst [vmem:[#allocation4 + $0x8] sm:$0xff] %v3605
      %3618 = vst.msk [vmem:[#allocation4 + $0x10] sm:$0xff] %vm348, %v3606
      %3619 = vst [vmem:[#allocation4 + $0x18] sm:$0xff] %v3607
      %3620 = vst [vmem:[#allocation4 + $0x20] sm:$0xff] %v3608
      %3621 = vst.msk [vmem:[#allocation4 + $0x28] sm:$0xff] %vm348, %v3609
      %3622 = vst [vmem:[#allocation4 + $0x30] sm:$0xff] %v3610
      %3623 = vst [vmem:[#allocation4 + $0x38] sm:$0xff] %v3611
      %3624 = vst.msk [vmem:[#allocation4 + $0x40] sm:$0xff] %vm348, %v3612
      %3625 = vst [vmem:[#allocation4 + $0x48] sm:$0xff] %v3613
      %3626 = vst [vmem:[#allocation4 + $0x50] sm:$0xff] %v3614
      %3627 = vst.msk [vmem:[#allocation4 + $0x58] sm:$0xff] %vm348, %v3615
      %3640 = vrot.lane.b32.xlu0 %v3604, 127
      %v3641 = vpop.permute.xlu0 %3640
      %3642 = vrot.lane.b32.xlu0 %v3605, 127
      %v3643 = vpop.permute.xlu0 %3642
      %3644 = vrot.lane.b32.xlu0 %v3606, 127
      %v3645 = vpop.permute.xlu0 %3644
      %3646 = vrot.lane.b32.xlu0 %v3607, 127
      %v3647 = vpop.permute.xlu0 %3646
      %3648 = vrot.lane.b32.xlu0 %v3608, 127
      %v3649 = vpop.permute.xlu0 %3648
      %3650 = vrot.lane.b32.xlu0 %v3609, 127
      %v3651 = vpop.permute.xlu0 %3650
      %3652 = vrot.lane.b32.xlu0 %v3610, 127
      %v3653 = vpop.permute.xlu0 %3652
      %3654 = vrot.lane.b32.xlu0 %v3611, 127
      %v3655 = vpop.permute.xlu0 %3654
      %3656 = vrot.lane.b32.xlu0 %v3612, 127
      %v3657 = vpop.permute.xlu0 %3656
      %3658 = vrot.lane.b32.xlu0 %v3613, 127
      %v3659 = vpop.permute.xlu0 %3658
      %3660 = vrot.lane.b32.xlu0 %v3614, 127
      %v3661 = vpop.permute.xlu0 %3660
      %3662 = vrot.lane.b32.xlu0 %v3615, 127
      %v3663 = vpop.permute.xlu0 %3662
      %v3664 = vsel %vm395, %v3641, %v3643
      %v3665 = vsel %vm395, %v3643, %v3645
      %v3666 = vsel %vm395, %v3647, %v3649
      %v3667 = vsel %vm395, %v3649, %v3651
      %v3668 = vsel %vm395, %v3653, %v3655
      %v3669 = vsel %vm395, %v3655, %v3657
      %v3670 = vsel %vm395, %v3659, %v3661
      %v3671 = vsel %vm395, %v3661, %v3663
      %3684 = vst [vmem:[#allocation4 + $0x60] sm:$0xff] %v3664
      %3685 = vst [vmem:[#allocation4 + $0x68] sm:$0xff] %v3665
      %3686 = vst.msk [vmem:[#allocation4 + $0x70] sm:$0xff] %vm348, %v3645
      %3687 = vst [vmem:[#allocation4 + $0x78] sm:$0xff] %v3666
      %3688 = vst [vmem:[#allocation4 + $0x80] sm:$0xff] %v3667
      %3689 = vst.msk [vmem:[#allocation4 + $0x88] sm:$0xff] %vm348, %v3651
      %3690 = vst [vmem:[#allocation4 + $0x90] sm:$0xff] %v3668
      %3691 = vst [vmem:[#allocation4 + $0x98] sm:$0xff] %v3669
      %3692 = vst.msk [vmem:[#allocation4 + $0xa0] sm:$0xff] %vm348, %v3657
      %3693 = vst [vmem:[#allocation4 + $0xa8] sm:$0xff] %v3670
      %3694 = vst [vmem:[#allocation4 + $0xb0] sm:$0xff] %v3671
      %3695 = vst.msk [vmem:[#allocation4 + $0xb8] sm:$0xff] %vm348, %v3663
      %3696 = vrot.lane.b32.xlu0 %v3604, 126
      %v3697 = vpop.permute.xlu0 %3696
      %3698 = vrot.lane.b32.xlu0 %v3605, 126
      %v3699 = vpop.permute.xlu0 %3698
      %3700 = vrot.lane.b32.xlu0 %v3606, 126
      %v3701 = vpop.permute.xlu0 %3700
      %3702 = vrot.lane.b32.xlu0 %v3607, 126
      %v3703 = vpop.permute.xlu0 %3702
      %3704 = vrot.lane.b32.xlu0 %v3608, 126
      %v3705 = vpop.permute.xlu0 %3704
      %3706 = vrot.lane.b32.xlu0 %v3609, 126
      %v3707 = vpop.permute.xlu0 %3706
      %3708 = vrot.lane.b32.xlu0 %v3610, 126
      %v3709 = vpop.permute.xlu0 %3708
      %3710 = vrot.lane.b32.xlu0 %v3611, 126
      %v3711 = vpop.permute.xlu0 %3710
      %3712 = vrot.lane.b32.xlu0 %v3612, 126
      %v3713 = vpop.permute.xlu0 %3712
      %3714 = vrot.lane.b32.xlu0 %v3613, 126
      %v3715 = vpop.permute.xlu0 %3714
      %3716 = vrot.lane.b32.xlu0 %v3614, 126
      %v3717 = vpop.permute.xlu0 %3716
      %3718 = vrot.lane.b32.xlu0 %v3615, 126
      %v3719 = vpop.permute.xlu0 %3718
      %v3720 = vsel %vm452, %v3697, %v3699
      %v3721 = vsel %vm452, %v3699, %v3701
      %v3722 = vsel %vm452, %v3703, %v3705
      %v3723 = vsel %vm452, %v3705, %v3707
      %v3724 = vsel %vm452, %v3709, %v3711
      %v3725 = vsel %vm452, %v3711, %v3713
      %v3726 = vsel %vm452, %v3715, %v3717
      %v3727 = vsel %vm452, %v3717, %v3719
      %3740 = vst [vmem:[#allocation4 + $0xc0] sm:$0xff] %v3720
      %3741 = vst [vmem:[#allocation4 + $0xc8] sm:$0xff] %v3721
      %3742 = vst.msk [vmem:[#allocation4 + $0xd0] sm:$0xff] %vm348, %v3701
      %3743 = vst [vmem:[#allocation4 + $0xd8] sm:$0xff] %v3722
      %3744 = vst [vmem:[#allocation4 + $0xe0] sm:$0xff] %v3723
      %3745 = vst.msk [vmem:[#allocation4 + $0xe8] sm:$0xff] %vm348, %v3707
      %3746 = vst [vmem:[#allocation4 + $0xf0] sm:$0xff] %v3724
      %3747 = vst [vmem:[#allocation4 + $0xf8] sm:$0xff] %v3725
      %3748 = vst.msk [vmem:[#allocation4 + $0x100] sm:$0xff] %vm348, %v3713
      %3749 = vst [vmem:[#allocation4 + $0x108] sm:$0xff] %v3726
      %3750 = vst [vmem:[#allocation4 + $0x110] sm:$0xff] %v3727
      %3751 = vst.msk [vmem:[#allocation4 + $0x118] sm:$0xff] %vm348, %v3719
      %3752 = vrot.lane.b32.xlu0 %v3604, 110
      %v3753 = vpop.permute.xlu0 %3752
      %3754 = vrot.lane.b32.xlu0 %v3605, 110
      %v3755 = vpop.permute.xlu0 %3754
      %3756 = vrot.lane.b32.xlu0 %v3606, 110
      %v3757 = vpop.permute.xlu0 %3756
      %3758 = vrot.lane.b32.xlu0 %v3607, 110
      %v3759 = vpop.permute.xlu0 %3758
      %3760 = vrot.lane.b32.xlu0 %v3608, 110
      %v3761 = vpop.permute.xlu0 %3760
      %3762 = vrot.lane.b32.xlu0 %v3609, 110
      %v3763 = vpop.permute.xlu0 %3762
      %3764 = vrot.lane.b32.xlu0 %v3610, 110
      %v3765 = vpop.permute.xlu0 %3764
      %3766 = vrot.lane.b32.xlu0 %v3611, 110
      %v3767 = vpop.permute.xlu0 %3766
      %3768 = vrot.lane.b32.xlu0 %v3612, 110
      %v3769 = vpop.permute.xlu0 %3768
      %3770 = vrot.lane.b32.xlu0 %v3613, 110
      %v3771 = vpop.permute.xlu0 %3770
      %3772 = vrot.lane.b32.xlu0 %v3614, 110
      %v3773 = vpop.permute.xlu0 %3772
      %3774 = vrot.lane.b32.xlu0 %v3615, 110
      %v3775 = vpop.permute.xlu0 %3774
      %v3776 = vsel %vm509, %v3753, %v3755
      %v3777 = vsel %vm509, %v3755, %v3757
      %v3778 = vsel %vm509, %v3759, %v3761
      %v3779 = vsel %vm509, %v3761, %v3763
      %v3780 = vsel %vm509, %v3765, %v3767
      %v3781 = vsel %vm509, %v3767, %v3769
      %v3782 = vsel %vm509, %v3771, %v3773
      %v3783 = vsel %vm509, %v3773, %v3775
      %3796 = vst [vmem:[#allocation4 + $0x120] sm:$0xff] %v3776
      %3797 = vst [vmem:[#allocation4 + $0x128] sm:$0xff] %v3777
      %3798 = vst.msk [vmem:[#allocation4 + $0x130] sm:$0xff] %vm348, %v3757
      %3799 = vst [vmem:[#allocation4 + $0x138] sm:$0xff] %v3778
      %3800 = vst [vmem:[#allocation4 + $0x140] sm:$0xff] %v3779
      %3801 = vst.msk [vmem:[#allocation4 + $0x148] sm:$0xff] %vm348, %v3763
      %3802 = vst [vmem:[#allocation4 + $0x150] sm:$0xff] %v3780
      %3803 = vst [vmem:[#allocation4 + $0x158] sm:$0xff] %v3781
      %3804 = vst.msk [vmem:[#allocation4 + $0x160] sm:$0xff] %vm348, %v3769
      %3805 = vst [vmem:[#allocation4 + $0x168] sm:$0xff] %v3782
      %3806 = vst [vmem:[#allocation4 + $0x170] sm:$0xff] %v3783
      %3807 = vst.msk [vmem:[#allocation4 + $0x178] sm:$0xff] %vm348, %v3775
      %3808 = vrot.lane.b32.xlu0 %v3604, 109
      %v3809 = vpop.permute.xlu0 %3808
      %3810 = vrot.lane.b32.xlu0 %v3605, 109
      %v3811 = vpop.permute.xlu0 %3810
      %3812 = vrot.lane.b32.xlu0 %v3606, 109
      %v3813 = vpop.permute.xlu0 %3812
      %3814 = vrot.lane.b32.xlu0 %v3607, 109
      %v3815 = vpop.permute.xlu0 %3814
      %3816 = vrot.lane.b32.xlu0 %v3608, 109
      %v3817 = vpop.permute.xlu0 %3816
      %3818 = vrot.lane.b32.xlu0 %v3609, 109
      %v3819 = vpop.permute.xlu0 %3818
      %3820 = vrot.lane.b32.xlu0 %v3610, 109
      %v3821 = vpop.permute.xlu0 %3820
      %3822 = vrot.lane.b32.xlu0 %v3611, 109
      %v3823 = vpop.permute.xlu0 %3822
      %3824 = vrot.lane.b32.xlu0 %v3612, 109
      %v3825 = vpop.permute.xlu0 %3824
      %3826 = vrot.lane.b32.xlu0 %v3613, 109
      %v3827 = vpop.permute.xlu0 %3826
      %3828 = vrot.lane.b32.xlu0 %v3614, 109
      %v3829 = vpop.permute.xlu0 %3828
      %3830 = vrot.lane.b32.xlu0 %v3615, 109
      %v3831 = vpop.permute.xlu0 %3830
      %v3832 = vsel %vm566, %v3809, %v3811
      %v3833 = vsel %vm566, %v3811, %v3813
      %v3834 = vsel %vm566, %v3815, %v3817
      %v3835 = vsel %vm566, %v3817, %v3819
      %v3836 = vsel %vm566, %v3821, %v3823
      %v3837 = vsel %vm566, %v3823, %v3825
      %v3838 = vsel %vm566, %v3827, %v3829
      %v3839 = vsel %vm566, %v3829, %v3831
      %3852 = vst [vmem:[#allocation4 + $0x180] sm:$0xff] %v3832
      %3853 = vst [vmem:[#allocation4 + $0x188] sm:$0xff] %v3833
      %3854 = vst.msk [vmem:[#allocation4 + $0x190] sm:$0xff] %vm348, %v3813
      %3855 = vst [vmem:[#allocation4 + $0x198] sm:$0xff] %v3834
      %3856 = vst [vmem:[#allocation4 + $0x1a0] sm:$0xff] %v3835
      %3857 = vst.msk [vmem:[#allocation4 + $0x1a8] sm:$0xff] %vm348, %v3819
      %3858 = vst [vmem:[#allocation4 + $0x1b0] sm:$0xff] %v3836
      %3859 = vst [vmem:[#allocation4 + $0x1b8] sm:$0xff] %v3837
      %3860 = vst.msk [vmem:[#allocation4 + $0x1c0] sm:$0xff] %vm348, %v3825
      %3861 = vst [vmem:[#allocation4 + $0x1c8] sm:$0xff] %v3838
      %3862 = vst [vmem:[#allocation4 + $0x1d0] sm:$0xff] %v3839
      %3863 = vst.msk [vmem:[#allocation4 + $0x1d8] sm:$0xff] %vm348, %v3831
      %3864 = vrot.lane.b32.xlu0 %v3604, 108
      %v3865 = vpop.permute.xlu0 %3864
      %3866 = vrot.lane.b32.xlu0 %v3605, 108
      %v3867 = vpop.permute.xlu0 %3866
      %3868 = vrot.lane.b32.xlu0 %v3606, 108
      %v3869 = vpop.permute.xlu0 %3868
      %3870 = vrot.lane.b32.xlu0 %v3607, 108
      %v3871 = vpop.permute.xlu0 %3870
      %3872 = vrot.lane.b32.xlu0 %v3608, 108
      %v3873 = vpop.permute.xlu0 %3872
      %3874 = vrot.lane.b32.xlu0 %v3609, 108
      %v3875 = vpop.permute.xlu0 %3874
      %3876 = vrot.lane.b32.xlu0 %v3610, 108
      %v3877 = vpop.permute.xlu0 %3876
      %3878 = vrot.lane.b32.xlu0 %v3611, 108
      %v3879 = vpop.permute.xlu0 %3878
      %3880 = vrot.lane.b32.xlu0 %v3612, 108
      %v3881 = vpop.permute.xlu0 %3880
      %3882 = vrot.lane.b32.xlu0 %v3613, 108
      %v3883 = vpop.permute.xlu0 %3882
      %3884 = vrot.lane.b32.xlu0 %v3614, 108
      %v3885 = vpop.permute.xlu0 %3884
      %3886 = vrot.lane.b32.xlu0 %v3615, 108
      %v3887 = vpop.permute.xlu0 %3886
      %v3888 = vsel %vm623, %v3865, %v3867
      %v3889 = vsel %vm623, %v3867, %v3869
      %v3890 = vsel %vm623, %v3871, %v3873
      %v3891 = vsel %vm623, %v3873, %v3875
      %v3892 = vsel %vm623, %v3877, %v3879
      %v3893 = vsel %vm623, %v3879, %v3881
      %v3894 = vsel %vm623, %v3883, %v3885
      %v3895 = vsel %vm623, %v3885, %v3887
      %3908 = vst [vmem:[#allocation4 + $0x1e0] sm:$0xff] %v3888
      %3909 = vst [vmem:[#allocation4 + $0x1e8] sm:$0xff] %v3889
      %3910 = vst.msk [vmem:[#allocation4 + $0x1f0] sm:$0xff] %vm348, %v3869
      %3911 = vst [vmem:[#allocation4 + $0x1f8] sm:$0xff] %v3890
      %3912 = vst [vmem:[#allocation4 + $0x200] sm:$0xff] %v3891
      %3913 = vst.msk [vmem:[#allocation4 + $0x208] sm:$0xff] %vm348, %v3875
      %3914 = vst [vmem:[#allocation4 + $0x210] sm:$0xff] %v3892
      %3915 = vst [vmem:[#allocation4 + $0x218] sm:$0xff] %v3893
      %3916 = vst.msk [vmem:[#allocation4 + $0x220] sm:$0xff] %vm348, %v3881
      %3917 = vst [vmem:[#allocation4 + $0x228] sm:$0xff] %v3894
      %3918 = vst [vmem:[#allocation4 + $0x230] sm:$0xff] %v3895
      %3919 = vst.msk [vmem:[#allocation4 + $0x238] sm:$0xff] %vm348, %v3887
      %3920 = vrot.lane.b32.xlu0 %v3604, 92
      %v3921 = vpop.permute.xlu0 %3920
      %3922 = vrot.lane.b32.xlu0 %v3605, 92
      %v3923 = vpop.permute.xlu0 %3922
      %3924 = vrot.lane.b32.xlu0 %v3606, 92
      %v3925 = vpop.permute.xlu0 %3924
      %3926 = vrot.lane.b32.xlu0 %v3607, 92
      %v3927 = vpop.permute.xlu0 %3926
      %3928 = vrot.lane.b32.xlu0 %v3608, 92
      %v3929 = vpop.permute.xlu0 %3928
      %3930 = vrot.lane.b32.xlu0 %v3609, 92
      %v3931 = vpop.permute.xlu0 %3930
      %3932 = vrot.lane.b32.xlu0 %v3610, 92
      %v3933 = vpop.permute.xlu0 %3932
      %3934 = vrot.lane.b32.xlu0 %v3611, 92
      %v3935 = vpop.permute.xlu0 %3934
      %3936 = vrot.lane.b32.xlu0 %v3612, 92
      %v3937 = vpop.permute.xlu0 %3936
      %3938 = vrot.lane.b32.xlu0 %v3613, 92
      %v3939 = vpop.permute.xlu0 %3938
      %3940 = vrot.lane.b32.xlu0 %v3614, 92
      %v3941 = vpop.permute.xlu0 %3940
      %3942 = vrot.lane.b32.xlu0 %v3615, 92
      %v3943 = vpop.permute.xlu0 %3942
      %v3944 = vsel %vm680, %v3921, %v3923
      %v3945 = vsel %vm680, %v3923, %v3925
      %v3946 = vsel %vm680, %v3927, %v3929
      %v3947 = vsel %vm680, %v3929, %v3931
      %v3948 = vsel %vm680, %v3933, %v3935
      %v3949 = vsel %vm680, %v3935, %v3937
      %v3950 = vsel %vm680, %v3939, %v3941
      %v3951 = vsel %vm680, %v3941, %v3943
      %3964 = vst [vmem:[#allocation4 + $0x240] sm:$0xff] %v3944
      %3965 = vst [vmem:[#allocation4 + $0x248] sm:$0xff] %v3945
      %3966 = vst.msk [vmem:[#allocation4 + $0x250] sm:$0xff] %vm348, %v3925
      %3967 = vst [vmem:[#allocation4 + $0x258] sm:$0xff] %v3946
      %3968 = vst [vmem:[#allocation4 + $0x260] sm:$0xff] %v3947
      %3969 = vst.msk [vmem:[#allocation4 + $0x268] sm:$0xff] %vm348, %v3931
      %3970 = vst [vmem:[#allocation4 + $0x270] sm:$0xff] %v3948
      %3971 = vst [vmem:[#allocation4 + $0x278] sm:$0xff] %v3949
      %3972 = vst.msk [vmem:[#allocation4 + $0x280] sm:$0xff] %vm348, %v3937
      %3973 = vst [vmem:[#allocation4 + $0x288] sm:$0xff] %v3950
      %3974 = vst [vmem:[#allocation4 + $0x290] sm:$0xff] %v3951
      %3975 = vst.msk [vmem:[#allocation4 + $0x298] sm:$0xff] %vm348, %v3943
      %3976 = vrot.lane.b32.xlu0 %v3604, 91
      %v3977 = vpop.permute.xlu0 %3976
      %3978 = vrot.lane.b32.xlu0 %v3605, 91
      %v3979 = vpop.permute.xlu0 %3978
      %3980 = vrot.lane.b32.xlu0 %v3606, 91
      %v3981 = vpop.permute.xlu0 %3980
      %3982 = vrot.lane.b32.xlu0 %v3607, 91
      %v3983 = vpop.permute.xlu0 %3982
      %3984 = vrot.lane.b32.xlu0 %v3608, 91
      %v3985 = vpop.permute.xlu0 %3984
      %3986 = vrot.lane.b32.xlu0 %v3609, 91
      %v3987 = vpop.permute.xlu0 %3986
      %3988 = vrot.lane.b32.xlu0 %v3610, 91
      %v3989 = vpop.permute.xlu0 %3988
      %3990 = vrot.lane.b32.xlu0 %v3611, 91
      %v3991 = vpop.permute.xlu0 %3990
      %3992 = vrot.lane.b32.xlu0 %v3612, 91
      %v3993 = vpop.permute.xlu0 %3992
      %3994 = vrot.lane.b32.xlu0 %v3613, 91
      %v3995 = vpop.permute.xlu0 %3994
      %3996 = vrot.lane.b32.xlu0 %v3614, 91
      %v3997 = vpop.permute.xlu0 %3996
      %3998 = vrot.lane.b32.xlu0 %v3615, 91
      %v3999 = vpop.permute.xlu0 %3998
      %v4000 = vsel %vm737, %v3977, %v3979
      %v4001 = vsel %vm737, %v3979, %v3981
      %v4002 = vsel %vm737, %v3983, %v3985
      %v4003 = vsel %vm737, %v3985, %v3987
      %v4004 = vsel %vm737, %v3989, %v3991
      %v4005 = vsel %vm737, %v3991, %v3993
      %v4006 = vsel %vm737, %v3995, %v3997
      %v4007 = vsel %vm737, %v3997, %v3999
      %4020 = vst [vmem:[#allocation4 + $0x2a0] sm:$0xff] %v4000
      %4021 = vst [vmem:[#allocation4 + $0x2a8] sm:$0xff] %v4001
      %4022 = vst.msk [vmem:[#allocation4 + $0x2b0] sm:$0xff] %vm348, %v3981
      %4023 = vst [vmem:[#allocation4 + $0x2b8] sm:$0xff] %v4002
      %4024 = vst [vmem:[#allocation4 + $0x2c0] sm:$0xff] %v4003
      %4025 = vst.msk [vmem:[#allocation4 + $0x2c8] sm:$0xff] %vm348, %v3987
      %4026 = vst [vmem:[#allocation4 + $0x2d0] sm:$0xff] %v4004
      %4027 = vst [vmem:[#allocation4 + $0x2d8] sm:$0xff] %v4005
      %4028 = vst.msk [vmem:[#allocation4 + $0x2e0] sm:$0xff] %vm348, %v3993
      %4029 = vst [vmem:[#allocation4 + $0x2e8] sm:$0xff] %v4006
      %4030 = vst [vmem:[#allocation4 + $0x2f0] sm:$0xff] %v4007
      %4031 = vst.msk [vmem:[#allocation4 + $0x2f8] sm:$0xff] %vm348, %v3999
      %4032 = vrot.lane.b32.xlu0 %v3604, 90
      %v4033 = vpop.permute.xlu0 %4032
      %4034 = vrot.lane.b32.xlu0 %v3605, 90
      %v4035 = vpop.permute.xlu0 %4034
      %4036 = vrot.lane.b32.xlu0 %v3606, 90
      %v4037 = vpop.permute.xlu0 %4036
      %4038 = vrot.lane.b32.xlu0 %v3607, 90
      %v4039 = vpop.permute.xlu0 %4038
      %4040 = vrot.lane.b32.xlu0 %v3608, 90
      %v4041 = vpop.permute.xlu0 %4040
      %4042 = vrot.lane.b32.xlu0 %v3609, 90
      %v4043 = vpop.permute.xlu0 %4042
      %4044 = vrot.lane.b32.xlu0 %v3610, 90
      %v4045 = vpop.permute.xlu0 %4044
      %4046 = vrot.lane.b32.xlu0 %v3611, 90
      %v4047 = vpop.permute.xlu0 %4046
      %4048 = vrot.lane.b32.xlu0 %v3612, 90
      %v4049 = vpop.permute.xlu0 %4048
      %4050 = vrot.lane.b32.xlu0 %v3613, 90
      %v4051 = vpop.permute.xlu0 %4050
      %4052 = vrot.lane.b32.xlu0 %v3614, 90
      %v4053 = vpop.permute.xlu0 %4052
      %4054 = vrot.lane.b32.xlu0 %v3615, 90
      %v4055 = vpop.permute.xlu0 %4054
      %v4056 = vsel %vm794, %v4033, %v4035
      %v4057 = vsel %vm794, %v4035, %v4037
      %v4058 = vsel %vm794, %v4039, %v4041
      %v4059 = vsel %vm794, %v4041, %v4043
      %v4060 = vsel %vm794, %v4045, %v4047
      %v4061 = vsel %vm794, %v4047, %v4049
      %v4062 = vsel %vm794, %v4051, %v4053
      %v4063 = vsel %vm794, %v4053, %v4055
      %4076 = vst [vmem:[#allocation4 + $0x300] sm:$0xff] %v4056
      %4077 = vst [vmem:[#allocation4 + $0x308] sm:$0xff] %v4057
      %4078 = vst.msk [vmem:[#allocation4 + $0x310] sm:$0xff] %vm348, %v4037
      %4079 = vst [vmem:[#allocation4 + $0x318] sm:$0xff] %v4058
      %4080 = vst [vmem:[#allocation4 + $0x320] sm:$0xff] %v4059
      %4081 = vst.msk [vmem:[#allocation4 + $0x328] sm:$0xff] %vm348, %v4043
      %4082 = vst [vmem:[#allocation4 + $0x330] sm:$0xff] %v4060
      %4083 = vst [vmem:[#allocation4 + $0x338] sm:$0xff] %v4061
      %4084 = vst.msk [vmem:[#allocation4 + $0x340] sm:$0xff] %vm348, %v4049
      %4085 = vst [vmem:[#allocation4 + $0x348] sm:$0xff] %v4062
      %4086 = vst [vmem:[#allocation4 + $0x350] sm:$0xff] %v4063
      %4087 = vst.msk [vmem:[#allocation4 + $0x358] sm:$0xff] %vm348, %v4055
      %v4088 = vld [vmem:[#allocation4] sm:$0xff]
      %v4089 = vld [vmem:[#allocation4 + $0x8] sm:$0xff]
      %v4090 = vld [vmem:[#allocation4 + $0x10] sm:$0xff]
      %v4091 = vld [vmem:[#allocation4 + $0x18] sm:$0xff]
      %v4092 = vld [vmem:[#allocation4 + $0x20] sm:$0xff]
      %v4093 = vld [vmem:[#allocation4 + $0x28] sm:$0xff]
      %v4094 = vld [vmem:[#allocation4 + $0x30] sm:$0xff]
      %v4095 = vld [vmem:[#allocation4 + $0x38] sm:$0xff]
      %v4096 = vld [vmem:[#allocation4 + $0x40] sm:$0xff]
      %v4097 = vld [vmem:[#allocation4 + $0x48] sm:$0xff]
      %v4098 = vld [vmem:[#allocation4 + $0x50] sm:$0xff]
      %v4099 = vld [vmem:[#allocation4 + $0x58] sm:$0xff]
      %v4100 = vld [vmem:[#allocation4 + $0x60] sm:$0xff]
      %v4101 = vld [vmem:[#allocation4 + $0x68] sm:$0xff]
      %v4102 = vld [vmem:[#allocation4 + $0x70] sm:$0xff]
      %v4103 = vld [vmem:[#allocation4 + $0x78] sm:$0xff]
      %v4104 = vld [vmem:[#allocation4 + $0x80] sm:$0xff]
      %v4105 = vld [vmem:[#allocation4 + $0x88] sm:$0xff]
      %v4106 = vld [vmem:[#allocation4 + $0x90] sm:$0xff]
      %v4107 = vld [vmem:[#allocation4 + $0x98] sm:$0xff]
      %v4108 = vld [vmem:[#allocation4 + $0xa0] sm:$0xff]
      %v4109 = vld [vmem:[#allocation4 + $0xa8] sm:$0xff]
      %v4110 = vld [vmem:[#allocation4 + $0xb0] sm:$0xff]
      %v4111 = vld [vmem:[#allocation4 + $0xb8] sm:$0xff]
      %v4112 = vld [vmem:[#allocation4 + $0xc0] sm:$0xff]
      %v4113 = vld [vmem:[#allocation4 + $0xc8] sm:$0xff]
      %v4114 = vld [vmem:[#allocation4 + $0xd0] sm:$0xff]
      %v4115 = vld [vmem:[#allocation4 + $0xd8] sm:$0xff]
      %v4116 = vld [vmem:[#allocation4 + $0xe0] sm:$0xff]
      %v4117 = vld [vmem:[#allocation4 + $0xe8] sm:$0xff]
      %v4118 = vld [vmem:[#allocation4 + $0xf0] sm:$0xff]
      %v4119 = vld [vmem:[#allocation4 + $0xf8] sm:$0xff]
      %v4120 = vld [vmem:[#allocation4 + $0x100] sm:$0xff]
      %v4121 = vld [vmem:[#allocation4 + $0x108] sm:$0xff]
      %v4122 = vld [vmem:[#allocation4 + $0x110] sm:$0xff]
      %v4123 = vld [vmem:[#allocation4 + $0x118] sm:$0xff]
      %v4124 = vld [vmem:[#allocation4 + $0x120] sm:$0xff]
      %v4125 = vld [vmem:[#allocation4 + $0x128] sm:$0xff]
      %v4126 = vld [vmem:[#allocation4 + $0x130] sm:$0xff]
      %v4127 = vld [vmem:[#allocation4 + $0x138] sm:$0xff]
      %v4128 = vld [vmem:[#allocation4 + $0x140] sm:$0xff]
      %v4129 = vld [vmem:[#allocation4 + $0x148] sm:$0xff]
      %v4130 = vld [vmem:[#allocation4 + $0x150] sm:$0xff]
      %v4131 = vld [vmem:[#allocation4 + $0x158] sm:$0xff]
      %v4132 = vld [vmem:[#allocation4 + $0x160] sm:$0xff]
      %v4133 = vld [vmem:[#allocation4 + $0x168] sm:$0xff]
      %v4134 = vld [vmem:[#allocation4 + $0x170] sm:$0xff]
      %v4135 = vld [vmem:[#allocation4 + $0x178] sm:$0xff]
      %v4136 = vld [vmem:[#allocation4 + $0x180] sm:$0xff]
      %v4137 = vld [vmem:[#allocation4 + $0x188] sm:$0xff]
      %v4138 = vld [vmem:[#allocation4 + $0x190] sm:$0xff]
      %v4139 = vld [vmem:[#allocation4 + $0x198] sm:$0xff]
      %v4140 = vld [vmem:[#allocation4 + $0x1a0] sm:$0xff]
      %v4141 = vld [vmem:[#allocation4 + $0x1a8] sm:$0xff]
      %v4142 = vld [vmem:[#allocation4 + $0x1b0] sm:$0xff]
      %v4143 = vld [vmem:[#allocation4 + $0x1b8] sm:$0xff]
      %v4144 = vld [vmem:[#allocation4 + $0x1c0] sm:$0xff]
      %v4145 = vld [vmem:[#allocation4 + $0x1c8] sm:$0xff]
      %v4146 = vld [vmem:[#allocation4 + $0x1d0] sm:$0xff]
      %v4147 = vld [vmem:[#allocation4 + $0x1d8] sm:$0xff]
      %v4148 = vld [vmem:[#allocation4 + $0x1e0] sm:$0xff]
      %v4149 = vld [vmem:[#allocation4 + $0x1e8] sm:$0xff]
      %v4150 = vld [vmem:[#allocation4 + $0x1f0] sm:$0xff]
      %v4151 = vld [vmem:[#allocation4 + $0x1f8] sm:$0xff]
      %v4152 = vld [vmem:[#allocation4 + $0x200] sm:$0xff]
      %v4153 = vld [vmem:[#allocation4 + $0x208] sm:$0xff]
      %v4154 = vld [vmem:[#allocation4 + $0x210] sm:$0xff]
      %v4155 = vld [vmem:[#allocation4 + $0x218] sm:$0xff]
      %v4156 = vld [vmem:[#allocation4 + $0x220] sm:$0xff]
      %v4157 = vld [vmem:[#allocation4 + $0x228] sm:$0xff]
      %v4158 = vld [vmem:[#allocation4 + $0x230] sm:$0xff]
      %v4159 = vld [vmem:[#allocation4 + $0x238] sm:$0xff]
      %v4160 = vld [vmem:[#allocation4 + $0x240] sm:$0xff]
      %v4161 = vld [vmem:[#allocation4 + $0x248] sm:$0xff]
      %v4162 = vld [vmem:[#allocation4 + $0x250] sm:$0xff]
      %v4163 = vld [vmem:[#allocation4 + $0x258] sm:$0xff]
      %v4164 = vld [vmem:[#allocation4 + $0x260] sm:$0xff]
      %v4165 = vld [vmem:[#allocation4 + $0x268] sm:$0xff]
      %v4166 = vld [vmem:[#allocation4 + $0x270] sm:$0xff]
      %v4167 = vld [vmem:[#allocation4 + $0x278] sm:$0xff]
      %v4168 = vld [vmem:[#allocation4 + $0x280] sm:$0xff]
      %v4169 = vld [vmem:[#allocation4 + $0x288] sm:$0xff]
      %v4170 = vld [vmem:[#allocation4 + $0x290] sm:$0xff]
      %v4171 = vld [vmem:[#allocation4 + $0x298] sm:$0xff]
      %v4172 = vld [vmem:[#allocation4 + $0x2a0] sm:$0xff]
      %v4173 = vld [vmem:[#allocation4 + $0x2a8] sm:$0xff]
      %v4174 = vld [vmem:[#allocation4 + $0x2b0] sm:$0xff]
      %v4175 = vld [vmem:[#allocation4 + $0x2b8] sm:$0xff]
      %v4176 = vld [vmem:[#allocation4 + $0x2c0] sm:$0xff]
      %v4177 = vld [vmem:[#allocation4 + $0x2c8] sm:$0xff]
      %v4178 = vld [vmem:[#allocation4 + $0x2d0] sm:$0xff]
      %v4179 = vld [vmem:[#allocation4 + $0x2d8] sm:$0xff]
      %v4180 = vld [vmem:[#allocation4 + $0x2e0] sm:$0xff]
      %v4181 = vld [vmem:[#allocation4 + $0x2e8] sm:$0xff]
      %v4182 = vld [vmem:[#allocation4 + $0x2f0] sm:$0xff]
      %v4183 = vld [vmem:[#allocation4 + $0x2f8] sm:$0xff]
      %v4184 = vld [vmem:[#allocation4 + $0x300] sm:$0xff]
      %v4185 = vld [vmem:[#allocation4 + $0x308] sm:$0xff]
      %v4186 = vld [vmem:[#allocation4 + $0x310] sm:$0xff]
      %v4187 = vld [vmem:[#allocation4 + $0x318] sm:$0xff]
      %v4188 = vld [vmem:[#allocation4 + $0x320] sm:$0xff]
      %v4189 = vld [vmem:[#allocation4 + $0x328] sm:$0xff]
      %v4190 = vld [vmem:[#allocation4 + $0x330] sm:$0xff]
      %v4191 = vld [vmem:[#allocation4 + $0x338] sm:$0xff]
      %v4192 = vld [vmem:[#allocation4 + $0x340] sm:$0xff]
      %v4193 = vld [vmem:[#allocation4 + $0x348] sm:$0xff]
      %v4194 = vld [vmem:[#allocation4 + $0x350] sm:$0xff]
      %v4195 = vld [vmem:[#allocation4 + $0x358] sm:$0xff]
      %v4196 = vld [vmem:[%s3] sm:$0xff]
      %v4197 = vld [vmem:[%s3 + $0x8] sm:$0xf]
      %v4200 = vcombine.high %v4196, %v4196
      %v4202 = vsel %vm971, %v4197, 0
      %4204 = vmatprep.subr.mxu0 %v4089
      %4205 = vmatpush1.msra.mxu0 %v4088
      %4206 = vmatprep.subr.mxu0 %v4092
      %4207 = vmatpush1.msra.mxu0 %v4091
      %4208 = vmatprep.subr.mxu0 %v4095
      %4209 = vmatpush1.msra.mxu0 %v4094
      %4210 = vmatprep.subr.mxu0 %v4098
      %4211 = vmatpush1.msra.mxu0 %v4097
      %4212 = vmatprep.subr.mxu0 %v4101
      %4213 = vmatpush1.msra.mxu0 %v4100
      %4214 = vmatprep.subr.mxu0 %v4104
      %4215 = vmatpush1.msra.mxu0 %v4103
      %4216 = vmatprep.subr.mxu0 %v4107
      %4217 = vmatpush1.msra.mxu0 %v4106
      %4218 = vmatprep.subr.mxu0 %v4110
      %4219 = vmatpush1.msra.mxu0 %v4109
      %4220 = vmatprep.subr.mxu0 %v4113
      %4221 = vmatpush1.msra.mxu0 %v4112
      %4222 = vmatprep.subr.mxu0 %v4116
      %4223 = vmatpush1.msra.mxu0 %v4115
      %4224 = vmatprep.subr.mxu0 %v4119
      %4225 = vmatpush1.msra.mxu0 %v4118
      %4226 = vmatprep.subr.mxu0 %v4122
      %4227 = vmatpush1.msra.mxu0 %v4121
      %4228 = vmatprep.subr.mxu0 %v4125
      %4229 = vmatpush1.msra.mxu0 %v4124
      %4230 = vmatprep.subr.mxu0 %v4128
      %4231 = vmatpush1.msra.mxu0 %v4127
      %4232 = vmatprep.subr.mxu0 %v4131
      %4233 = vmatpush1.msra.mxu0 %v4130
      %4234 = vmatprep.subr.mxu0 %v4134
      %4235 = vmatpush1.msra.mxu0 %v4133
      %4236 = vmatprep.subr.mxu0 %v4137
      %4237 = vmatpush1.msra.mxu0 %v4136
      %4238 = vmatprep.subr.mxu0 %v4140
      %4239 = vmatpush1.msra.mxu0 %v4139
      %4240 = vmatprep.subr.mxu0 %v4143
      %4241 = vmatpush1.msra.mxu0 %v4142
      %4242 = vmatprep.subr.mxu0 %v4146
      %4243 = vmatpush1.msra.mxu0 %v4145
      %4244 = vmatprep.subr.mxu0 %v4149
      %4245 = vmatpush1.msra.mxu0 %v4148
      %4246 = vmatprep.subr.mxu0 %v4152
      %4247 = vmatpush1.msra.mxu0 %v4151
      %4248 = vmatprep.subr.mxu0 %v4155
      %4249 = vmatpush1.msra.mxu0 %v4154
      %4250 = vmatprep.subr.mxu0 %v4158
      %4251 = vmatpush1.msra.mxu0 %v4157
      %4252 = vmatprep.subr.mxu0 %v4161
      %4253 = vmatpush1.msra.mxu0 %v4160
      %4254 = vmatprep.subr.mxu0 %v4164
      %4255 = vmatpush1.msra.mxu0 %v4163
      %4256 = vmatprep.subr.mxu0 %v4167
      %4257 = vmatpush1.msra.mxu0 %v4166
      %4258 = vmatprep.subr.mxu0 %v4170
      %4259 = vmatpush1.msra.mxu0 %v4169
      %4260 = vmatprep.subr.mxu0 %v4173
      %4261 = vmatpush1.msra.mxu0 %v4172
      %4262 = vmatprep.subr.mxu0 %v4176
      %4263 = vmatpush1.msra.mxu0 %v4175
      %4264 = vmatprep.subr.mxu0 %v4179
      %4265 = vmatpush1.msra.mxu0 %v4178
      %4266 = vmatprep.subr.mxu0 %v4182
      %4267 = vmatpush1.msra.mxu0 %v4181
      %4268 = vmatprep.mubr.f32.mxu0 %v4200
      %4269 = vmatmul.mubr.f32.gmra.mrb[0].mxu0 %v4196
      %v4270 = vpop.f32.mrb[0].mxu0
      %v4271 = vadd.f32 0.0, %v4270
      %v4272 = vpop.f32.mrb[0].mxu0
      %v4273 = vadd.f32 0.0, %v4272
      %4274 = vdwg.mxu0
      %4275 = vmatprep.subr.mxu0 %v4185
      %4276 = vmatpush1.msra.mxu0 %v4184
      %4277 = vmatprep.subr.mxu0 %v4188
      %4278 = vmatpush1.msra.mxu0 %v4187
      %4279 = vmatprep.subr.mxu0 %v4191
      %4280 = vmatpush1.msra.mxu0 %v4190
      %4281 = vmatprep.subr.mxu0 %v4194
      %4282 = vmatpush1.msra.mxu0 %v4193
      %4283 = vmatprep.subr.mxu0 0.0
      %4284 = vmatpush1.msra.mxu0 0.0
      %4285 = vmatprep.subr.mxu0 0.0
      %4286 = vmatpush1.msra.mxu0 0.0
      %4287 = vmatprep.subr.mxu0 0.0
      %4288 = vmatpush1.msra.mxu0 0.0
      %4289 = vmatprep.subr.mxu0 0.0
      %4290 = vmatpush1.msra.mxu0 0.0
      %4291 = vmatprep.subr.mxu0 0.0
      %4292 = vmatpush1.msra.mxu0 0.0
      %4293 = vmatprep.subr.mxu0 0.0
      %4294 = vmatpush1.msra.mxu0 0.0
      %4295 = vmatprep.subr.mxu0 0.0
      %4296 = vmatpush1.msra.mxu0 0.0
      %4297 = vmatprep.subr.mxu0 0.0
      %4298 = vmatpush1.msra.mxu0 0.0
      %4299 = vmatprep.subr.mxu0 0.0
      %4300 = vmatpush1.msra.mxu0 0.0
      %4301 = vmatprep.subr.mxu0 0.0
      %4302 = vmatpush1.msra.mxu0 0.0
      %4303 = vmatprep.subr.mxu0 0.0
      %4304 = vmatpush1.msra.mxu0 0.0
      %4305 = vmatprep.subr.mxu0 0.0
      %4306 = vmatpush1.msra.mxu0 0.0
      %4307 = vmatprep.subr.mxu0 0.0
      %4308 = vmatpush1.msra.mxu0 0.0
      %4309 = vmatprep.subr.mxu0 0.0
      %4310 = vmatpush1.msra.mxu0 0.0
      %4311 = vmatprep.subr.mxu0 0.0
      %4312 = vmatpush1.msra.mxu0 0.0
      %4313 = vmatprep.subr.mxu0 0.0
      %4314 = vmatpush1.msra.mxu0 0.0
      %4315 = vmatprep.subr.mxu0 0.0
      %4316 = vmatpush1.msra.mxu0 0.0
      %4317 = vmatprep.subr.mxu0 0.0
      %4318 = vmatpush1.msra.mxu0 0.0
      %4319 = vmatprep.subr.mxu0 0.0
      %4320 = vmatpush1.msra.mxu0 0.0
      %4321 = vmatprep.subr.mxu0 0.0
      %4322 = vmatpush1.msra.mxu0 0.0
      %4323 = vmatprep.subr.mxu0 0.0
      %4324 = vmatpush1.msra.mxu0 0.0
      %4325 = vmatprep.subr.mxu0 0.0
      %4326 = vmatpush1.msra.mxu0 0.0
      %4327 = vmatprep.subr.mxu0 0.0
      %4328 = vmatpush1.msra.mxu0 0.0
      %4329 = vmatprep.subr.mxu0 0.0
      %4330 = vmatpush1.msra.mxu0 0.0
      %4331 = vmatprep.subr.mxu0 0.0
      %4332 = vmatpush1.msra.mxu0 0.0
      %4333 = vmatprep.subr.mxu0 0.0
      %4334 = vmatpush1.msra.mxu0 0.0
      %4335 = vmatprep.subr.mxu0 0.0
      %4336 = vmatpush1.msra.mxu0 0.0
      %4337 = vmatprep.subr.mxu0 0.0
      %4338 = vmatpush1.msra.mxu0 0.0
      %4339 = vmatprep.mubr.f32.mxu0 0.0
      %4340 = vmatmul.mubr.f32.gmra.mrb[0].mxu0 %v4202
      %v4341 = vpop.f32.mrb[0].mxu0
      %v4342 = vadd.f32 %v4271, %v4341
      %v4343 = vpop.f32.mrb[0].mxu0
      %v4344 = vadd.f32 %v4273, %v4343
      %4345 = vdwg.mxu0
      %4346 = vmatprep.subr.mxu0 0.0
      %4347 = vmatpush1.msra.mxu0 %v4090
      %4348 = vmatprep.subr.mxu0 0.0
      %4349 = vmatpush1.msra.mxu0 %v4093
      %4350 = vmatprep.subr.mxu0 0.0
      %4351 = vmatpush1.msra.mxu0 %v4096
      %4352 = vmatprep.subr.mxu0 0.0
      %4353 = vmatpush1.msra.mxu0 %v4099
      %4354 = vmatprep.subr.mxu0 0.0
      %4355 = vmatpush1.msra.mxu0 %v4102
      %4356 = vmatprep.subr.mxu0 0.0
      %4357 = vmatpush1.msra.mxu0 %v4105
      %4358 = vmatprep.subr.mxu0 0.0
      %4359 = vmatpush1.msra.mxu0 %v4108
      %4360 = vmatprep.subr.mxu0 0.0
      %4361 = vmatpush1.msra.mxu0 %v4111
      %4362 = vmatprep.subr.mxu0 0.0
      %4363 = vmatpush1.msra.mxu0 %v4114
      %4364 = vmatprep.subr.mxu0 0.0
      %4365 = vmatpush1.msra.mxu0 %v4117
      %4366 = vmatprep.subr.mxu0 0.0
      %4367 = vmatpush1.msra.mxu0 %v4120
      %4368 = vmatprep.subr.mxu0 0.0
      %4369 = vmatpush1.msra.mxu0 %v4123
      %4370 = vmatprep.subr.mxu0 0.0
      %4371 = vmatpush1.msra.mxu0 %v4126
      %4372 = vmatprep.subr.mxu0 0.0
      %4373 = vmatpush1.msra.mxu0 %v4129
      %4374 = vmatprep.subr.mxu0 0.0
      %4375 = vmatpush1.msra.mxu0 %v4132
      %4376 = vmatprep.subr.mxu0 0.0
      %4377 = vmatpush1.msra.mxu0 %v4135
      %4378 = vmatprep.subr.mxu0 0.0
      %4379 = vmatpush1.msra.mxu0 %v4138
      %4380 = vmatprep.subr.mxu0 0.0
      %4381 = vmatpush1.msra.mxu0 %v4141
      %4382 = vmatprep.subr.mxu0 0.0
      %4383 = vmatpush1.msra.mxu0 %v4144
      %4384 = vmatprep.subr.mxu0 0.0
      %4385 = vmatpush1.msra.mxu0 %v4147
      %4386 = vmatprep.subr.mxu0 0.0
      %4387 = vmatpush1.msra.mxu0 %v4150
      %4388 = vmatprep.subr.mxu0 0.0
      %4389 = vmatpush1.msra.mxu0 %v4153
      %4390 = vmatprep.subr.mxu0 0.0
      %4391 = vmatpush1.msra.mxu0 %v4156
      %4392 = vmatprep.subr.mxu0 0.0
      %4393 = vmatpush1.msra.mxu0 %v4159
      %4394 = vmatprep.subr.mxu0 0.0
      %4395 = vmatpush1.msra.mxu0 %v4162
      %4396 = vmatprep.subr.mxu0 0.0
      %4397 = vmatpush1.msra.mxu0 %v4165
      %4398 = vmatprep.subr.mxu0 0.0
      %4399 = vmatpush1.msra.mxu0 %v4168
      %4400 = vmatprep.subr.mxu0 0.0
      %4401 = vmatpush1.msra.mxu0 %v4171
      %4402 = vmatprep.subr.mxu0 0.0
      %4403 = vmatpush1.msra.mxu0 %v4174
      %4404 = vmatprep.subr.mxu0 0.0
      %4405 = vmatpush1.msra.mxu0 %v4177
      %4406 = vmatprep.subr.mxu0 0.0
      %4407 = vmatpush1.msra.mxu0 %v4180
      %4408 = vmatprep.subr.mxu0 0.0
      %4409 = vmatpush1.msra.mxu0 %v4183
      %4410 = vmatprep.mubr.f32.mxu0 %v4200
      %4411 = vmatmul.mubr.f32.gmra.mrb[0].mxu0 %v4196
      %v4412 = vpop.f32.mrb[0].mxu0
      %v4413 = vadd.f32 0.0, %v4412
      %v4414 = vpop.f32.mrb[0].mxu0
      %4415 = vdwg.mxu0
      %4416 = vmatprep.subr.mxu0 0.0
      %4417 = vmatpush1.msra.mxu0 %v4186
      %4418 = vmatprep.subr.mxu0 0.0
      %4419 = vmatpush1.msra.mxu0 %v4189
      %4420 = vmatprep.subr.mxu0 0.0
      %4421 = vmatpush1.msra.mxu0 %v4192
      %4422 = vmatprep.subr.mxu0 0.0
      %4423 = vmatpush1.msra.mxu0 %v4195
      %4424 = vmatprep.subr.mxu0 0.0
      %4425 = vmatpush1.msra.mxu0 0.0
      %4426 = vmatprep.subr.mxu0 0.0
      %4427 = vmatpush1.msra.mxu0 0.0
      %4428 = vmatprep.subr.mxu0 0.0
      %4429 = vmatpush1.msra.mxu0 0.0
      %4430 = vmatprep.subr.mxu0 0.0
      %4431 = vmatpush1.msra.mxu0 0.0
      %4432 = vmatprep.subr.mxu0 0.0
      %4433 = vmatpush1.msra.mxu0 0.0
      %4434 = vmatprep.subr.mxu0 0.0
      %4435 = vmatpush1.msra.mxu0 0.0
      %4436 = vmatprep.subr.mxu0 0.0
      %4437 = vmatpush1.msra.mxu0 0.0
      %4438 = vmatprep.subr.mxu0 0.0
      %4439 = vmatpush1.msra.mxu0 0.0
      %4440 = vmatprep.subr.mxu0 0.0
      %4441 = vmatpush1.msra.mxu0 0.0
      %4442 = vmatprep.subr.mxu0 0.0
      %4443 = vmatpush1.msra.mxu0 0.0
      %4444 = vmatprep.subr.mxu0 0.0
      %4445 = vmatpush1.msra.mxu0 0.0
      %4446 = vmatprep.subr.mxu0 0.0
      %4447 = vmatpush1.msra.mxu0 0.0
      %4448 = vmatprep.subr.mxu0 0.0
      %4449 = vmatpush1.msra.mxu0 0.0
      %4450 = vmatprep.subr.mxu0 0.0
      %4451 = vmatpush1.msra.mxu0 0.0
      %4452 = vmatprep.subr.mxu0 0.0
      %4453 = vmatpush1.msra.mxu0 0.0
      %4454 = vmatprep.subr.mxu0 0.0
      %4455 = vmatpush1.msra.mxu0 0.0
      %4456 = vmatprep.subr.mxu0 0.0
      %4457 = vmatpush1.msra.mxu0 0.0
      %4458 = vmatprep.subr.mxu0 0.0
      %4459 = vmatpush1.msra.mxu0 0.0
      %4460 = vmatprep.subr.mxu0 0.0
      %4461 = vmatpush1.msra.mxu0 0.0
      %4462 = vmatprep.subr.mxu0 0.0
      %4463 = vmatpush1.msra.mxu0 0.0
      %4464 = vmatprep.subr.mxu0 0.0
      %4465 = vmatpush1.msra.mxu0 0.0
      %4466 = vmatprep.subr.mxu0 0.0
      %4467 = vmatpush1.msra.mxu0 0.0
      %4468 = vmatprep.subr.mxu0 0.0
      %4469 = vmatpush1.msra.mxu0 0.0
      %4470 = vmatprep.subr.mxu0 0.0
      %4471 = vmatpush1.msra.mxu0 0.0
      %4472 = vmatprep.subr.mxu0 0.0
      %4473 = vmatpush1.msra.mxu0 0.0
      %4474 = vmatprep.subr.mxu0 0.0
      %4475 = vmatpush1.msra.mxu0 0.0
      %4476 = vmatprep.subr.mxu0 0.0
      %4477 = vmatpush1.msra.mxu0 0.0
      %4478 = vmatprep.subr.mxu0 0.0
      %4479 = vmatpush1.msra.mxu0 0.0
      %4480 = vmatprep.mubr.f32.mxu0 0.0
      %4481 = vmatmul.mubr.f32.gmra.mrb[0].mxu0 %v4202
      %v4482 = vpop.f32.mrb[0].mxu0
      %v4483 = vadd.f32 %v4413, %v4482
      %v4484 = vpop.f32.mrb[0].mxu0
      %4485 = vdwg.mxu0
      %v4486 = vld [vmem:[%s219] sm:$0xf]
      %v4487 = vld [vmem:[%s219 + $0x8] sm:$0xf]
      %v4488 = vld [vmem:[%s219 + $0x10] sm:$0xf]
      %v4489 = vsub.f32 %v4486, %v4342
      %v4490 = vsub.f32 %v4487, %v4344
      %v4491 = vsub.f32 %v4488, %v4483
      %v4494 = vcombine.low %v4489, %v4490
      %4496 = vst [vmem:[%s224] sm:$0xff] %v4494
      %vm4497 = vcmask 551936
      %4498 = vst.msk [vmem:[%s224 + $0x8] sm:$0xf] %vm4497, %v4491
      %p4499 = scmp.lt.s32.totalorder %s16, 1
      %s4500 = scalar_select %p4499, %s16, 1
      %s4501 = smul.addr %s4500, 3
      %s4502 = smul.addr %s4501, 4
      %s4503 = scalar_lea.vmem %s5, %s4502
      // Predicated region
      $region41: #{dncnn_block_forward.1} parent=39 // pred_check
        %p4504 = pneg %p144
      $region42: #{dncnn_block_forward.1} parent=39 // pred_check_branch
        %4506 = sbr.rel (%p4504) target = $region44
      $region43: #{dncnn_block_forward.1} parent=39 // pred_region
        _
      $region44: #{dncnn_block_forward.1} parent=39 // pred_fallthru
        _
    $region40: #{dncnn_block_forward.1} parent=5 // pred_fallthru
      _
    %p4507 = scmp.le.s32.totalorder 2, %s11
    // Predicated region
    $region45: #{dncnn_block_forward.1} parent=5 // pred_check
      %p4508 = pneg %p4507
    $region46: #{dncnn_block_forward.1} parent=5 // pred_check_branch
      %4510 = sbr.rel (%p4508) target = $region48
    $region47: #{dncnn_block_forward.1} parent=5 // pred_region
      %s4511 = ssub.s32 %s11, 2
      // Predicated region
      $region49: #{dncnn_block_forward.1} parent=47 // pred_check
        %p4512 = pneg %p150
      $region50: #{dncnn_block_forward.1} parent=47 // pred_check_branch
        %4514 = sbr.rel (%p4512) target = $region52
      $region51: #{dncnn_block_forward.1} parent=47 // pred_region
        %p4515 = scmp.lt.s32.totalorder %s17, 1
        %s4516 = scalar_select %p4515, %s17, 1
        %s4517 = smul.addr %s4516, 3
        %s4518 = smul.addr %s4517, 4
        %s4519 = scalar_lea.vmem %s5, %s4518
      $region52: #{dncnn_block_forward.1} parent=47 // pred_fallthru
        _
    $region48: #{dncnn_block_forward.1} parent=5 // pred_fallthru
      _
  $region6: #{dncnn_block_forward.1} parent=0 // loop_footer
    %s15 = sadd.s32 1, %s11
  $region7: #{dncnn_block_forward.1} parent=0 // loop_footer_branch
    %10 = sbr.rel target = $region3
  $region8: #{dncnn_block_forward.1} parent=0 // loop_exit
    _

</llo_original>
